<compile_context>
chip_gen: v5e
topology: v5e:2x2
jax: 0.10.0
libtpu: 0.0.40
codegen_flags: <defaults>
</compile_context>

<pallas_src>
import jax
import jax.numpy as jnp
from jax import lax
from jax.experimental import pallas as pl
from jax.experimental.pallas import tpu as pltpu

EPS = 1e-5
LANE = 128


def _round_up(v, m):
    return (v + m - 1) // m * m


def _largest_divisor_leq(n, cap):
    cap = max(1, min(cap, n))
    for d in range(cap, 0, -1):
        if n % d == 0:
            return d
    return 1


def _smallest_divisor_geq(n, lo):
    lo = max(1, min(lo, n))
    for d in range(lo, n + 1):
        if n % d == 0:
            return d
    return n


# ---------------------------------------------------------------------------
# in-kernel helpers
# ---------------------------------------------------------------------------
def _window_conv_stats(act, x_ref, w_ref, y_ref, stats_ref, xw_ref, patch_ref):
    """Shared body for one (image, row-tile): build a zero-halo (TH+2, W+2) window
    of act(x) rows, im2col it into ONE lane-dense (TH*W, 9*Cp) patch, run a single
    MXU matmul (f32 accumulation) and emit per-tile BN statistics.

    x_ref     : (1, H, W, Cp)  full image, resident across the H-tile grid axis
    w_ref     : (9*Cp, Cp)     tap-major weights (compute dtype)
    y_ref     : (1, TH, W, Cp) output row tile (compute dtype)
    stats_ref : (1, 1, 2, Cp)  [sum, tile-centered sum-of-squares] in f32
    xw_ref    : (1, TH+2, W+2, Cp) VMEM halo window (compute dtype)
    patch_ref : (TH*W, 9*Cp)   VMEM im2col patch (compute dtype)
    """
    _, TH, W, Cp = y_ref.shape
    cdt = patch_ref.dtype
    h = pl.program_id(1)
    n_h = pl.num_programs(1)
    r0 = pl.multiple_of(h * TH, TH)

    # --- halo window in compute dtype (tap copies below are pure cdt moves) ---
    # The W-halo columns are always zero; they are rewritten every step (cheap
    # strips) so the kernel stays correct under megacore grid sharding.
    zcol = jnp.zeros((1, TH + 2, 1, Cp), cdt)
    zrow = jnp.zeros((1, 1, W, Cp), cdt)
    xw_ref[:, :, 0:1, :] = zcol
    xw_ref[:, :, W + 1:W + 2, :] = zcol
    xw_ref[:, 1:TH + 1, 1:W + 1, :] = act(x_ref[:, pl.ds(r0, TH), :, :]).astype(cdt)

    # H-halo rows: zero at the image boundary, neighbouring row otherwise.
    @pl.when(h == 0)
    def _():
        xw_ref[:, 0:1, 1:W + 1, :] = zrow

    @pl.when(h > 0)
    def _():
        xw_ref[:, 0:1, 1:W + 1, :] = act(x_ref[:, pl.ds(r0 - 1, 1), :, :]).astype(cdt)

    @pl.when(h == n_h - 1)
    def _():
        xw_ref[:, TH + 1:TH + 2, 1:W + 1, :] = zrow

    @pl.when(h < n_h - 1)
    def _():
        xw_ref[:, TH + 1:TH + 2, 1:W + 1, :] = act(
            x_ref[:, pl.ds(r0 + TH, 1), :, :]).astype(cdt)

    # --- im2col: 9 shifted taps -> (TH*W, 9*Cp) patch -------------------------
    for ky in range(3):
        for kx in range(3):
            t = ky * 3 + kx
            patch_ref[:, t * Cp:(t + 1) * Cp] = \
                xw_ref[:, ky:ky + TH, kx:kx + W, :].reshape(TH * W, Cp)

    # --- ONE MXU matmul, contraction K = 9*Cp, f32 accumulation ---------------
    acc = jnp.dot(patch_ref[...], w_ref[...], preferred_element_type=jnp.float32)

    # --- per-tile BN statistics on the f32 accumulator (before any cast) ------
    # tile-centered sum-of-squares; combined across tiles with Chan's formula in
    # the wrapper, so there is no E[y^2]-E[y]^2 cancellation.
    s = jnp.sum(acc, axis=0)
    d = acc - s * (1.0 / (TH * W))
    stats_ref[:, :, 0:1, :] = s.reshape(1, 1, 1, Cp)
    stats_ref[:, :, 1:2, :] = jnp.sum(d * d, axis=0).reshape(1, 1, 1, Cp)

    y_ref[...] = acc.reshape(1, TH, W, Cp).astype(y_ref.dtype)


def _conv1_kernel(x_ref, w_ref, y_ref, stats_ref, xw_ref, patch_ref):
    """pass A: y1 = conv1(x) for one row tile, plus per-tile BN statistics."""
    _window_conv_stats(lambda v: v, x_ref, w_ref, y_ref, stats_ref, xw_ref, patch_ref)


def _conv2_kernel(y1_ref, scale_ref, shift_ref, w_ref,
                  y2_ref, stats_ref, xw_ref, patch_ref):
    """pass B: y2 = conv2(relu(bn1(y1))) for one row tile, plus per-tile stats."""
    scale = scale_ref[...]
    shift = shift_ref[...]

    def act(v):  # BN1 folded into per-channel (scale, shift), then ReLU, in f32
        return jnp.maximum(v.astype(jnp.float32) * scale + shift, 0.0)

    # Dropout(p=0.0) is the identity (use_dropout=False path).
    # TODO(synk): use_dropout=True (p=0.5) would need pltpu.prng_seed/prng_random_bits.
    _window_conv_stats(act, y1_ref, w_ref, y2_ref, stats_ref, xw_ref, patch_ref)


def _bn_residual_kernel(x_ref, y2_ref, scale_ref, shift_ref, o_ref):
    """pass C: out = x + bn2(y2), large elementwise row tiles."""
    o_ref[...] = (x_ref[...].astype(jnp.float32)
                  + y2_ref[...].astype(jnp.float32) * scale_ref[...] + shift_ref[...])


# ---------------------------------------------------------------------------
# wrapper
# ---------------------------------------------------------------------------
def _bn_scale_shift(stats, tile_count, total_count, gamma, beta):
    """Fold training-mode BatchNorm into per-channel (scale, shift).

    stats[n, t, 0, c] = per-tile sum, stats[n, t, 1, c] = per-tile centered
    sum-of-squares. Combined with Chan's parallel-variance formula.
    """
    sums = stats[:, :, 0, :]
    csq = stats[:, :, 1, :]
    mean = jnp.sum(sums, axis=(0, 1)) / total_count
    tmeans = sums / tile_count
    m2 = jnp.sum(csq, axis=(0, 1)) + tile_count * jnp.sum(
        jnp.square(tmeans - mean), axis=(0, 1))
    var = jnp.maximum(m2 / total_count, 0.0)          # biased (training-mode) var
    scale = gamma * lax.rsqrt(var + EPS)
    shift = beta - mean * scale
    return scale.reshape(1, -1), shift.reshape(1, -1)


def resnet_block_pallas(x_nchw, params, *, compute_dtype=jnp.bfloat16,
                        patch_vmem_bytes=6 << 20, residual_tile_bytes=2 << 20):
    """x_nchw: (N, C, H, W) float32 — same convention as the PyTorch module.

    compute_dtype: dtype of MXU inputs and stored activations (bf16 fast path on
                   all generations; accumulation and BN statistics stay float32).
                   float32 is the exact/debug path.
    """
    N, C, H, W = x_nchw.shape
    Cp = _round_up(C, LANE)                 # lane-dense channels (no-op if C%128==0)
    cdt = jnp.dtype(compute_dtype)
    isz = cdt.itemsize

    # NHWC + lane-dense channel pad + compute-dtype cast (one fused XLA op).
    # This single array feeds conv1 (halo built in-kernel) and the residual add,
    # so x is never re-materialized.  The final NHWC->NCHW transpose is kept only
    # because the module's interface is NCHW.
    x = jnp.pad(jnp.transpose(x_nchw, (0, 2, 3, 1)),
                ((0, 0), (0, 0), (0, 0), (0, Cp - C))).astype(cdt)

    def prep_w(w_oihw):                     # (C_out, C_in, 3, 3) -> (9*Cp, Cp), tap-major
        w = jnp.transpose(w_oihw, (2, 3, 1, 0))
        w = jnp.pad(w, ((0, 0), (0, 0), (0, Cp - C), (0, Cp - C)))
        return w.reshape(9 * Cp, Cp).astype(cdt)

    def prep_vec(v):                        # pad gamma/beta with 0 -> padded lanes stay 0
        return jnp.pad(v, (0, Cp - C)).astype(jnp.float32)

    w1, w2 = prep_w(params["w1"]), prep_w(params["w2"])
    g1, be1 = prep_vec(params["g1"]), prep_vec(params["be1"])
    g2, be2 = prep_vec(params["g2"]), prep_vec(params["be2"])
    # NOTE: conv biases b1/b2 are intentionally unused — a per-channel bias is
    # exactly cancelled by the training-mode BatchNorm mean subtraction.

    # Row tile for the conv passes: bounds the im2col patch scratch (the big VMEM
    # consumer) by patch_vmem_bytes on every TPU generation.
    TH = _largest_divisor_leq(H, max(1, patch_vmem_bytes // (9 * W * Cp * isz)))
    HT = H // TH
    total = N * H * W
    # TODO(synk): if a single (H, W, Cp) image stops fitting VMEM (very large maps),
    # switch the resident full-image input block to a manual windowed DMA.

    x_full_spec = pl.BlockSpec((1, H, W, Cp), lambda n, h: (n, 0, 0, 0))
    row_spec = pl.BlockSpec((1, TH, W, Cp), lambda n, h: (n, h, 0, 0))
    stats_spec = pl.BlockSpec((1, 1, 2, Cp), lambda n, h: (n, h, 0, 0))
    w_spec = pl.BlockSpec((9 * Cp, Cp), lambda n, h: (0, 0))
    vec_spec = pl.BlockSpec((1, Cp), lambda n, h: (0, 0))
    conv_out_shape = (jax.ShapeDtypeStruct((N, H, W, Cp), cdt),
                      jax.ShapeDtypeStruct((N, HT, 2, Cp), jnp.float32))
    conv_scratch = [pltpu.VMEM((1, TH + 2, W + 2, Cp), cdt),
                    pltpu.VMEM((TH * W, 9 * Cp), cdt)]
    cparams = pltpu.CompilerParams(
        dimension_semantics=("parallel", "parallel"),
        vmem_limit_bytes=48 * 1024 * 1024)

    # ---- pass A: y1 = conv1(x), plus per-tile BN statistics ----------------
    y1, st1 = pl.pallas_call(
        _conv1_kernel,
        grid=(N, HT),
        in_specs=[x_full_spec, w_spec],
        out_specs=(row_spec, stats_spec),
        out_shape=conv_out_shape,
        scratch_shapes=conv_scratch,
        compiler_params=cparams,
    )(x, w1)
    scale1, shift1 = _bn_scale_shift(st1, TH * W, total, g1, be1)

    # ---- pass B: y2 = conv2(relu(bn1(y1))), plus per-tile BN statistics ----
    y2, st2 = pl.pallas_call(
        _conv2_kernel,
        grid=(N, HT),
        in_specs=[x_full_spec, vec_spec, vec_spec, w_spec],
        out_specs=(row_spec, stats_spec),
        out_shape=conv_out_shape,
        scratch_shapes=conv_scratch,
        compiler_params=cparams,
    )(y1, scale1, shift1, w2)
    scale2, shift2 = _bn_scale_shift(st2, TH * W, total, g2, be2)

    # ---- pass C: out = x + bn2(y2) — large elementwise row tiles -----------
    THc = _smallest_divisor_geq(H, pl.cdiv(residual_tile_bytes, W * Cp * 4))
    ctile_spec = pl.BlockSpec((1, THc, W, Cp), lambda n, h: (n, h, 0, 0))
    out = pl.pallas_call(
        _bn_residual_kernel,
        grid=(N, H // THc),
        in_specs=[ctile_spec, ctile_spec, vec_spec, vec_spec],
        out_specs=ctile_spec,
        out_shape=jax.ShapeDtypeStruct((N, H, W, Cp), jnp.float32),
        compiler_params=cparams,
    )(x, y2, scale2, shift2)

    if Cp != C:
        out = out[..., :C]                                # drop channel padding
    return jnp.transpose(out, (0, 3, 1, 2))               # back to NCHW


# ---------------------------------------------------------------------------
# pure-JAX reference (matches PyTorch training-mode BatchNorm semantics)
# ---------------------------------------------------------------------------
def resnet_block_ref(x_nchw, params):
    x = jnp.transpose(x_nchw, (0, 2, 3, 1)).astype(jnp.float32)  # NHWC

    def conv(y, w_oihw, b):
        w_hwio = jnp.transpose(w_oihw, (2, 3, 1, 0))
        out = lax.conv_general_dilated(
            y, w_hwio, window_strides=(1, 1), padding=((1, 1), (1, 1)),
            dimension_numbers=("NHWC", "HWIO", "NHWC"))
        return out + b

    def bn(y, g, be):
        m = jnp.mean(y, axis=(0, 1, 2), keepdims=True)
        v = jnp.mean((y - m) ** 2, axis=(0, 1, 2), keepdims=True)
        return (y - m) * lax.rsqrt(v + EPS) * g + be

    y = conv(x, params["w1"], params["b1"])
    y = bn(y, params["g1"], params["be1"])
    y = jnp.maximum(y, 0.0)
    y = conv(y, params["w2"], params["b2"])
    y = bn(y, params["g2"], params["be2"])
    return jnp.transpose(x + y, (0, 3, 1, 2))


def make_params(key, dim):
    k1, k2, k3, k4 = jax.random.split(key, 4)
    return {
        # PyTorch Conv2d weight layout (C_out, C_in, kH, kW)
        "w1": 0.1 * jax.random.normal(k1, (dim, dim, 3, 3), jnp.float32),
        "b1": 0.1 * jax.random.normal(k2, (dim,), jnp.float32),
        "g1": jnp.ones((dim,), jnp.float32),
        "be1": jnp.zeros((dim,), jnp.float32),
        "w2": 0.1 * jax.random.normal(k3, (dim, dim, 3, 3), jnp.float32),
        "b2": 0.1 * jax.random.normal(k4, (dim,), jnp.float32),
        "g2": jnp.ones((dim,), jnp.float32),
        "be2": jnp.zeros((dim,), jnp.float32),
    }


if __name__ == "__main__":
    key = jax.random.PRNGKey(0)
    kx, kp = jax.random.split(key)

    N, C, H, W = 2, 4, 16, 16  # dim = 4
    x = jax.random.normal(kx, (N, C, H, W), jnp.float32)
    params = make_params(kp, C)

    ref = jax.block_until_ready(resnet_block_ref(x, params))

    # exact-precision path: f32 everywhere (single row tile per image)
    out_f32 = jax.block_until_ready(
        resnet_block_pallas(x, params, compute_dtype=jnp.float32))
    assert out_f32.shape == (N, C, H, W)
    err32 = float(jnp.max(jnp.abs(out_f32 - ref)))
    assert err32 < 1e-3, f"f32 path mismatch vs reference: {err32}"

    # exercise the multi-row-tile halo path (TH < H, interior/edge branches)
    out_tiled = jax.block_until_ready(
        resnet_block_pallas(x, params, compute_dtype=jnp.float32,
                            patch_vmem_bytes=300_000))
    errt = float(jnp.max(jnp.abs(out_tiled - ref)))
    assert errt < 1e-3, f"row-tiled f32 path mismatch vs reference: {errt}"

    # bf16 fast path (default): MXU inputs / stored activations bf16,
    # accumulation + BN statistics f32
    out_bf16 = jax.block_until_ready(resnet_block_pallas(x, params))
    assert out_bf16.shape == (N, C, H, W)
    err16 = float(jnp.max(jnp.abs(out_bf16 - ref)))
    assert err16 < 1e-1, f"bf16 path mismatch vs reference: {err16}"

    print("KERNEL_OK")
</pallas_src>

<mosaic_0001>
module attributes {stable_mosaic.version = 11 : i64} {
  func.func @_conv1_kernel(%arg0: i32, %arg1: i32, %arg2: memref<1x16x16x128xf32, #tpu.memory_space<vmem>>, %arg3: memref<1152x128xf32, #tpu.memory_space<vmem>>, %arg4: memref<1x16x16x128xf32, #tpu.memory_space<vmem>>, %arg5: memref<1x1x2x128xf32, #tpu.memory_space<vmem>>, %arg6: memref<1x18x18x128xf32, #tpu.memory_space<vmem>>, %arg7: memref<256x1152xf32, #tpu.memory_space<vmem>>) attributes {dimension_semantics = [#tpu.dimension_semantics<parallel>, #tpu.dimension_semantics<parallel>], iteration_bounds = array<i64: 2, 1>, scalar_prefetch = 0 : i64, scratch_operands = 2 : i64, tpu.core_type = #tpu.core_type<tc>, window_params = [{transform_indices = @transform_0, window_bounds = array<i64: 1, 16, 16, 128>}, {pipeline_mode = #tpu.pipeline_mode<synchronous>, transform_indices = @transform_1, window_bounds = array<i64: 1152, 128>}, {transform_indices = @transform_2, window_bounds = array<i64: 1, 16, 16, 128>}, {transform_indices = @transform_3, window_bounds = array<i64: 1, 1, 2, 128>}]} {
    %c16_i32 = arith.constant 16 : i32
    %0 = arith.muli %arg1, %c16_i32 : i32
    %1 = tpu.assume_multiple %0, 16 : i32
    %cst = arith.constant 0.000000e+00 : f32
    %2 = vector.broadcast %cst : f32 to vector<1x18x1x128xf32>
    %cst_0 = arith.constant 0.000000e+00 : f32
    %3 = vector.broadcast %cst_0 : f32 to vector<1x1x16x128xf32>
    %c0 = arith.constant 0 : index
    %c0_1 = arith.constant 0 : index
    %c0_2 = arith.constant 0 : index
    %c0_3 = arith.constant 0 : index
    %4 = vector.load %arg6[%c0, %c0_1, %c0_2, %c0_3] : memref<1x18x18x128xf32, #tpu.memory_space<vmem>>, vector<1x18x1x128xf32>
    tpu.vector_store %arg6[%c0, %c0_1, %c0_2, %c0_3], %2 {strides = array<i32>} : memref<1x18x18x128xf32, #tpu.memory_space<vmem>>, vector<1x18x1x128xf32>,
    %c0_4 = arith.constant 0 : index
    %c0_5 = arith.constant 0 : index
    %c17 = arith.constant 17 : index
    %c0_6 = arith.constant 0 : index
    %5 = vector.load %arg6[%c0_4, %c0_5, %c17, %c0_6] : memref<1x18x18x128xf32, #tpu.memory_space<vmem>>, vector<1x18x1x128xf32>
    tpu.vector_store %arg6[%c0_4, %c0_5, %c17, %c0_6], %2 {strides = array<i32>} : memref<1x18x18x128xf32, #tpu.memory_space<vmem>>, vector<1x18x1x128xf32>,
    %c0_7 = arith.constant 0 : index
    %6 = arith.index_cast %1 : i32 to index
    %c0_8 = arith.constant 0 : index
    %c0_9 = arith.constant 0 : index
    %7 = vector.load %arg2[%c0_7, %6, %c0_8, %c0_9] : memref<1x16x16x128xf32, #tpu.memory_space<vmem>>, vector<1x16x16x128xf32>
    %c0_10 = arith.constant 0 : index
    %c1 = arith.constant 1 : index
    %c1_11 = arith.constant 1 : index
    %c0_12 = arith.constant 0 : index
    %8 = vector.load %arg6[%c0_10, %c1, %c1_11, %c0_12] : memref<1x18x18x128xf32, #tpu.memory_space<vmem>>, vector<1x16x16x128xf32>
    tpu.vector_store %arg6[%c0_10, %c1, %c1_11, %c0_12], %7 {strides = array<i32>} : memref<1x18x18x128xf32, #tpu.memory_space<vmem>>, vector<1x16x16x128xf32>,
    %c0_i32 = arith.constant 0 : i32
    %9 = arith.cmpi eq, %arg1, %c0_i32 : i32
    %10 = arith.extui %9 : i1 to i32
    %c0_i32_13 = arith.constant 0 : i32
    %11 = arith.cmpi ne, %10, %c0_i32_13 : i32
    scf.if %11 {
      %c0_85 = arith.constant 0 : index
      %c0_86 = arith.constant 0 : index
      %c1_87 = arith.constant 1 : index
      %c0_88 = arith.constant 0 : index
      %65 = vector.load %arg6[%c0_85, %c0_86, %c1_87, %c0_88] : memref<1x18x18x128xf32, #tpu.memory_space<vmem>>, vector<1x1x16x128xf32>
      tpu.vector_store %arg6[%c0_85, %c0_86, %c1_87, %c0_88], %3 {strides = array<i32>} : memref<1x18x18x128xf32, #tpu.memory_space<vmem>>, vector<1x1x16x128xf32>,
    } else {
    }
    %c0_i32_14 = arith.constant 0 : i32
    %12 = arith.cmpi sgt, %arg1, %c0_i32_14 : i32
    %13 = arith.extui %12 : i1 to i32
    %c0_i32_15 = arith.constant 0 : i32
    %14 = arith.cmpi ne, %13, %c0_i32_15 : i32
    scf.if %14 {
      %c1_i32 = arith.constant 1 : i32
      %65 = arith.subi %1, %c1_i32 : i32
      %c0_85 = arith.constant 0 : index
      %66 = arith.index_cast %65 : i32 to index
      %c0_86 = arith.constant 0 : index
      %c0_87 = arith.constant 0 : index
      %67 = vector.load %arg2[%c0_85, %66, %c0_86, %c0_87] : memref<1x16x16x128xf32, #tpu.memory_space<vmem>>, vector<1x1x16x128xf32>
      %c0_88 = arith.constant 0 : index
      %c0_89 = arith.constant 0 : index
      %c1_90 = arith.constant 1 : index
      %c0_91 = arith.constant 0 : index
      %68 = vector.load %arg6[%c0_88, %c0_89, %c1_90, %c0_91] : memref<1x18x18x128xf32, #tpu.memory_space<vmem>>, vector<1x1x16x128xf32>
      tpu.vector_store %arg6[%c0_88, %c0_89, %c1_90, %c0_91], %67 {strides = array<i32>} : memref<1x18x18x128xf32, #tpu.memory_space<vmem>>, vector<1x1x16x128xf32>,
    } else {
    }
    %c0_i32_16 = arith.constant 0 : i32
    %15 = arith.cmpi eq, %arg1, %c0_i32_16 : i32
    %16 = arith.extui %15 : i1 to i32
    %c0_i32_17 = arith.constant 0 : i32
    %17 = arith.cmpi ne, %16, %c0_i32_17 : i32
    scf.if %17 {
      %c0_85 = arith.constant 0 : index
      %c17_86 = arith.constant 17 : index
      %c1_87 = arith.constant 1 : index
      %c0_88 = arith.constant 0 : index
      %65 = vector.load %arg6[%c0_85, %c17_86, %c1_87, %c0_88] : memref<1x18x18x128xf32, #tpu.memory_space<vmem>>, vector<1x1x16x128xf32>
      tpu.vector_store %arg6[%c0_85, %c17_86, %c1_87, %c0_88], %3 {strides = array<i32>} : memref<1x18x18x128xf32, #tpu.memory_space<vmem>>, vector<1x1x16x128xf32>,
    } else {
    }
    %c0_i32_18 = arith.constant 0 : i32
    %18 = arith.cmpi slt, %arg1, %c0_i32_18 : i32
    %19 = arith.extui %18 : i1 to i32
    %c0_i32_19 = arith.constant 0 : i32
    %20 = arith.cmpi ne, %19, %c0_i32_19 : i32
    scf.if %20 {
      %c16_i32_85 = arith.constant 16 : i32
      %65 = arith.addi %1, %c16_i32_85 : i32
      %c0_86 = arith.constant 0 : index
      %66 = arith.index_cast %65 : i32 to index
      %c0_87 = arith.constant 0 : index
      %c0_88 = arith.constant 0 : index
      %67 = vector.load %arg2[%c0_86, %66, %c0_87, %c0_88] : memref<1x16x16x128xf32, #tpu.memory_space<vmem>>, vector<1x1x16x128xf32>
      %c0_89 = arith.constant 0 : index
      %c17_90 = arith.constant 17 : index
      %c1_91 = arith.constant 1 : index
      %c0_92 = arith.constant 0 : index
      %68 = vector.load %arg6[%c0_89, %c17_90, %c1_91, %c0_92] : memref<1x18x18x128xf32, #tpu.memory_space<vmem>>, vector<1x1x16x128xf32>
      tpu.vector_store %arg6[%c0_89, %c17_90, %c1_91, %c0_92], %67 {strides = array<i32>} : memref<1x18x18x128xf32, #tpu.memory_space<vmem>>, vector<1x1x16x128xf32>,
    } else {
    }
    %c0_20 = arith.constant 0 : index
    %c0_21 = arith.constant 0 : index
    %c0_22 = arith.constant 0 : index
    %c0_23 = arith.constant 0 : index
    %21 = vector.load %arg6[%c0_20, %c0_21, %c0_22, %c0_23] : memref<1x18x18x128xf32, #tpu.memory_space<vmem>>, vector<1x16x16x128xf32>
    %22 = vector.shape_cast %21 : vector<1x16x16x128xf32> to vector<256x128xf32>
    %c0_24 = arith.constant 0 : index
    %c0_25 = arith.constant 0 : index
    %23 = vector.load %arg7[%c0_24, %c0_25] : memref<256x1152xf32, #tpu.memory_space<vmem>>, vector<256x128xf32>
    tpu.vector_store %arg7[%c0_24, %c0_25], %22 {strides = array<i32>} : memref<256x1152xf32, #tpu.memory_space<vmem>>, vector<256x128xf32>,
    %c0_26 = arith.constant 0 : index
    %c0_27 = arith.constant 0 : index
    %c1_28 = arith.constant 1 : index
    %c0_29 = arith.constant 0 : index
    %24 = vector.load %arg6[%c0_26, %c0_27, %c1_28, %c0_29] : memref<1x18x18x128xf32, #tpu.memory_space<vmem>>, vector<1x16x16x128xf32>
    %25 = vector.shape_cast %24 : vector<1x16x16x128xf32> to vector<256x128xf32>
    %c0_30 = arith.constant 0 : index
    %c128 = arith.constant 128 : index
    %26 = vector.load %arg7[%c0_30, %c128] : memref<256x1152xf32, #tpu.memory_space<vmem>>, vector<256x128xf32>
    tpu.vector_store %arg7[%c0_30, %c128], %25 {strides = array<i32>} : memref<256x1152xf32, #tpu.memory_space<vmem>>, vector<256x128xf32>,
    %c0_31 = arith.constant 0 : index
    %c0_32 = arith.constant 0 : index
    %c2 = arith.constant 2 : index
    %c0_33 = arith.constant 0 : index
    %27 = vector.load %arg6[%c0_31, %c0_32, %c2, %c0_33] : memref<1x18x18x128xf32, #tpu.memory_space<vmem>>, vector<1x16x16x128xf32>
    %28 = vector.shape_cast %27 : vector<1x16x16x128xf32> to vector<256x128xf32>
    %c0_34 = arith.constant 0 : index
    %c256 = arith.constant 256 : index
    %29 = vector.load %arg7[%c0_34, %c256] : memref<256x1152xf32, #tpu.memory_space<vmem>>, vector<256x128xf32>
    tpu.vector_store %arg7[%c0_34, %c256], %28 {strides = array<i32>} : memref<256x1152xf32, #tpu.memory_space<vmem>>, vector<256x128xf32>,
    %c0_35 = arith.constant 0 : index
    %c1_36 = arith.constant 1 : index
    %c0_37 = arith.constant 0 : index
    %c0_38 = arith.constant 0 : index
    %30 = vector.load %arg6[%c0_35, %c1_36, %c0_37, %c0_38] : memref<1x18x18x128xf32, #tpu.memory_space<vmem>>, vector<1x16x16x128xf32>
    %31 = vector.shape_cast %30 : vector<1x16x16x128xf32> to vector<256x128xf32>
    %c0_39 = arith.constant 0 : index
    %c384 = arith.constant 384 : index
    %32 = vector.load %arg7[%c0_39, %c384] : memref<256x1152xf32, #tpu.memory_space<vmem>>, vector<256x128xf32>
    tpu.vector_store %arg7[%c0_39, %c384], %31 {strides = array<i32>} : memref<256x1152xf32, #tpu.memory_space<vmem>>, vector<256x128xf32>,
    %c0_40 = arith.constant 0 : index
    %c1_41 = arith.constant 1 : index
    %c1_42 = arith.constant 1 : index
    %c0_43 = arith.constant 0 : index
    %33 = vector.load %arg6[%c0_40, %c1_41, %c1_42, %c0_43] : memref<1x18x18x128xf32, #tpu.memory_space<vmem>>, vector<1x16x16x128xf32>
    %34 = vector.shape_cast %33 : vector<1x16x16x128xf32> to vector<256x128xf32>
    %c0_44 = arith.constant 0 : index
    %c512 = arith.constant 512 : index
    %35 = vector.load %arg7[%c0_44, %c512] : memref<256x1152xf32, #tpu.memory_space<vmem>>, vector<256x128xf32>
    tpu.vector_store %arg7[%c0_44, %c512], %34 {strides = array<i32>} : memref<256x1152xf32, #tpu.memory_space<vmem>>, vector<256x128xf32>,
    %c0_45 = arith.constant 0 : index
    %c1_46 = arith.constant 1 : index
    %c2_47 = arith.constant 2 : index
    %c0_48 = arith.constant 0 : index
    %36 = vector.load %arg6[%c0_45, %c1_46, %c2_47, %c0_48] : memref<1x18x18x128xf32, #tpu.memory_space<vmem>>, vector<1x16x16x128xf32>
    %37 = vector.shape_cast %36 : vector<1x16x16x128xf32> to vector<256x128xf32>
    %c0_49 = arith.constant 0 : index
    %c640 = arith.constant 640 : index
    %38 = vector.load %arg7[%c0_49, %c640] : memref<256x1152xf32, #tpu.memory_space<vmem>>, vector<256x128xf32>
    tpu.vector_store %arg7[%c0_49, %c640], %37 {strides = array<i32>} : memref<256x1152xf32, #tpu.memory_space<vmem>>, vector<256x128xf32>,
    %c0_50 = arith.constant 0 : index
    %c2_51 = arith.constant 2 : index
    %c0_52 = arith.constant 0 : index
    %c0_53 = arith.constant 0 : index
    %39 = vector.load %arg6[%c0_50, %c2_51, %c0_52, %c0_53] : memref<1x18x18x128xf32, #tpu.memory_space<vmem>>, vector<1x16x16x128xf32>
    %40 = vector.shape_cast %39 : vector<1x16x16x128xf32> to vector<256x128xf32>
    %c0_54 = arith.constant 0 : index
    %c768 = arith.constant 768 : index
    %41 = vector.load %arg7[%c0_54, %c768] : memref<256x1152xf32, #tpu.memory_space<vmem>>, vector<256x128xf32>
    tpu.vector_store %arg7[%c0_54, %c768], %40 {strides = array<i32>} : memref<256x1152xf32, #tpu.memory_space<vmem>>, vector<256x128xf32>,
    %c0_55 = arith.constant 0 : index
    %c2_56 = arith.constant 2 : index
    %c1_57 = arith.constant 1 : index
    %c0_58 = arith.constant 0 : index
    %42 = vector.load %arg6[%c0_55, %c2_56, %c1_57, %c0_58] : memref<1x18x18x128xf32, #tpu.memory_space<vmem>>, vector<1x16x16x128xf32>
    %43 = vector.shape_cast %42 : vector<1x16x16x128xf32> to vector<256x128xf32>
    %c0_59 = arith.constant 0 : index
    %c896 = arith.constant 896 : index
    %44 = vector.load %arg7[%c0_59, %c896] : memref<256x1152xf32, #tpu.memory_space<vmem>>, vector<256x128xf32>
    tpu.vector_store %arg7[%c0_59, %c896], %43 {strides = array<i32>} : memref<256x1152xf32, #tpu.memory_space<vmem>>, vector<256x128xf32>,
    %c0_60 = arith.constant 0 : index
    %c2_61 = arith.constant 2 : index
    %c2_62 = arith.constant 2 : index
    %c0_63 = arith.constant 0 : index
    %45 = vector.load %arg6[%c0_60, %c2_61, %c2_62, %c0_63] : memref<1x18x18x128xf32, #tpu.memory_space<vmem>>, vector<1x16x16x128xf32>
    %46 = vector.shape_cast %45 : vector<1x16x16x128xf32> to vector<256x128xf32>
    %c0_64 = arith.constant 0 : index
    %c1024 = arith.constant 1024 : index
    %47 = vector.load %arg7[%c0_64, %c1024] : memref<256x1152xf32, #tpu.memory_space<vmem>>, vector<256x128xf32>
    tpu.vector_store %arg7[%c0_64, %c1024], %46 {strides = array<i32>} : memref<256x1152xf32, #tpu.memory_space<vmem>>, vector<256x128xf32>,
    %c0_65 = arith.constant 0 : index
    %c0_66 = arith.constant 0 : index
    %48 = vector.load %arg7[%c0_65, %c0_66] : memref<256x1152xf32, #tpu.memory_space<vmem>>, vector<256x1152xf32>
    %c0_67 = arith.constant 0 : index
    %c0_68 = arith.constant 0 : index
    %49 = vector.load %arg3[%c0_67, %c0_68] : memref<1152x128xf32, #tpu.memory_space<vmem>>, vector<1152x128xf32>
    %cst_69 = arith.constant dense<0.000000e+00> : vector<256x128xf32>
    %50 = tpu.matmul %48, %49, %cst_69 {dimension_numbers = #tpu.dot_dimension_numbers<[1], [0], [0], [1], [0, 0, 1, 1], [], []>} : vector<256x1152xf32>, vector<1152x128xf32>, vector<256x128xf32> -> vector<256x128xf32>
    %cst_70 = arith.constant dense<0.000000e+00> : vector<128xf32>
    %51 = vector.multi_reduction <add>, %50, %cst_70 [0] : vector<256x128xf32> to vector<128xf32>
    %cst_71 = arith.constant 3.906250e-03 : f32
    %52 = vector.broadcast %cst_71 : f32 to vector<128xf32>
    %53 = arith.mulf %51, %52 : vector<128xf32>
    %54 = vector.shape_cast %53 : vector<128xf32> to vector<1x128xf32>
    %55 = vector.broadcast %54 : vector<1x128xf32> to vector<256x128xf32>
    %56 = arith.subf %50, %55 : vector<256x128xf32>
    %57 = vector.shape_cast %51 : vector<128xf32> to vector<1x1x1x128xf32>
    %c0_72 = arith.constant 0 : index
    %c0_73 = arith.constant 0 : index
    %c0_74 = arith.constant 0 : index
    %c0_75 = arith.constant 0 : index
    %58 = vector.load %arg5[%c0_72, %c0_73, %c0_74, %c0_75] : memref<1x1x2x128xf32, #tpu.memory_space<vmem>>, vector<1x1x1x128xf32>
    tpu.vector_store %arg5[%c0_72, %c0_73, %c0_74, %c0_75], %57 {strides = array<i32>} : memref<1x1x2x128xf32, #tpu.memory_space<vmem>>, vector<1x1x1x128xf32>,
    %59 = arith.mulf %56, %56 : vector<256x128xf32>
    %cst_76 = arith.constant dense<0.000000e+00> : vector<128xf32>
    %60 = vector.multi_reduction <add>, %59, %cst_76 [0] : vector<256x128xf32> to vector<128xf32>
    %61 = vector.shape_cast %60 : vector<128xf32> to vector<1x1x1x128xf32>
    %c0_77 = arith.constant 0 : index
    %c0_78 = arith.constant 0 : index
    %c1_79 = arith.constant 1 : index
    %c0_80 = arith.constant 0 : index
    %62 = vector.load %arg5[%c0_77, %c0_78, %c1_79, %c0_80] : memref<1x1x2x128xf32, #tpu.memory_space<vmem>>, vector<1x1x1x128xf32>
    tpu.vector_store %arg5[%c0_77, %c0_78, %c1_79, %c0_80], %61 {strides = array<i32>} : memref<1x1x2x128xf32, #tpu.memory_space<vmem>>, vector<1x1x1x128xf32>,
    %63 = vector.shape_cast %50 : vector<256x128xf32> to vector<1x16x16x128xf32>
    %c0_81 = arith.constant 0 : index
    %c0_82 = arith.constant 0 : index
    %c0_83 = arith.constant 0 : index
    %c0_84 = arith.constant 0 : index
    %64 = vector.load %arg4[%c0_81, %c0_82, %c0_83, %c0_84] : memref<1x16x16x128xf32, #tpu.memory_space<vmem>>, vector<1x16x16x128xf32>
    tpu.vector_store %arg4[%c0_81, %c0_82, %c0_83, %c0_84], %63 {strides = array<i32>} : memref<1x16x16x128xf32, #tpu.memory_space<vmem>>, vector<1x16x16x128xf32>,
    return
  }
  func.func @transform_0(%arg0: i32, %arg1: i32) -> (i32, i32, i32, i32) {
    %c0_i32 = arith.constant 0 : i32
    %c0_i32_0 = arith.constant 0 : i32
    %c0_i32_1 = arith.constant 0 : i32
    %c0_i32_2 = arith.constant 0 : i32
    return %arg0, %c0_i32, %c0_i32_0, %c0_i32_1 : i32, i32, i32, i32
  }
  func.func @transform_1(%arg0: i32, %arg1: i32) -> (i32, i32) {
    %c0_i32 = arith.constant 0 : i32
    %c0_i32_0 = arith.constant 0 : i32
    %c0_i32_1 = arith.constant 0 : i32
    return %c0_i32, %c0_i32_0 : i32, i32
  }
  func.func @transform_2(%arg0: i32, %arg1: i32) -> (i32, i32, i32, i32) {
    %c0_i32 = arith.constant 0 : i32
    %c0_i32_0 = arith.constant 0 : i32
    %c0_i32_1 = arith.constant 0 : i32
    return %arg0, %arg1, %c0_i32, %c0_i32_0 : i32, i32, i32, i32
  }
  func.func @transform_3(%arg0: i32, %arg1: i32) -> (i32, i32, i32, i32) {
    %c0_i32 = arith.constant 0 : i32
    %c0_i32_0 = arith.constant 0 : i32
    %c0_i32_1 = arith.constant 0 : i32
    return %arg0, %arg1, %c0_i32, %c0_i32_0 : i32, i32, i32, i32
  }
}

</mosaic_0001>

<llo_original>
// kernel: tpu_custom_call.1
$region0: #{tpu_custom_call.1}
  #allocation0 [shape = 'u32[]', space=smem, size = 0x4, offset = 0x4, fixed_abs, tag = 'smem constant byte address 0x4 - core index']
  #allocation1 [shape = 'u32[72,128]{1,0:T(1,128)}', space=vmem, size = 0x9000, scoped, tag = 'internal scratch']
  #allocation2 [shape = 'f32[1,18,18,128]{3,2,1,0:T(8,128)}', space=vmem, size = 0x36000, scoped, tag = 'scratch operand']
  #allocation3 [shape = 'f32[256,1152]{1,0:T(8,128)}', space=vmem, size = 0x120000, scoped, tag = 'scratch operand']
  %s0 = inlined_call_operand.hbm [shape: f32[2,16,16,128], index: 0, kind: input, shape index: {}]
  %s1 = inlined_call_operand.hbm [shape: f32[1152,128], index: 1, kind: input, shape index: {}]
  %s2 = inlined_call_operand.hbm [shape: f32[2,16,16,128], index: 2, kind: output, shape index: {0}]
  %s3 = inlined_call_operand.hbm [shape: f32[2,1,2,128], index: 3, kind: output, shape index: {1}]
  %4 = xla_tuple %s2, %s3
  %s5 = sld [smem:[#allocation0]]
  $region73: #{tpu_custom_call.1} parent=0
    _
  %s7 = ssub.s32 1, %s5
  %s8 = scalar_select 0, %s7, %s5
  $region1: #{tpu_custom_call.1} parent=0
    #allocation4 [shape = 'u8[262144]{0}', space=vmem, size = 0x40000, scoped, tag = 'input window, operand 0']
    #allocation5 [shape = 's32[2]{0}', space=sflag, size = 0x8, scoped, tag = 'scoped memory for tpu_custom_call.1']
    #allocation6 [shape = 's32[2]{0}', space=sflag, size = 0x8, scoped, tag = 'scoped memory for tpu_custom_call.1']
    #allocation7 [shape = 'u8[589824]{0}', space=vmem, size = 0x90000, scoped, tag = 'input window, operand 1, single buffered']
    #allocation8 [shape = 's32[1]{0}', space=sflag, size = 0x4, scoped, tag = 'scoped memory for tpu_custom_call.1']
    #allocation9 [shape = 'u8[262144]{0}', space=vmem, size = 0x40000, scoped, tag = 'output window, operand 0']
    #allocation10 [shape = 'u8[2048]{0}', space=vmem, size = 0x800, scoped, tag = 'output window, operand 1']
    #allocation11 [shape = 's32[2]{0}', space=sflag, size = 0x8, scoped, tag = 'scoped memory for tpu_custom_call.1']
    %9 = vsyncpa [#allocation5], 0
    %s10 = scalar_lea.sflag [#allocation5], 1
    %11 = vsyncpa %s10, 0
    %12 = vsyncpa [#allocation8], 0
    %13 = vsyncpa [#allocation6], 0
    %s14 = scalar_lea.sflag [#allocation6], 1
    %15 = vsyncpa %s14, 0
    %16 = vsyncpa [#allocation11], 0
    %s17 = scalar_lea.sflag [#allocation11], 1
    %18 = vsyncpa %s17, 0
    loop: start=0, step=1, limit=4
    $region2: #{tpu_custom_call.1} parent=1 // loop_pre_header
      _
    $region3: #{tpu_custom_call.1} parent=1 // loop_header
      %s20 = sphi 0, %s24
      %p21 = scmp.ge.s32.totalorder %s20, 4
      %s27 = sphi 0, %s39
      %s28 = sphi 0, %s35
      %s29 = sphi 0, %s27
      %s30 = sphi 0, %s28
      %s31 = sphi 0, %s29
      %s32 = sphi 0, %s30
      %s42 = sphi 0, %s44
      %s45 = sphi 0, %s42
      %s46 = sphi 0, %s45
      %s62 = sphi 0, %s46
      %s66 = sphi 0, %s66
      %s68 = sphi 0, %s66
      %s69 = sphi 0, %s68
      %s83 = sphi 0, %s69
      %s91 = sphi 0, %s93
      %s94 = sphi 0, %s91
      %s95 = sphi 0, %s94
      %s111 = sphi 0, %s95
      %s119 = sphi 0, %s121
      %s122 = sphi 0, %s119
      %s123 = sphi 0, %s122
      %s139 = sphi 0, %s123
    $region4: #{tpu_custom_call.1} parent=1 // loop_header_branch
      %23 = sbr.rel (%p21) target = $region8
    $region5: #{tpu_custom_call.1} parent=1 // loop_body
      %s25 = ssub.s32 %s20, 1
      %s26 = ssub.s32 %s20, 2
      %s33 = sadd.s32 1, %s28
      %p34 = scmp.ge.s32.totalorder %s33, 1
      %s35 = scalar_select %p34, 0, %s33
      %s36 = sadd.s32 1, %s27
      %s37 = scalar_select %p34, %s36, %s27
      %p38 = scmp.ge.s32.totalorder %s37, 2
      %s39 = scalar_select %p38, 0, %s37
      %s40 = ssub.s32 %s27, %s39
      %p41 = scmp.eq.s32.totalorder %s40, 0
      %s43 = sadd.s32 %s42, 1
      %s44 = scalar_select %p41, %s42, %s43
      %p47 = pneg %p41
      %p48 = scmp.eq.s32.totalorder %s20, 1
      %p49 = por %p47, %p48
      %p50 = scmp.ne.s32.totalorder %s42, %s45
      %p51 = scmp.eq.s32.totalorder %s20, 0
      %p52 = por %p50, %p51
      %p53 = scmp.ne.s32.totalorder %s42, %s45
      %p54 = scmp.eq.s32.totalorder %s25, 1
      %p55 = por %p53, %p54
      %p56 = scmp.ne.s32.totalorder %s45, %s46
      %p57 = scmp.eq.s32.totalorder %s25, 0
      %p58 = por %p56, %p57
      %p59 = scmp.ne.s32.totalorder %s45, %s46
      %p60 = scmp.eq.s32.totalorder %s26, 1
      %p61 = por %p59, %p60
      %p63 = scmp.ne.s32.totalorder %s46, %s62
      %p64 = scmp.eq.s32.totalorder %s26, 0
      %p65 = por %p63, %p64
      %s67 = sadd.s32 %s66, 1
      %p70 = scmp.eq.s32.totalorder %s20, 1
      %p71 = scmp.ne.s32.totalorder %s66, %s68
      %p72 = scmp.eq.s32.totalorder %s20, 0
      %p73 = por %p71, %p72
      %p74 = scmp.ne.s32.totalorder %s66, %s68
      %p75 = scmp.eq.s32.totalorder %s25, 1
      %p76 = por %p74, %p75
      %p77 = scmp.ne.s32.totalorder %s68, %s69
      %p78 = scmp.eq.s32.totalorder %s25, 0
      %p79 = por %p77, %p78
      %p80 = scmp.ne.s32.totalorder %s68, %s69
      %p81 = scmp.eq.s32.totalorder %s26, 1
      %p82 = por %p80, %p81
      %p84 = scmp.ne.s32.totalorder %s69, %s83
      %p85 = scmp.eq.s32.totalorder %s26, 0
      %p86 = por %p84, %p85
      %s87 = ssub.s32 %s27, %s39
      %s88 = ssub.s32 %s28, %s35
      %s89 = sor.u32 %s87, %s88
      %p90 = scmp.eq.s32.totalorder %s89, 0
      %s92 = sadd.s32 %s91, 1
      %s93 = scalar_select %p90, %s91, %s92
      %p96 = pneg %p90
      %p97 = scmp.eq.s32.totalorder %s20, 1
      %p98 = por %p96, %p97
      %p99 = scmp.ne.s32.totalorder %s91, %s94
      %p100 = scmp.eq.s32.totalorder %s20, 0
      %p101 = por %p99, %p100
      %p102 = scmp.ne.s32.totalorder %s91, %s94
      %p103 = scmp.eq.s32.totalorder %s25, 1
      %p104 = por %p102, %p103
      %p105 = scmp.ne.s32.totalorder %s94, %s95
      %p106 = scmp.eq.s32.totalorder %s25, 0
      %p107 = por %p105, %p106
      %p108 = scmp.ne.s32.totalorder %s94, %s95
      %p109 = scmp.eq.s32.totalorder %s26, 1
      %p110 = por %p108, %p109
      %p112 = scmp.ne.s32.totalorder %s95, %s111
      %p113 = scmp.eq.s32.totalorder %s26, 0
      %p114 = por %p112, %p113
      %s115 = ssub.s32 %s27, %s39
      %s116 = ssub.s32 %s28, %s35
      %s117 = sor.u32 %s115, %s116
      %p118 = scmp.eq.s32.totalorder %s117, 0
      %s120 = sadd.s32 %s119, 1
      %s121 = scalar_select %p118, %s119, %s120
      %p124 = pneg %p118
      %p125 = scmp.eq.s32.totalorder %s20, 1
      %p126 = por %p124, %p125
      %p127 = scmp.ne.s32.totalorder %s119, %s122
      %p128 = scmp.eq.s32.totalorder %s20, 0
      %p129 = por %p127, %p128
      %p130 = scmp.ne.s32.totalorder %s119, %s122
      %p131 = scmp.eq.s32.totalorder %s25, 1
      %p132 = por %p130, %p131
      %p133 = scmp.ne.s32.totalorder %s122, %s123
      %p134 = scmp.eq.s32.totalorder %s25, 0
      %p135 = por %p133, %p134
      %p136 = scmp.ne.s32.totalorder %s122, %s123
      %p137 = scmp.eq.s32.totalorder %s26, 1
      %p138 = por %p136, %p137
      %p140 = scmp.ne.s32.totalorder %s123, %s139
      %p141 = scmp.eq.s32.totalorder %s26, 0
      %p142 = por %p140, %p141
      %p143 = scmp.le.s32.totalorder 1, %s20
      %p144 = scmp.lt.s32.totalorder %s20, 3
      %p145 = pnand %p143, %p144
      %p146 = pneg %p145
      // Predicated region
      $region9: #{tpu_custom_call.1} parent=5 // pred_check
        _
      $region10: #{tpu_custom_call.1} parent=5 // pred_check_branch
        %148 = sbr.rel (%p145) target = $region12
      $region11: #{tpu_custom_call.1} parent=5 // pred_region
        %s149 = ssub.s32 %s20, 1
        // Predicated region
        $region13: #{tpu_custom_call.1} parent=11 // pred_check
          %p150 = pneg %p79
        $region14: #{tpu_custom_call.1} parent=11 // pred_check_branch
          %152 = sbr.rel (%p150) target = $region16
        $region15: #{tpu_custom_call.1} parent=11 // pred_region
          %154 = vsyncadd [#allocation8], 0
          %s155 = sshll.u32 %s1, 4
          %s156 = int_to_ptr.hbm [resolvable:$true] %s155
          %s157 = sshll.u32 [#allocation7], 4
          %s158 = int_to_ptr.vmem [resolvable:$true] %s157
          %163 = dma.hbm_to_vmem [thread:$0]  %s156, 18432, %s158, [#allocation8], 128, 128, 8
        $region16: #{tpu_custom_call.1} parent=11 // pred_fallthru
          _
      $region12: #{tpu_custom_call.1} parent=5 // pred_fallthru
        _
      %p164 = scmp.lt.s32.totalorder %s20, 2
      // Predicated region
      $region17: #{tpu_custom_call.1} parent=5 // pred_check
        %p165 = pneg %p164
      $region18: #{tpu_custom_call.1} parent=5 // pred_check_branch
        %167 = sbr.rel (%p165) target = $region20
      $region19: #{tpu_custom_call.1} parent=5 // pred_region
        // Predicated region
        $region21: #{tpu_custom_call.1} parent=19 // pred_check
          %p168 = pneg %p52
        $region22: #{tpu_custom_call.1} parent=19 // pred_check_branch
          %170 = sbr.rel (%p168) target = $region24
        $region23: #{tpu_custom_call.1} parent=19 // pred_region
          %s171 = sand.u32 %s42, 1
          %s172 = scalar_lea.sflag [#allocation5], %s171
          %s173 = sand.u32 %s42, 1
          %s174 = smul.addr %s173, 256
          %s175 = scalar_lea.vmem [#allocation4], %s174
          %177 = vsyncadd %s172, 0
          %s178 = smul.addr %s27, 32
          %s179 = smul.addr %s178, 8
          %s180 = scalar_lea.hbm %s0, %s179
          %s181 = sshll.u32 %s180, 4
          %s182 = int_to_ptr.hbm [resolvable:$true] %s181
          %s183 = sshll.u32 %s175, 4
          %s184 = int_to_ptr.vmem [resolvable:$true] %s183
          %189 = dma.hbm_to_vmem [thread:$0]  %s182, 4096, %s184, %s172, 128, 128, 8
        $region24: #{tpu_custom_call.1} parent=19 // pred_fallthru
          _
      $region20: #{tpu_custom_call.1} parent=5 // pred_fallthru
        _
      %p190 = scmp.le.s32.totalorder 1, %s20
      %p191 = scmp.lt.s32.totalorder %s20, 3
      %p192 = pnand %p190, %p191
      %p193 = pneg %p192
      // Predicated region
      $region25: #{tpu_custom_call.1} parent=5 // pred_check
        _
      $region26: #{tpu_custom_call.1} parent=5 // pred_check_branch
        %195 = sbr.rel (%p192) target = $region28
      $region27: #{tpu_custom_call.1} parent=5 // pred_region
        %s196 = ssub.s32 %s20, 1
        %s197 = sand.u32 %s45, 1
        %s198 = scalar_lea.sflag [#allocation5], %s197
        %s199 = sand.u32 %s45, 1
        %s200 = smul.addr %s199, 256
        %s201 = scalar_lea.vmem [#allocation4], %s200
        // Predicated region
        $region29: #{tpu_custom_call.1} parent=27 // pred_check
          %p202 = pneg %p58
        $region30: #{tpu_custom_call.1} parent=27 // pred_check_branch
          %204 = sbr.rel (%p202) target = $region32
        $region31: #{tpu_custom_call.1} parent=27 // pred_region
          %206 = dma.done %s198, 4096
        $region32: #{tpu_custom_call.1} parent=27 // pred_fallthru
          _
        // Predicated region
        $region33: #{tpu_custom_call.1} parent=27 // pred_check
          %p207 = pneg %p79
        $region34: #{tpu_custom_call.1} parent=27 // pred_check_branch
          %209 = sbr.rel (%p207) target = $region36
        $region35: #{tpu_custom_call.1} parent=27 // pred_region
          %211 = dma.done [#allocation8], 18432
        $region36: #{tpu_custom_call.1} parent=27 // pred_fallthru
          _
        %s212 = sand.u32 %s45, 1
        %s213 = scalar_lea.sflag [#allocation5], %s212
        %s214 = sand.u32 %s45, 1
        %s215 = smul.addr %s214, 256
        %s216 = scalar_lea.vmem [#allocation4], %s215
        %p217 = pneg %p58
        %p218 = pneg %p55
        %p219 = pneg %p79
        %p220 = pneg %p76
        %p221 = pneg %p107
        %p222 = pneg %p104
        %s223 = sand.u32 %s94, 1
        %s224 = scalar_lea.sflag [#allocation6], %s223
        %s225 = sand.u32 %s94, 1
        %s226 = smul.addr %s225, 256
        %s227 = scalar_lea.vmem [#allocation9], %s226
        %p228 = pneg %p135
        %p229 = pneg %p132
        %s230 = sand.u32 %s122, 1
        %s231 = scalar_lea.sflag [#allocation11], %s230
        %s232 = sand.u32 %s122, 1
        %s233 = smul.addr %s232, 2
        %s234 = scalar_lea.vmem [#allocation10], %s233
        %s235 = smul.u32 16, %s30
        %s236 = smul.u32 %s30, 16
        %237 = vst [vmem:[#allocation2] sm:$0x1] 0.0
        %238 = vst [vmem:[#allocation2 + $0x18] sm:$0x1] 0.0
        %239 = vst [vmem:[#allocation2 + $0x30] sm:$0x1] 0.0
        %240 = vst [vmem:[#allocation2 + $0x48] sm:$0x1] 0.0
        %241 = vst [vmem:[#allocation2 + $0x60] sm:$0x1] 0.0
        %242 = vst [vmem:[#allocation2 + $0x78] sm:$0x1] 0.0
        %243 = vst [vmem:[#allocation2 + $0x90] sm:$0x1] 0.0
        %244 = vst [vmem:[#allocation2 + $0xa8] sm:$0x1] 0.0
        %245 = vst [vmem:[#allocation2 + $0xc0] sm:$0x1] 0.0
        %246 = vst [vmem:[#allocation2 + $0xd8] sm:$0x1] 0.0
        %247 = vst [vmem:[#allocation2 + $0xf0] sm:$0x1] 0.0
        %248 = vst [vmem:[#allocation2 + $0x108] sm:$0x1] 0.0
        %249 = vst [vmem:[#allocation2 + $0x120] sm:$0x1] 0.0
        %250 = vst [vmem:[#allocation2 + $0x138] sm:$0x1] 0.0
        %251 = vst [vmem:[#allocation2 + $0x150] sm:$0x1] 0.0
        %252 = vst [vmem:[#allocation2 + $0x168] sm:$0x1] 0.0
        %253 = vst [vmem:[#allocation2 + $0x180] sm:$0x1] 0.0
        %254 = vst [vmem:[#allocation2 + $0x198] sm:$0x1] 0.0
        %255 = vst [vmem:[#allocation2 + $0x11] sm:$0x1] 0.0
        %256 = vst [vmem:[#allocation2 + $0x29] sm:$0x1] 0.0
        %257 = vst [vmem:[#allocation2 + $0x41] sm:$0x1] 0.0
        %258 = vst [vmem:[#allocation2 + $0x59] sm:$0x1] 0.0
        %259 = vst [vmem:[#allocation2 + $0x71] sm:$0x1] 0.0
        %260 = vst [vmem:[#allocation2 + $0x89] sm:$0x1] 0.0
        %261 = vst [vmem:[#allocation2 + $0xa1] sm:$0x1] 0.0
        %262 = vst [vmem:[#allocation2 + $0xb9] sm:$0x1] 0.0
        %263 = vst [vmem:[#allocation2 + $0xd1] sm:$0x1] 0.0
        %264 = vst [vmem:[#allocation2 + $0xe9] sm:$0x1] 0.0
        %265 = vst [vmem:[#allocation2 + $0x101] sm:$0x1] 0.0
        %266 = vst [vmem:[#allocation2 + $0x119] sm:$0x1] 0.0
        %267 = vst [vmem:[#allocation2 + $0x131] sm:$0x1] 0.0
        %268 = vst [vmem:[#allocation2 + $0x149] sm:$0x1] 0.0
        %269 = vst [vmem:[#allocation2 + $0x161] sm:$0x1] 0.0
        %270 = vst [vmem:[#allocation2 + $0x179] sm:$0x1] 0.0
        %271 = vst [vmem:[#allocation2 + $0x191] sm:$0x1] 0.0
        %272 = vst [vmem:[#allocation2 + $0x1a9] sm:$0x1] 0.0
        %s273 = smul.u32 %s236, 16
        %s274 = scalar_lea.vmem %s201, %s273 [#allocation4]
        %v275 = vld [vmem:[%s274] sm:$0xff]
        %v276 = vld [vmem:[%s274 + $0x8] sm:$0xff]
        %v277 = vld [vmem:[%s274 + $0x10] sm:$0xff]
        %v278 = vld [vmem:[%s274 + $0x18] sm:$0xff]
        %v279 = vld [vmem:[%s274 + $0x20] sm:$0xff]
        %v280 = vld [vmem:[%s274 + $0x28] sm:$0xff]
        %v281 = vld [vmem:[%s274 + $0x30] sm:$0xff]
        %v282 = vld [vmem:[%s274 + $0x38] sm:$0xff]
        %v283 = vld [vmem:[%s274 + $0x40] sm:$0xff]
        %v284 = vld [vmem:[%s274 + $0x48] sm:$0xff]
        %v285 = vld [vmem:[%s274 + $0x50] sm:$0xff]
        %v286 = vld [vmem:[%s274 + $0x58] sm:$0xff]
        %v287 = vld [vmem:[%s274 + $0x60] sm:$0xff]
        %v288 = vld [vmem:[%s274 + $0x68] sm:$0xff]
        %v289 = vld [vmem:[%s274 + $0x70] sm:$0xff]
        %v290 = vld [vmem:[%s274 + $0x78] sm:$0xff]
        %v291 = vld [vmem:[%s274 + $0x80] sm:$0xff]
        %v292 = vld [vmem:[%s274 + $0x88] sm:$0xff]
        %v293 = vld [vmem:[%s274 + $0x90] sm:$0xff]
        %v294 = vld [vmem:[%s274 + $0x98] sm:$0xff]
        %v295 = vld [vmem:[%s274 + $0xa0] sm:$0xff]
        %v296 = vld [vmem:[%s274 + $0xa8] sm:$0xff]
        %v297 = vld [vmem:[%s274 + $0xb0] sm:$0xff]
        %v298 = vld [vmem:[%s274 + $0xb8] sm:$0xff]
        %v299 = vld [vmem:[%s274 + $0xc0] sm:$0xff]
        %v300 = vld [vmem:[%s274 + $0xc8] sm:$0xff]
        %v301 = vld [vmem:[%s274 + $0xd0] sm:$0xff]
        %v302 = vld [vmem:[%s274 + $0xd8] sm:$0xff]
        %v303 = vld [vmem:[%s274 + $0xe0] sm:$0xff]
        %v304 = vld [vmem:[%s274 + $0xe8] sm:$0xff]
        %v305 = vld [vmem:[%s274 + $0xf0] sm:$0xff]
        %v306 = vld [vmem:[%s274 + $0xf8] sm:$0xff]
        %s307 = scalar_lea.vmem [#allocation2], 24
        %308 = vst [vmem:[%s307 + $0x1] sm:$0xff] %v275
        %309 = vst [vmem:[%s307 + $0x9] sm:$0xff] %v276
        %310 = vst [vmem:[%s307 + $0x19] sm:$0xff] %v277
        %311 = vst [vmem:[%s307 + $0x21] sm:$0xff] %v278
        %312 = vst [vmem:[%s307 + $0x31] sm:$0xff] %v279
        %313 = vst [vmem:[%s307 + $0x39] sm:$0xff] %v280
        %314 = vst [vmem:[%s307 + $0x49] sm:$0xff] %v281
        %315 = vst [vmem:[%s307 + $0x51] sm:$0xff] %v282
        %316 = vst [vmem:[%s307 + $0x61] sm:$0xff] %v283
        %317 = vst [vmem:[%s307 + $0x69] sm:$0xff] %v284
        %318 = vst [vmem:[%s307 + $0x79] sm:$0xff] %v285
        %319 = vst [vmem:[%s307 + $0x81] sm:$0xff] %v286
        %320 = vst [vmem:[%s307 + $0x91] sm:$0xff] %v287
        %321 = vst [vmem:[%s307 + $0x99] sm:$0xff] %v288
        %322 = vst [vmem:[%s307 + $0xa9] sm:$0xff] %v289
        %323 = vst [vmem:[%s307 + $0xb1] sm:$0xff] %v290
        %324 = vst [vmem:[%s307 + $0xc1] sm:$0xff] %v291
        %325 = vst [vmem:[%s307 + $0xc9] sm:$0xff] %v292
        %326 = vst [vmem:[%s307 + $0xd9] sm:$0xff] %v293
        %327 = vst [vmem:[%s307 + $0xe1] sm:$0xff] %v294
        %328 = vst [vmem:[%s307 + $0xf1] sm:$0xff] %v295
        %329 = vst [vmem:[%s307 + $0xf9] sm:$0xff] %v296
        %330 = vst [vmem:[%s307 + $0x109] sm:$0xff] %v297
        %331 = vst [vmem:[%s307 + $0x111] sm:$0xff] %v298
        %332 = vst [vmem:[%s307 + $0x121] sm:$0xff] %v299
        %333 = vst [vmem:[%s307 + $0x129] sm:$0xff] %v300
        %334 = vst [vmem:[%s307 + $0x139] sm:$0xff] %v301
        %335 = vst [vmem:[%s307 + $0x141] sm:$0xff] %v302
        %336 = vst [vmem:[%s307 + $0x151] sm:$0xff] %v303
        %337 = vst [vmem:[%s307 + $0x159] sm:$0xff] %v304
        %338 = vst [vmem:[%s307 + $0x169] sm:$0xff] %v305
        %339 = vst [vmem:[%s307 + $0x171] sm:$0xff] %v306
        %p340 = scmp.eq.s32.totalorder %s30, 0
        // Predicated region
        $region37: #{tpu_custom_call.1} parent=27 // pred_check
          %p341 = pneg %p340
        $region38: #{tpu_custom_call.1} parent=27 // pred_check_branch
          %343 = sbr.rel (%p341) target = $region40
        $region39: #{tpu_custom_call.1} parent=27 // pred_region
          %344 = vst [vmem:[#allocation2 + $0x1] sm:$0xff] 0.0
          %345 = vst [vmem:[#allocation2 + $0x9] sm:$0xff] 0.0
        $region40: #{tpu_custom_call.1} parent=27 // pred_fallthru
          _
        %p346 = scmp.gt.s32.totalorder %s30, 0
        // Predicated region
        $region41: #{tpu_custom_call.1} parent=27 // pred_check
          %p347 = pneg %p346
        $region42: #{tpu_custom_call.1} parent=27 // pred_check_branch
          %349 = sbr.rel (%p347) target = $region44
        $region43: #{tpu_custom_call.1} parent=27 // pred_region
          %s350 = ssub.s32 %s236, 1
          %s351 = smul.u32 %s350, 16
          %s352 = scalar_lea.vmem %s201, %s351 [#allocation4]
          %v353 = vld [vmem:[%s352] sm:$0xff]
          %v354 = vld [vmem:[%s352 + $0x8] sm:$0xff]
          %355 = vst [vmem:[#allocation2 + $0x1] sm:$0xff] %v353
          %356 = vst [vmem:[#allocation2 + $0x9] sm:$0xff] %v354
        $region44: #{tpu_custom_call.1} parent=27 // pred_fallthru
          _
        // Predicated region
        $region45: #{tpu_custom_call.1} parent=27 // pred_check
          %p357 = pneg %p340
        $region46: #{tpu_custom_call.1} parent=27 // pred_check_branch
          %359 = sbr.rel (%p357) target = $region48
        $region47: #{tpu_custom_call.1} parent=27 // pred_region
          %s360 = scalar_lea.vmem [#allocation2], 408
          %361 = vst [vmem:[%s360 + $0x1] sm:$0xff] 0.0
          %362 = vst [vmem:[%s360 + $0x9] sm:$0xff] 0.0
        $region48: #{tpu_custom_call.1} parent=27 // pred_fallthru
          _
        %p363 = scmp.lt.s32.totalorder %s30, 0
        // Predicated region
        $region49: #{tpu_custom_call.1} parent=27 // pred_check
          %p364 = pneg %p363
        $region50: #{tpu_custom_call.1} parent=27 // pred_check_branch
          %366 = sbr.rel (%p364) target = $region52
        $region51: #{tpu_custom_call.1} parent=27 // pred_region
          %s367 = sadd.s32 %s236, 16
          %s368 = smul.u32 %s367, 16
          %s369 = scalar_lea.vmem %s201, %s368 [#allocation4]
          %v370 = vld [vmem:[%s369] sm:$0xff]
          %v371 = vld [vmem:[%s369 + $0x8] sm:$0xff]
          %s372 = scalar_lea.vmem [#allocation2], 408
          %373 = vst [vmem:[%s372 + $0x1] sm:$0xff] %v370
          %374 = vst [vmem:[%s372 + $0x9] sm:$0xff] %v371
        $region52: #{tpu_custom_call.1} parent=27 // pred_fallthru
          _
        %v375 = vld [vmem:[#allocation2] sm:$0xff]
        %v376 = vld [vmem:[#allocation2 + $0x8] sm:$0xff]
        %v377 = vld [vmem:[#allocation2 + $0x18] sm:$0xff]
        %v378 = vld [vmem:[#allocation2 + $0x20] sm:$0xff]
        %v379 = vld [vmem:[#allocation2 + $0x30] sm:$0xff]
        %v380 = vld [vmem:[#allocation2 + $0x38] sm:$0xff]
        %v381 = vld [vmem:[#allocation2 + $0x48] sm:$0xff]
        %v382 = vld [vmem:[#allocation2 + $0x50] sm:$0xff]
        %v383 = vld [vmem:[#allocation2 + $0x60] sm:$0xff]
        %v384 = vld [vmem:[#allocation2 + $0x68] sm:$0xff]
        %v385 = vld [vmem:[#allocation2 + $0x78] sm:$0xff]
        %v386 = vld [vmem:[#allocation2 + $0x80] sm:$0xff]
        %v387 = vld [vmem:[#allocation2 + $0x90] sm:$0xff]
        %v388 = vld [vmem:[#allocation2 + $0x98] sm:$0xff]
        %v389 = vld [vmem:[#allocation2 + $0xa8] sm:$0xff]
        %v390 = vld [vmem:[#allocation2 + $0xb0] sm:$0xff]
        %v391 = vld [vmem:[#allocation2 + $0xc0] sm:$0xff]
        %v392 = vld [vmem:[#allocation2 + $0xc8] sm:$0xff]
        %v393 = vld [vmem:[#allocation2 + $0xd8] sm:$0xff]
        %v394 = vld [vmem:[#allocation2 + $0xe0] sm:$0xff]
        %v395 = vld [vmem:[#allocation2 + $0xf0] sm:$0xff]
        %v396 = vld [vmem:[#allocation2 + $0xf8] sm:$0xff]
        %v397 = vld [vmem:[#allocation2 + $0x108] sm:$0xff]
        %v398 = vld [vmem:[#allocation2 + $0x110] sm:$0xff]
        %v399 = vld [vmem:[#allocation2 + $0x120] sm:$0xff]
        %v400 = vld [vmem:[#allocation2 + $0x128] sm:$0xff]
        %v401 = vld [vmem:[#allocation2 + $0x138] sm:$0xff]
        %v402 = vld [vmem:[#allocation2 + $0x140] sm:$0xff]
        %v403 = vld [vmem:[#allocation2 + $0x150] sm:$0xff]
        %v404 = vld [vmem:[#allocation2 + $0x158] sm:$0xff]
        %v405 = vld [vmem:[#allocation2 + $0x168] sm:$0xff]
        %v406 = vld [vmem:[#allocation2 + $0x170] sm:$0xff]
        %407 = vst [vmem:[#allocation3] sm:$0xff] %v375
        %408 = vst [vmem:[#allocation3 + $0x48] sm:$0xff] %v376
        %409 = vst [vmem:[#allocation3 + $0x90] sm:$0xff] %v377
        %410 = vst [vmem:[#allocation3 + $0xd8] sm:$0xff] %v378
        %411 = vst [vmem:[#allocation3 + $0x120] sm:$0xff] %v379
        %412 = vst [vmem:[#allocation3 + $0x168] sm:$0xff] %v380
        %413 = vst [vmem:[#allocation3 + $0x1b0] sm:$0xff] %v381
        %414 = vst [vmem:[#allocation3 + $0x1f8] sm:$0xff] %v382
        %415 = vst [vmem:[#allocation3 + $0x240] sm:$0xff] %v383
        %416 = vst [vmem:[#allocation3 + $0x288] sm:$0xff] %v384
        %417 = vst [vmem:[#allocation3 + $0x2d0] sm:$0xff] %v385
        %418 = vst [vmem:[#allocation3 + $0x318] sm:$0xff] %v386
        %419 = vst [vmem:[#allocation3 + $0x360] sm:$0xff] %v387
        %420 = vst [vmem:[#allocation3 + $0x3a8] sm:$0xff] %v388
        %421 = vst [vmem:[#allocation3 + $0x3f0] sm:$0xff] %v389
        %422 = vst [vmem:[#allocation3 + $0x438] sm:$0xff] %v390
        %423 = vst [vmem:[#allocation3 + $0x480] sm:$0xff] %v391
        %424 = vst [vmem:[#allocation3 + $0x4c8] sm:$0xff] %v392
        %425 = vst [vmem:[#allocation3 + $0x510] sm:$0xff] %v393
        %426 = vst [vmem:[#allocation3 + $0x558] sm:$0xff] %v394
        %427 = vst [vmem:[#allocation3 + $0x5a0] sm:$0xff] %v395
        %428 = vst [vmem:[#allocation3 + $0x5e8] sm:$0xff] %v396
        %429 = vst [vmem:[#allocation3 + $0x630] sm:$0xff] %v397
        %430 = vst [vmem:[#allocation3 + $0x678] sm:$0xff] %v398
        %431 = vst [vmem:[#allocation3 + $0x6c0] sm:$0xff] %v399
        %432 = vst [vmem:[#allocation3 + $0x708] sm:$0xff] %v400
        %433 = vst [vmem:[#allocation3 + $0x750] sm:$0xff] %v401
        %434 = vst [vmem:[#allocation3 + $0x798] sm:$0xff] %v402
        %435 = vst [vmem:[#allocation3 + $0x7e0] sm:$0xff] %v403
        %436 = vst [vmem:[#allocation3 + $0x828] sm:$0xff] %v404
        %437 = vst [vmem:[#allocation3 + $0x870] sm:$0xff] %v405
        %438 = vst [vmem:[#allocation3 + $0x8b8] sm:$0xff] %v406
        %v439 = vld [vmem:[#allocation2 + $0x1] sm:$0xff]
        %v440 = vld [vmem:[#allocation2 + $0x9] sm:$0xff]
        %v441 = vld [vmem:[#allocation2 + $0x19] sm:$0xff]
        %v442 = vld [vmem:[#allocation2 + $0x21] sm:$0xff]
        %v443 = vld [vmem:[#allocation2 + $0x31] sm:$0xff]
        %v444 = vld [vmem:[#allocation2 + $0x39] sm:$0xff]
        %v445 = vld [vmem:[#allocation2 + $0x49] sm:$0xff]
        %v446 = vld [vmem:[#allocation2 + $0x51] sm:$0xff]
        %v447 = vld [vmem:[#allocation2 + $0x61] sm:$0xff]
        %v448 = vld [vmem:[#allocation2 + $0x69] sm:$0xff]
        %v449 = vld [vmem:[#allocation2 + $0x79] sm:$0xff]
        %v450 = vld [vmem:[#allocation2 + $0x81] sm:$0xff]
        %v451 = vld [vmem:[#allocation2 + $0x91] sm:$0xff]
        %v452 = vld [vmem:[#allocation2 + $0x99] sm:$0xff]
        %v453 = vld [vmem:[#allocation2 + $0xa9] sm:$0xff]
        %v454 = vld [vmem:[#allocation2 + $0xb1] sm:$0xff]
        %v455 = vld [vmem:[#allocation2 + $0xc1] sm:$0xff]
        %v456 = vld [vmem:[#allocation2 + $0xc9] sm:$0xff]
        %v457 = vld [vmem:[#allocation2 + $0xd9] sm:$0xff]
        %v458 = vld [vmem:[#allocation2 + $0xe1] sm:$0xff]
        %v459 = vld [vmem:[#allocation2 + $0xf1] sm:$0xff]
        %v460 = vld [vmem:[#allocation2 + $0xf9] sm:$0xff]
        %v461 = vld [vmem:[#allocation2 + $0x109] sm:$0xff]
        %v462 = vld [vmem:[#allocation2 + $0x111] sm:$0xff]
        %v463 = vld [vmem:[#allocation2 + $0x121] sm:$0xff]
        %v464 = vld [vmem:[#allocation2 + $0x129] sm:$0xff]
        %v465 = vld [vmem:[#allocation2 + $0x139] sm:$0xff]
        %v466 = vld [vmem:[#allocation2 + $0x141] sm:$0xff]
        %v467 = vld [vmem:[#allocation2 + $0x151] sm:$0xff]
        %v468 = vld [vmem:[#allocation2 + $0x159] sm:$0xff]
        %v469 = vld [vmem:[#allocation2 + $0x169] sm:$0xff]
        %v470 = vld [vmem:[#allocation2 + $0x171] sm:$0xff]
        %471 = vst [vmem:[#allocation3 + $0x8] sm:$0xff] %v439
        %472 = vst [vmem:[#allocation3 + $0x50] sm:$0xff] %v440
        %473 = vst [vmem:[#allocation3 + $0x98] sm:$0xff] %v441
        %474 = vst [vmem:[#allocation3 + $0xe0] sm:$0xff] %v442
        %475 = vst [vmem:[#allocation3 + $0x128] sm:$0xff] %v443
        %476 = vst [vmem:[#allocation3 + $0x170] sm:$0xff] %v444
        %477 = vst [vmem:[#allocation3 + $0x1b8] sm:$0xff] %v445
        %478 = vst [vmem:[#allocation3 + $0x200] sm:$0xff] %v446
        %479 = vst [vmem:[#allocation3 + $0x248] sm:$0xff] %v447
        %480 = vst [vmem:[#allocation3 + $0x290] sm:$0xff] %v448
        %481 = vst [vmem:[#allocation3 + $0x2d8] sm:$0xff] %v449
        %482 = vst [vmem:[#allocation3 + $0x320] sm:$0xff] %v450
        %483 = vst [vmem:[#allocation3 + $0x368] sm:$0xff] %v451
        %484 = vst [vmem:[#allocation3 + $0x3b0] sm:$0xff] %v452
        %485 = vst [vmem:[#allocation3 + $0x3f8] sm:$0xff] %v453
        %486 = vst [vmem:[#allocation3 + $0x440] sm:$0xff] %v454
        %487 = vst [vmem:[#allocation3 + $0x488] sm:$0xff] %v455
        %488 = vst [vmem:[#allocation3 + $0x4d0] sm:$0xff] %v456
        %489 = vst [vmem:[#allocation3 + $0x518] sm:$0xff] %v457
        %490 = vst [vmem:[#allocation3 + $0x560] sm:$0xff] %v458
        %491 = vst [vmem:[#allocation3 + $0x5a8] sm:$0xff] %v459
        %492 = vst [vmem:[#allocation3 + $0x5f0] sm:$0xff] %v460
        %493 = vst [vmem:[#allocation3 + $0x638] sm:$0xff] %v461
        %494 = vst [vmem:[#allocation3 + $0x680] sm:$0xff] %v462
        %495 = vst [vmem:[#allocation3 + $0x6c8] sm:$0xff] %v463
        %496 = vst [vmem:[#allocation3 + $0x710] sm:$0xff] %v464
        %497 = vst [vmem:[#allocation3 + $0x758] sm:$0xff] %v465
        %498 = vst [vmem:[#allocation3 + $0x7a0] sm:$0xff] %v466
        %499 = vst [vmem:[#allocation3 + $0x7e8] sm:$0xff] %v467
        %500 = vst [vmem:[#allocation3 + $0x830] sm:$0xff] %v468
        %501 = vst [vmem:[#allocation3 + $0x878] sm:$0xff] %v469
        %502 = vst [vmem:[#allocation3 + $0x8c0] sm:$0xff] %v470
        %v503 = vld [vmem:[#allocation2 + $0x2] sm:$0xff]
        %v504 = vld [vmem:[#allocation2 + $0xa] sm:$0xff]
        %v505 = vld [vmem:[#allocation2 + $0x1a] sm:$0xff]
        %v506 = vld [vmem:[#allocation2 + $0x22] sm:$0xff]
        %v507 = vld [vmem:[#allocation2 + $0x32] sm:$0xff]
        %v508 = vld [vmem:[#allocation2 + $0x3a] sm:$0xff]
        %v509 = vld [vmem:[#allocation2 + $0x4a] sm:$0xff]
        %v510 = vld [vmem:[#allocation2 + $0x52] sm:$0xff]
        %v511 = vld [vmem:[#allocation2 + $0x62] sm:$0xff]
        %v512 = vld [vmem:[#allocation2 + $0x6a] sm:$0xff]
        %v513 = vld [vmem:[#allocation2 + $0x7a] sm:$0xff]
        %v514 = vld [vmem:[#allocation2 + $0x82] sm:$0xff]
        %v515 = vld [vmem:[#allocation2 + $0x92] sm:$0xff]
        %v516 = vld [vmem:[#allocation2 + $0x9a] sm:$0xff]
        %v517 = vld [vmem:[#allocation2 + $0xaa] sm:$0xff]
        %v518 = vld [vmem:[#allocation2 + $0xb2] sm:$0xff]
        %v519 = vld [vmem:[#allocation2 + $0xc2] sm:$0xff]
        %v520 = vld [vmem:[#allocation2 + $0xca] sm:$0xff]
        %v521 = vld [vmem:[#allocation2 + $0xda] sm:$0xff]
        %v522 = vld [vmem:[#allocation2 + $0xe2] sm:$0xff]
        %v523 = vld [vmem:[#allocation2 + $0xf2] sm:$0xff]
        %v524 = vld [vmem:[#allocation2 + $0xfa] sm:$0xff]
        %v525 = vld [vmem:[#allocation2 + $0x10a] sm:$0xff]
        %v526 = vld [vmem:[#allocation2 + $0x112] sm:$0xff]
        %v527 = vld [vmem:[#allocation2 + $0x122] sm:$0xff]
        %v528 = vld [vmem:[#allocation2 + $0x12a] sm:$0xff]
        %v529 = vld [vmem:[#allocation2 + $0x13a] sm:$0xff]
        %v530 = vld [vmem:[#allocation2 + $0x142] sm:$0xff]
        %v531 = vld [vmem:[#allocation2 + $0x152] sm:$0xff]
        %v532 = vld [vmem:[#allocation2 + $0x15a] sm:$0xff]
        %v533 = vld [vmem:[#allocation2 + $0x16a] sm:$0xff]
        %v534 = vld [vmem:[#allocation2 + $0x172] sm:$0xff]
        %535 = vst [vmem:[#allocation3 + $0x10] sm:$0xff] %v503
        %536 = vst [vmem:[#allocation3 + $0x58] sm:$0xff] %v504
        %537 = vst [vmem:[#allocation3 + $0xa0] sm:$0xff] %v505
        %538 = vst [vmem:[#allocation3 + $0xe8] sm:$0xff] %v506
        %539 = vst [vmem:[#allocation3 + $0x130] sm:$0xff] %v507
        %540 = vst [vmem:[#allocation3 + $0x178] sm:$0xff] %v508
        %541 = vst [vmem:[#allocation3 + $0x1c0] sm:$0xff] %v509
        %542 = vst [vmem:[#allocation3 + $0x208] sm:$0xff] %v510
        %543 = vst [vmem:[#allocation3 + $0x250] sm:$0xff] %v511
        %544 = vst [vmem:[#allocation3 + $0x298] sm:$0xff] %v512
        %545 = vst [vmem:[#allocation3 + $0x2e0] sm:$0xff] %v513
        %546 = vst [vmem:[#allocation3 + $0x328] sm:$0xff] %v514
        %547 = vst [vmem:[#allocation3 + $0x370] sm:$0xff] %v515
        %548 = vst [vmem:[#allocation3 + $0x3b8] sm:$0xff] %v516
        %549 = vst [vmem:[#allocation3 + $0x400] sm:$0xff] %v517
        %550 = vst [vmem:[#allocation3 + $0x448] sm:$0xff] %v518
        %551 = vst [vmem:[#allocation3 + $0x490] sm:$0xff] %v519
        %552 = vst [vmem:[#allocation3 + $0x4d8] sm:$0xff] %v520
        %553 = vst [vmem:[#allocation3 + $0x520] sm:$0xff] %v521
        %554 = vst [vmem:[#allocation3 + $0x568] sm:$0xff] %v522
        %555 = vst [vmem:[#allocation3 + $0x5b0] sm:$0xff] %v523
        %556 = vst [vmem:[#allocation3 + $0x5f8] sm:$0xff] %v524
        %557 = vst [vmem:[#allocation3 + $0x640] sm:$0xff] %v525
        %558 = vst [vmem:[#allocation3 + $0x688] sm:$0xff] %v526
        %559 = vst [vmem:[#allocation3 + $0x6d0] sm:$0xff] %v527
        %560 = vst [vmem:[#allocation3 + $0x718] sm:$0xff] %v528
        %561 = vst [vmem:[#allocation3 + $0x760] sm:$0xff] %v529
        %562 = vst [vmem:[#allocation3 + $0x7a8] sm:$0xff] %v530
        %563 = vst [vmem:[#allocation3 + $0x7f0] sm:$0xff] %v531
        %564 = vst [vmem:[#allocation3 + $0x838] sm:$0xff] %v532
        %565 = vst [vmem:[#allocation3 + $0x880] sm:$0xff] %v533
        %566 = vst [vmem:[#allocation3 + $0x8c8] sm:$0xff] %v534
        %v567 = vld [vmem:[%s307] sm:$0xff]
        %v568 = vld [vmem:[%s307 + $0x8] sm:$0xff]
        %v569 = vld [vmem:[%s307 + $0x18] sm:$0xff]
        %v570 = vld [vmem:[%s307 + $0x20] sm:$0xff]
        %v571 = vld [vmem:[%s307 + $0x30] sm:$0xff]
        %v572 = vld [vmem:[%s307 + $0x38] sm:$0xff]
        %v573 = vld [vmem:[%s307 + $0x48] sm:$0xff]
        %v574 = vld [vmem:[%s307 + $0x50] sm:$0xff]
        %v575 = vld [vmem:[%s307 + $0x60] sm:$0xff]
        %v576 = vld [vmem:[%s307 + $0x68] sm:$0xff]
        %v577 = vld [vmem:[%s307 + $0x78] sm:$0xff]
        %v578 = vld [vmem:[%s307 + $0x80] sm:$0xff]
        %v579 = vld [vmem:[%s307 + $0x90] sm:$0xff]
        %v580 = vld [vmem:[%s307 + $0x98] sm:$0xff]
        %v581 = vld [vmem:[%s307 + $0xa8] sm:$0xff]
        %v582 = vld [vmem:[%s307 + $0xb0] sm:$0xff]
        %v583 = vld [vmem:[%s307 + $0xc0] sm:$0xff]
        %v584 = vld [vmem:[%s307 + $0xc8] sm:$0xff]
        %v585 = vld [vmem:[%s307 + $0xd8] sm:$0xff]
        %v586 = vld [vmem:[%s307 + $0xe0] sm:$0xff]
        %v587 = vld [vmem:[%s307 + $0xf0] sm:$0xff]
        %v588 = vld [vmem:[%s307 + $0xf8] sm:$0xff]
        %v589 = vld [vmem:[%s307 + $0x108] sm:$0xff]
        %v590 = vld [vmem:[%s307 + $0x110] sm:$0xff]
        %v591 = vld [vmem:[%s307 + $0x120] sm:$0xff]
        %v592 = vld [vmem:[%s307 + $0x128] sm:$0xff]
        %v593 = vld [vmem:[%s307 + $0x138] sm:$0xff]
        %v594 = vld [vmem:[%s307 + $0x140] sm:$0xff]
        %v595 = vld [vmem:[%s307 + $0x150] sm:$0xff]
        %v596 = vld [vmem:[%s307 + $0x158] sm:$0xff]
        %v597 = vld [vmem:[%s307 + $0x168] sm:$0xff]
        %v598 = vld [vmem:[%s307 + $0x170] sm:$0xff]
        %599 = vst [vmem:[#allocation3 + $0x18] sm:$0xff] %v567
        %600 = vst [vmem:[#allocation3 + $0x60] sm:$0xff] %v568
        %601 = vst [vmem:[#allocation3 + $0xa8] sm:$0xff] %v569
        %602 = vst [vmem:[#allocation3 + $0xf0] sm:$0xff] %v570
        %603 = vst [vmem:[#allocation3 + $0x138] sm:$0xff] %v571
        %604 = vst [vmem:[#allocation3 + $0x180] sm:$0xff] %v572
        %605 = vst [vmem:[#allocation3 + $0x1c8] sm:$0xff] %v573
        %606 = vst [vmem:[#allocation3 + $0x210] sm:$0xff] %v574
        %607 = vst [vmem:[#allocation3 + $0x258] sm:$0xff] %v575
        %608 = vst [vmem:[#allocation3 + $0x2a0] sm:$0xff] %v576
        %609 = vst [vmem:[#allocation3 + $0x2e8] sm:$0xff] %v577
        %610 = vst [vmem:[#allocation3 + $0x330] sm:$0xff] %v578
        %611 = vst [vmem:[#allocation3 + $0x378] sm:$0xff] %v579
        %612 = vst [vmem:[#allocation3 + $0x3c0] sm:$0xff] %v580
        %613 = vst [vmem:[#allocation3 + $0x408] sm:$0xff] %v581
        %614 = vst [vmem:[#allocation3 + $0x450] sm:$0xff] %v582
        %615 = vst [vmem:[#allocation3 + $0x498] sm:$0xff] %v583
        %616 = vst [vmem:[#allocation3 + $0x4e0] sm:$0xff] %v584
        %617 = vst [vmem:[#allocation3 + $0x528] sm:$0xff] %v585
        %618 = vst [vmem:[#allocation3 + $0x570] sm:$0xff] %v586
        %619 = vst [vmem:[#allocation3 + $0x5b8] sm:$0xff] %v587
        %620 = vst [vmem:[#allocation3 + $0x600] sm:$0xff] %v588
        %621 = vst [vmem:[#allocation3 + $0x648] sm:$0xff] %v589
        %622 = vst [vmem:[#allocation3 + $0x690] sm:$0xff] %v590
        %623 = vst [vmem:[#allocation3 + $0x6d8] sm:$0xff] %v591
        %624 = vst [vmem:[#allocation3 + $0x720] sm:$0xff] %v592
        %625 = vst [vmem:[#allocation3 + $0x768] sm:$0xff] %v593
        %626 = vst [vmem:[#allocation3 + $0x7b0] sm:$0xff] %v594
        %627 = vst [vmem:[#allocation3 + $0x7f8] sm:$0xff] %v595
        %628 = vst [vmem:[#allocation3 + $0x840] sm:$0xff] %v596
        %629 = vst [vmem:[#allocation3 + $0x888] sm:$0xff] %v597
        %630 = vst [vmem:[#allocation3 + $0x8d0] sm:$0xff] %v598
        %v631 = vld [vmem:[%s307 + $0x1] sm:$0xff]
        %v632 = vld [vmem:[%s307 + $0x9] sm:$0xff]
        %v633 = vld [vmem:[%s307 + $0x19] sm:$0xff]
        %v634 = vld [vmem:[%s307 + $0x21] sm:$0xff]
        %v635 = vld [vmem:[%s307 + $0x31] sm:$0xff]
        %v636 = vld [vmem:[%s307 + $0x39] sm:$0xff]
        %v637 = vld [vmem:[%s307 + $0x49] sm:$0xff]
        %v638 = vld [vmem:[%s307 + $0x51] sm:$0xff]
        %v639 = vld [vmem:[%s307 + $0x61] sm:$0xff]
        %v640 = vld [vmem:[%s307 + $0x69] sm:$0xff]
        %v641 = vld [vmem:[%s307 + $0x79] sm:$0xff]
        %v642 = vld [vmem:[%s307 + $0x81] sm:$0xff]
        %v643 = vld [vmem:[%s307 + $0x91] sm:$0xff]
        %v644 = vld [vmem:[%s307 + $0x99] sm:$0xff]
        %v645 = vld [vmem:[%s307 + $0xa9] sm:$0xff]
        %v646 = vld [vmem:[%s307 + $0xb1] sm:$0xff]
        %v647 = vld [vmem:[%s307 + $0xc1] sm:$0xff]
        %v648 = vld [vmem:[%s307 + $0xc9] sm:$0xff]
        %v649 = vld [vmem:[%s307 + $0xd9] sm:$0xff]
        %v650 = vld [vmem:[%s307 + $0xe1] sm:$0xff]
        %v651 = vld [vmem:[%s307 + $0xf1] sm:$0xff]
        %v652 = vld [vmem:[%s307 + $0xf9] sm:$0xff]
        %v653 = vld [vmem:[%s307 + $0x109] sm:$0xff]
        %v654 = vld [vmem:[%s307 + $0x111] sm:$0xff]
        %v655 = vld [vmem:[%s307 + $0x121] sm:$0xff]
        %v656 = vld [vmem:[%s307 + $0x129] sm:$0xff]
        %v657 = vld [vmem:[%s307 + $0x139] sm:$0xff]
        %v658 = vld [vmem:[%s307 + $0x141] sm:$0xff]
        %v659 = vld [vmem:[%s307 + $0x151] sm:$0xff]
        %v660 = vld [vmem:[%s307 + $0x159] sm:$0xff]
        %v661 = vld [vmem:[%s307 + $0x169] sm:$0xff]
        %v662 = vld [vmem:[%s307 + $0x171] sm:$0xff]
        %663 = vst [vmem:[#allocation3 + $0x20] sm:$0xff] %v631
        %664 = vst [vmem:[#allocation3 + $0x68] sm:$0xff] %v632
        %665 = vst [vmem:[#allocation3 + $0xb0] sm:$0xff] %v633
        %666 = vst [vmem:[#allocation3 + $0xf8] sm:$0xff] %v634
        %667 = vst [vmem:[#allocation3 + $0x140] sm:$0xff] %v635
        %668 = vst [vmem:[#allocation3 + $0x188] sm:$0xff] %v636
        %669 = vst [vmem:[#allocation3 + $0x1d0] sm:$0xff] %v637
        %670 = vst [vmem:[#allocation3 + $0x218] sm:$0xff] %v638
        %671 = vst [vmem:[#allocation3 + $0x260] sm:$0xff] %v639
        %672 = vst [vmem:[#allocation3 + $0x2a8] sm:$0xff] %v640
        %673 = vst [vmem:[#allocation3 + $0x2f0] sm:$0xff] %v641
        %674 = vst [vmem:[#allocation3 + $0x338] sm:$0xff] %v642
        %675 = vst [vmem:[#allocation3 + $0x380] sm:$0xff] %v643
        %676 = vst [vmem:[#allocation3 + $0x3c8] sm:$0xff] %v644
        %677 = vst [vmem:[#allocation3 + $0x410] sm:$0xff] %v645
        %678 = vst [vmem:[#allocation3 + $0x458] sm:$0xff] %v646
        %679 = vst [vmem:[#allocation3 + $0x4a0] sm:$0xff] %v647
        %680 = vst [vmem:[#allocation3 + $0x4e8] sm:$0xff] %v648
        %681 = vst [vmem:[#allocation3 + $0x530] sm:$0xff] %v649
        %682 = vst [vmem:[#allocation3 + $0x578] sm:$0xff] %v650
        %683 = vst [vmem:[#allocation3 + $0x5c0] sm:$0xff] %v651
        %684 = vst [vmem:[#allocation3 + $0x608] sm:$0xff] %v652
        %685 = vst [vmem:[#allocation3 + $0x650] sm:$0xff] %v653
        %686 = vst [vmem:[#allocation3 + $0x698] sm:$0xff] %v654
        %687 = vst [vmem:[#allocation3 + $0x6e0] sm:$0xff] %v655
        %688 = vst [vmem:[#allocation3 + $0x728] sm:$0xff] %v656
        %689 = vst [vmem:[#allocation3 + $0x770] sm:$0xff] %v657
        %690 = vst [vmem:[#allocation3 + $0x7b8] sm:$0xff] %v658
        %691 = vst [vmem:[#allocation3 + $0x800] sm:$0xff] %v659
        %692 = vst [vmem:[#allocation3 + $0x848] sm:$0xff] %v660
        %693 = vst [vmem:[#allocation3 + $0x890] sm:$0xff] %v661
        %694 = vst [vmem:[#allocation3 + $0x8d8] sm:$0xff] %v662
        %v695 = vld [vmem:[%s307 + $0x2] sm:$0xff]
        %v696 = vld [vmem:[%s307 + $0xa] sm:$0xff]
        %v697 = vld [vmem:[%s307 + $0x1a] sm:$0xff]
        %v698 = vld [vmem:[%s307 + $0x22] sm:$0xff]
        %v699 = vld [vmem:[%s307 + $0x32] sm:$0xff]
        %v700 = vld [vmem:[%s307 + $0x3a] sm:$0xff]
        %v701 = vld [vmem:[%s307 + $0x4a] sm:$0xff]
        %v702 = vld [vmem:[%s307 + $0x52] sm:$0xff]
        %v703 = vld [vmem:[%s307 + $0x62] sm:$0xff]
        %v704 = vld [vmem:[%s307 + $0x6a] sm:$0xff]
        %v705 = vld [vmem:[%s307 + $0x7a] sm:$0xff]
        %v706 = vld [vmem:[%s307 + $0x82] sm:$0xff]
        %v707 = vld [vmem:[%s307 + $0x92] sm:$0xff]
        %v708 = vld [vmem:[%s307 + $0x9a] sm:$0xff]
        %v709 = vld [vmem:[%s307 + $0xaa] sm:$0xff]
        %v710 = vld [vmem:[%s307 + $0xb2] sm:$0xff]
        %v711 = vld [vmem:[%s307 + $0xc2] sm:$0xff]
        %v712 = vld [vmem:[%s307 + $0xca] sm:$0xff]
        %v713 = vld [vmem:[%s307 + $0xda] sm:$0xff]
        %v714 = vld [vmem:[%s307 + $0xe2] sm:$0xff]
        %v715 = vld [vmem:[%s307 + $0xf2] sm:$0xff]
        %v716 = vld [vmem:[%s307 + $0xfa] sm:$0xff]
        %v717 = vld [vmem:[%s307 + $0x10a] sm:$0xff]
        %v718 = vld [vmem:[%s307 + $0x112] sm:$0xff]
        %v719 = vld [vmem:[%s307 + $0x122] sm:$0xff]
        %v720 = vld [vmem:[%s307 + $0x12a] sm:$0xff]
        %v721 = vld [vmem:[%s307 + $0x13a] sm:$0xff]
        %v722 = vld [vmem:[%s307 + $0x142] sm:$0xff]
        %v723 = vld [vmem:[%s307 + $0x152] sm:$0xff]
        %v724 = vld [vmem:[%s307 + $0x15a] sm:$0xff]
        %v725 = vld [vmem:[%s307 + $0x16a] sm:$0xff]
        %v726 = vld [vmem:[%s307 + $0x172] sm:$0xff]
        %727 = vst [vmem:[#allocation3 + $0x28] sm:$0xff] %v695
        %728 = vst [vmem:[#allocation3 + $0x70] sm:$0xff] %v696
        %729 = vst [vmem:[#allocation3 + $0xb8] sm:$0xff] %v697
        %730 = vst [vmem:[#allocation3 + $0x100] sm:$0xff] %v698
        %731 = vst [vmem:[#allocation3 + $0x148] sm:$0xff] %v699
        %732 = vst [vmem:[#allocation3 + $0x190] sm:$0xff] %v700
        %733 = vst [vmem:[#allocation3 + $0x1d8] sm:$0xff] %v701
        %734 = vst [vmem:[#allocation3 + $0x220] sm:$0xff] %v702
        %735 = vst [vmem:[#allocation3 + $0x268] sm:$0xff] %v703
        %736 = vst [vmem:[#allocation3 + $0x2b0] sm:$0xff] %v704
        %737 = vst [vmem:[#allocation3 + $0x2f8] sm:$0xff] %v705
        %738 = vst [vmem:[#allocation3 + $0x340] sm:$0xff] %v706
        %739 = vst [vmem:[#allocation3 + $0x388] sm:$0xff] %v707
        %740 = vst [vmem:[#allocation3 + $0x3d0] sm:$0xff] %v708
        %741 = vst [vmem:[#allocation3 + $0x418] sm:$0xff] %v709
        %742 = vst [vmem:[#allocation3 + $0x460] sm:$0xff] %v710
        %743 = vst [vmem:[#allocation3 + $0x4a8] sm:$0xff] %v711
        %744 = vst [vmem:[#allocation3 + $0x4f0] sm:$0xff] %v712
        %745 = vst [vmem:[#allocation3 + $0x538] sm:$0xff] %v713
        %746 = vst [vmem:[#allocation3 + $0x580] sm:$0xff] %v714
        %747 = vst [vmem:[#allocation3 + $0x5c8] sm:$0xff] %v715
        %748 = vst [vmem:[#allocation3 + $0x610] sm:$0xff] %v716
        %749 = vst [vmem:[#allocation3 + $0x658] sm:$0xff] %v717
        %750 = vst [vmem:[#allocation3 + $0x6a0] sm:$0xff] %v718
        %751 = vst [vmem:[#allocation3 + $0x6e8] sm:$0xff] %v719
        %752 = vst [vmem:[#allocation3 + $0x730] sm:$0xff] %v720
        %753 = vst [vmem:[#allocation3 + $0x778] sm:$0xff] %v721
        %754 = vst [vmem:[#allocation3 + $0x7c0] sm:$0xff] %v722
        %755 = vst [vmem:[#allocation3 + $0x808] sm:$0xff] %v723
        %756 = vst [vmem:[#allocation3 + $0x850] sm:$0xff] %v724
        %757 = vst [vmem:[#allocation3 + $0x898] sm:$0xff] %v725
        %758 = vst [vmem:[#allocation3 + $0x8e0] sm:$0xff] %v726
        %s759 = scalar_lea.vmem [#allocation2], 48
        %v760 = vld [vmem:[%s759] sm:$0xff]
        %v761 = vld [vmem:[%s759 + $0x8] sm:$0xff]
        %v762 = vld [vmem:[%s759 + $0x18] sm:$0xff]
        %v763 = vld [vmem:[%s759 + $0x20] sm:$0xff]
        %v764 = vld [vmem:[%s759 + $0x30] sm:$0xff]
        %v765 = vld [vmem:[%s759 + $0x38] sm:$0xff]
        %v766 = vld [vmem:[%s759 + $0x48] sm:$0xff]
        %v767 = vld [vmem:[%s759 + $0x50] sm:$0xff]
        %v768 = vld [vmem:[%s759 + $0x60] sm:$0xff]
        %v769 = vld [vmem:[%s759 + $0x68] sm:$0xff]
        %v770 = vld [vmem:[%s759 + $0x78] sm:$0xff]
        %v771 = vld [vmem:[%s759 + $0x80] sm:$0xff]
        %v772 = vld [vmem:[%s759 + $0x90] sm:$0xff]
        %v773 = vld [vmem:[%s759 + $0x98] sm:$0xff]
        %v774 = vld [vmem:[%s759 + $0xa8] sm:$0xff]
        %v775 = vld [vmem:[%s759 + $0xb0] sm:$0xff]
        %v776 = vld [vmem:[%s759 + $0xc0] sm:$0xff]
        %v777 = vld [vmem:[%s759 + $0xc8] sm:$0xff]
        %v778 = vld [vmem:[%s759 + $0xd8] sm:$0xff]
        %v779 = vld [vmem:[%s759 + $0xe0] sm:$0xff]
        %v780 = vld [vmem:[%s759 + $0xf0] sm:$0xff]
        %v781 = vld [vmem:[%s759 + $0xf8] sm:$0xff]
        %v782 = vld [vmem:[%s759 + $0x108] sm:$0xff]
        %v783 = vld [vmem:[%s759 + $0x110] sm:$0xff]
        %v784 = vld [vmem:[%s759 + $0x120] sm:$0xff]
        %v785 = vld [vmem:[%s759 + $0x128] sm:$0xff]
        %v786 = vld [vmem:[%s759 + $0x138] sm:$0xff]
        %v787 = vld [vmem:[%s759 + $0x140] sm:$0xff]
        %v788 = vld [vmem:[%s759 + $0x150] sm:$0xff]
        %v789 = vld [vmem:[%s759 + $0x158] sm:$0xff]
        %v790 = vld [vmem:[%s759 + $0x168] sm:$0xff]
        %v791 = vld [vmem:[%s759 + $0x170] sm:$0xff]
        %792 = vst [vmem:[#allocation3 + $0x30] sm:$0xff] %v760
        %793 = vst [vmem:[#allocation3 + $0x78] sm:$0xff] %v761
        %794 = vst [vmem:[#allocation3 + $0xc0] sm:$0xff] %v762
        %795 = vst [vmem:[#allocation3 + $0x108] sm:$0xff] %v763
        %796 = vst [vmem:[#allocation3 + $0x150] sm:$0xff] %v764
        %797 = vst [vmem:[#allocation3 + $0x198] sm:$0xff] %v765
        %798 = vst [vmem:[#allocation3 + $0x1e0] sm:$0xff] %v766
        %799 = vst [vmem:[#allocation3 + $0x228] sm:$0xff] %v767
        %800 = vst [vmem:[#allocation3 + $0x270] sm:$0xff] %v768
        %801 = vst [vmem:[#allocation3 + $0x2b8] sm:$0xff] %v769
        %802 = vst [vmem:[#allocation3 + $0x300] sm:$0xff] %v770
        %803 = vst [vmem:[#allocation3 + $0x348] sm:$0xff] %v771
        %804 = vst [vmem:[#allocation3 + $0x390] sm:$0xff] %v772
        %805 = vst [vmem:[#allocation3 + $0x3d8] sm:$0xff] %v773
        %806 = vst [vmem:[#allocation3 + $0x420] sm:$0xff] %v774
        %807 = vst [vmem:[#allocation3 + $0x468] sm:$0xff] %v775
        %808 = vst [vmem:[#allocation3 + $0x4b0] sm:$0xff] %v776
        %809 = vst [vmem:[#allocation3 + $0x4f8] sm:$0xff] %v777
        %810 = vst [vmem:[#allocation3 + $0x540] sm:$0xff] %v778
        %811 = vst [vmem:[#allocation3 + $0x588] sm:$0xff] %v779
        %812 = vst [vmem:[#allocation3 + $0x5d0] sm:$0xff] %v780
        %813 = vst [vmem:[#allocation3 + $0x618] sm:$0xff] %v781
        %814 = vst [vmem:[#allocation3 + $0x660] sm:$0xff] %v782
        %815 = vst [vmem:[#allocation3 + $0x6a8] sm:$0xff] %v783
        %816 = vst [vmem:[#allocation3 + $0x6f0] sm:$0xff] %v784
        %817 = vst [vmem:[#allocation3 + $0x738] sm:$0xff] %v785
        %818 = vst [vmem:[#allocation3 + $0x780] sm:$0xff] %v786
        %819 = vst [vmem:[#allocation3 + $0x7c8] sm:$0xff] %v787
        %820 = vst [vmem:[#allocation3 + $0x810] sm:$0xff] %v788
        %821 = vst [vmem:[#allocation3 + $0x858] sm:$0xff] %v789
        %822 = vst [vmem:[#allocation3 + $0x8a0] sm:$0xff] %v790
        %823 = vst [vmem:[#allocation3 + $0x8e8] sm:$0xff] %v791
        %v824 = vld [vmem:[%s759 + $0x1] sm:$0xff]
        %v825 = vld [vmem:[%s759 + $0x9] sm:$0xff]
        %v826 = vld [vmem:[%s759 + $0x19] sm:$0xff]
        %v827 = vld [vmem:[%s759 + $0x21] sm:$0xff]
        %v828 = vld [vmem:[%s759 + $0x31] sm:$0xff]
        %v829 = vld [vmem:[%s759 + $0x39] sm:$0xff]
        %v830 = vld [vmem:[%s759 + $0x49] sm:$0xff]
        %v831 = vld [vmem:[%s759 + $0x51] sm:$0xff]
        %v832 = vld [vmem:[%s759 + $0x61] sm:$0xff]
        %v833 = vld [vmem:[%s759 + $0x69] sm:$0xff]
        %v834 = vld [vmem:[%s759 + $0x79] sm:$0xff]
        %v835 = vld [vmem:[%s759 + $0x81] sm:$0xff]
        %v836 = vld [vmem:[%s759 + $0x91] sm:$0xff]
        %v837 = vld [vmem:[%s759 + $0x99] sm:$0xff]
        %v838 = vld [vmem:[%s759 + $0xa9] sm:$0xff]
        %v839 = vld [vmem:[%s759 + $0xb1] sm:$0xff]
        %v840 = vld [vmem:[%s759 + $0xc1] sm:$0xff]
        %v841 = vld [vmem:[%s759 + $0xc9] sm:$0xff]
        %v842 = vld [vmem:[%s759 + $0xd9] sm:$0xff]
        %v843 = vld [vmem:[%s759 + $0xe1] sm:$0xff]
        %v844 = vld [vmem:[%s759 + $0xf1] sm:$0xff]
        %v845 = vld [vmem:[%s759 + $0xf9] sm:$0xff]
        %v846 = vld [vmem:[%s759 + $0x109] sm:$0xff]
        %v847 = vld [vmem:[%s759 + $0x111] sm:$0xff]
        %v848 = vld [vmem:[%s759 + $0x121] sm:$0xff]
        %v849 = vld [vmem:[%s759 + $0x129] sm:$0xff]
        %v850 = vld [vmem:[%s759 + $0x139] sm:$0xff]
        %v851 = vld [vmem:[%s759 + $0x141] sm:$0xff]
        %v852 = vld [vmem:[%s759 + $0x151] sm:$0xff]
        %v853 = vld [vmem:[%s759 + $0x159] sm:$0xff]
        %v854 = vld [vmem:[%s759 + $0x169] sm:$0xff]
        %v855 = vld [vmem:[%s759 + $0x171] sm:$0xff]
        %856 = vst [vmem:[#allocation3 + $0x38] sm:$0xff] %v824
        %857 = vst [vmem:[#allocation3 + $0x80] sm:$0xff] %v825
        %858 = vst [vmem:[#allocation3 + $0xc8] sm:$0xff] %v826
        %859 = vst [vmem:[#allocation3 + $0x110] sm:$0xff] %v827
        %860 = vst [vmem:[#allocation3 + $0x158] sm:$0xff] %v828
        %861 = vst [vmem:[#allocation3 + $0x1a0] sm:$0xff] %v829
        %862 = vst [vmem:[#allocation3 + $0x1e8] sm:$0xff] %v830
        %863 = vst [vmem:[#allocation3 + $0x230] sm:$0xff] %v831
        %864 = vst [vmem:[#allocation3 + $0x278] sm:$0xff] %v832
        %865 = vst [vmem:[#allocation3 + $0x2c0] sm:$0xff] %v833
        %866 = vst [vmem:[#allocation3 + $0x308] sm:$0xff] %v834
        %867 = vst [vmem:[#allocation3 + $0x350] sm:$0xff] %v835
        %868 = vst [vmem:[#allocation3 + $0x398] sm:$0xff] %v836
        %869 = vst [vmem:[#allocation3 + $0x3e0] sm:$0xff] %v837
        %870 = vst [vmem:[#allocation3 + $0x428] sm:$0xff] %v838
        %871 = vst [vmem:[#allocation3 + $0x470] sm:$0xff] %v839
        %872 = vst [vmem:[#allocation3 + $0x4b8] sm:$0xff] %v840
        %873 = vst [vmem:[#allocation3 + $0x500] sm:$0xff] %v841
        %874 = vst [vmem:[#allocation3 + $0x548] sm:$0xff] %v842
        %875 = vst [vmem:[#allocation3 + $0x590] sm:$0xff] %v843
        %876 = vst [vmem:[#allocation3 + $0x5d8] sm:$0xff] %v844
        %877 = vst [vmem:[#allocation3 + $0x620] sm:$0xff] %v845
        %878 = vst [vmem:[#allocation3 + $0x668] sm:$0xff] %v846
        %879 = vst [vmem:[#allocation3 + $0x6b0] sm:$0xff] %v847
        %880 = vst [vmem:[#allocation3 + $0x6f8] sm:$0xff] %v848
        %881 = vst [vmem:[#allocation3 + $0x740] sm:$0xff] %v849
        %882 = vst [vmem:[#allocation3 + $0x788] sm:$0xff] %v850
        %883 = vst [vmem:[#allocation3 + $0x7d0] sm:$0xff] %v851
        %884 = vst [vmem:[#allocation3 + $0x818] sm:$0xff] %v852
        %885 = vst [vmem:[#allocation3 + $0x860] sm:$0xff] %v853
        %886 = vst [vmem:[#allocation3 + $0x8a8] sm:$0xff] %v854
        %887 = vst [vmem:[#allocation3 + $0x8f0] sm:$0xff] %v855
        %v888 = vld [vmem:[%s759 + $0x2] sm:$0xff]
        %v889 = vld [vmem:[%s759 + $0xa] sm:$0xff]
        %v890 = vld [vmem:[%s759 + $0x1a] sm:$0xff]
        %v891 = vld [vmem:[%s759 + $0x22] sm:$0xff]
        %v892 = vld [vmem:[%s759 + $0x32] sm:$0xff]
        %v893 = vld [vmem:[%s759 + $0x3a] sm:$0xff]
        %v894 = vld [vmem:[%s759 + $0x4a] sm:$0xff]
        %v895 = vld [vmem:[%s759 + $0x52] sm:$0xff]
        %v896 = vld [vmem:[%s759 + $0x62] sm:$0xff]
        %v897 = vld [vmem:[%s759 + $0x6a] sm:$0xff]
        %v898 = vld [vmem:[%s759 + $0x7a] sm:$0xff]
        %v899 = vld [vmem:[%s759 + $0x82] sm:$0xff]
        %v900 = vld [vmem:[%s759 + $0x92] sm:$0xff]
        %v901 = vld [vmem:[%s759 + $0x9a] sm:$0xff]
        %v902 = vld [vmem:[%s759 + $0xaa] sm:$0xff]
        %v903 = vld [vmem:[%s759 + $0xb2] sm:$0xff]
        %v904 = vld [vmem:[%s759 + $0xc2] sm:$0xff]
        %v905 = vld [vmem:[%s759 + $0xca] sm:$0xff]
        %v906 = vld [vmem:[%s759 + $0xda] sm:$0xff]
        %v907 = vld [vmem:[%s759 + $0xe2] sm:$0xff]
        %v908 = vld [vmem:[%s759 + $0xf2] sm:$0xff]
        %v909 = vld [vmem:[%s759 + $0xfa] sm:$0xff]
        %v910 = vld [vmem:[%s759 + $0x10a] sm:$0xff]
        %v911 = vld [vmem:[%s759 + $0x112] sm:$0xff]
        %v912 = vld [vmem:[%s759 + $0x122] sm:$0xff]
        %v913 = vld [vmem:[%s759 + $0x12a] sm:$0xff]
        %v914 = vld [vmem:[%s759 + $0x13a] sm:$0xff]
        %v915 = vld [vmem:[%s759 + $0x142] sm:$0xff]
        %v916 = vld [vmem:[%s759 + $0x152] sm:$0xff]
        %v917 = vld [vmem:[%s759 + $0x15a] sm:$0xff]
        %v918 = vld [vmem:[%s759 + $0x16a] sm:$0xff]
        %v919 = vld [vmem:[%s759 + $0x172] sm:$0xff]
        %920 = vst [vmem:[#allocation3 + $0x40] sm:$0xff] %v888
        %921 = vst [vmem:[#allocation3 + $0x88] sm:$0xff] %v889
        %922 = vst [vmem:[#allocation3 + $0xd0] sm:$0xff] %v890
        %923 = vst [vmem:[#allocation3 + $0x118] sm:$0xff] %v891
        %924 = vst [vmem:[#allocation3 + $0x160] sm:$0xff] %v892
        %925 = vst [vmem:[#allocation3 + $0x1a8] sm:$0xff] %v893
        %926 = vst [vmem:[#allocation3 + $0x1f0] sm:$0xff] %v894
        %927 = vst [vmem:[#allocation3 + $0x238] sm:$0xff] %v895
        %928 = vst [vmem:[#allocation3 + $0x280] sm:$0xff] %v896
        %929 = vst [vmem:[#allocation3 + $0x2c8] sm:$0xff] %v897
        %930 = vst [vmem:[#allocation3 + $0x310] sm:$0xff] %v898
        %931 = vst [vmem:[#allocation3 + $0x358] sm:$0xff] %v899
        %932 = vst [vmem:[#allocation3 + $0x3a0] sm:$0xff] %v900
        %933 = vst [vmem:[#allocation3 + $0x3e8] sm:$0xff] %v901
        %934 = vst [vmem:[#allocation3 + $0x430] sm:$0xff] %v902
        %935 = vst [vmem:[#allocation3 + $0x478] sm:$0xff] %v903
        %936 = vst [vmem:[#allocation3 + $0x4c0] sm:$0xff] %v904
        %937 = vst [vmem:[#allocation3 + $0x508] sm:$0xff] %v905
        %938 = vst [vmem:[#allocation3 + $0x550] sm:$0xff] %v906
        %939 = vst [vmem:[#allocation3 + $0x598] sm:$0xff] %v907
        %940 = vst [vmem:[#allocation3 + $0x5e0] sm:$0xff] %v908
        %941 = vst [vmem:[#allocation3 + $0x628] sm:$0xff] %v909
        %942 = vst [vmem:[#allocation3 + $0x670] sm:$0xff] %v910
        %943 = vst [vmem:[#allocation3 + $0x6b8] sm:$0xff] %v911
        %944 = vst [vmem:[#allocation3 + $0x700] sm:$0xff] %v912
        %945 = vst [vmem:[#allocation3 + $0x748] sm:$0xff] %v913
        %946 = vst [vmem:[#allocation3 + $0x790] sm:$0xff] %v914
        %947 = vst [vmem:[#allocation3 + $0x7d8] sm:$0xff] %v915
        %948 = vst [vmem:[#allocation3 + $0x820] sm:$0xff] %v916
        %949 = vst [vmem:[#allocation3 + $0x868] sm:$0xff] %v917
        %950 = vst [vmem:[#allocation3 + $0x8b0] sm:$0xff] %v918
        %951 = vst [vmem:[#allocation3 + $0x8f8] sm:$0xff] %v919
        %v952 = vld [vmem:[#allocation3] sm:$0xff]
        %v953 = vld [vmem:[#allocation3 + $0x8] sm:$0xff]
        %v954 = vld [vmem:[#allocation3 + $0x10] sm:$0xff]
        %v955 = vld [vmem:[#allocation3 + $0x18] sm:$0xff]
        %v956 = vld [vmem:[#allocation3 + $0x20] sm:$0xff]
        %v957 = vld [vmem:[#allocation3 + $0x28] sm:$0xff]
        %v958 = vld [vmem:[#allocation3 + $0x30] sm:$0xff]
        %v959 = vld [vmem:[#allocation3 + $0x38] sm:$0xff]
        %v960 = vld [vmem:[#allocation3 + $0x40] sm:$0xff]
        %v961 = vld [vmem:[#allocation3 + $0x48] sm:$0xff]
        %v962 = vld [vmem:[#allocation3 + $0x50] sm:$0xff]
        %v963 = vld [vmem:[#allocation3 + $0x58] sm:$0xff]
        %v964 = vld [vmem:[#allocation3 + $0x60] sm:$0xff]
        %v965 = vld [vmem:[#allocation3 + $0x68] sm:$0xff]
        %v966 = vld [vmem:[#allocation3 + $0x70] sm:$0xff]
        %v967 = vld [vmem:[#allocation3 + $0x78] sm:$0xff]
        %v968 = vld [vmem:[#allocation3 + $0x80] sm:$0xff]
        %v969 = vld [vmem:[#allocation3 + $0x88] sm:$0xff]
        %v970 = vld [vmem:[#allocation3 + $0x90] sm:$0xff]
        %v971 = vld [vmem:[#allocation3 + $0x98] sm:$0xff]
        %v972 = vld [vmem:[#allocation3 + $0xa0] sm:$0xff]
        %v973 = vld [vmem:[#allocation3 + $0xa8] sm:$0xff]
        %v974 = vld [vmem:[#allocation3 + $0xb0] sm:$0xff]
        %v975 = vld [vmem:[#allocation3 + $0xb8] sm:$0xff]
        %v976 = vld [vmem:[#allocation3 + $0xc0] sm:$0xff]
        %v977 = vld [vmem:[#allocation3 + $0xc8] sm:$0xff]
        %v978 = vld [vmem:[#allocation3 + $0xd0] sm:$0xff]
        %v979 = vld [vmem:[#allocation3 + $0xd8] sm:$0xff]
        %v980 = vld [vmem:[#allocation3 + $0xe0] sm:$0xff]
        %v981 = vld [vmem:[#allocation3 + $0xe8] sm:$0xff]
        %v982 = vld [vmem:[#allocation3 + $0xf0] sm:$0xff]
        %v983 = vld [vmem:[#allocation3 + $0xf8] sm:$0xff]
        %v984 = vld [vmem:[#allocation3 + $0x100] sm:$0xff]
        %v985 = vld [vmem:[#allocation3 + $0x108] sm:$0xff]
        %v986 = vld [vmem:[#allocation3 + $0x110] sm:$0xff]
        %v987 = vld [vmem:[#allocation3 + $0x118] sm:$0xff]
        %v988 = vld [vmem:[#allocation3 + $0x120] sm:$0xff]
        %v989 = vld [vmem:[#allocation3 + $0x128] sm:$0xff]
        %v990 = vld [vmem:[#allocation3 + $0x130] sm:$0xff]
        %v991 = vld [vmem:[#allocation3 + $0x138] sm:$0xff]
        %v992 = vld [vmem:[#allocation3 + $0x140] sm:$0xff]
        %v993 = vld [vmem:[#allocation3 + $0x148] sm:$0xff]
        %v994 = vld [vmem:[#allocation3 + $0x150] sm:$0xff]
        %v995 = vld [vmem:[#allocation3 + $0x158] sm:$0xff]
        %v996 = vld [vmem:[#allocation3 + $0x160] sm:$0xff]
        %v997 = vld [vmem:[#allocation3 + $0x168] sm:$0xff]
        %v998 = vld [vmem:[#allocation3 + $0x170] sm:$0xff]
        %v999 = vld [vmem:[#allocation3 + $0x178] sm:$0xff]
        %v1000 = vld [vmem:[#allocation3 + $0x180] sm:$0xff]
        %v1001 = vld [vmem:[#allocation3 + $0x188] sm:$0xff]
        %v1002 = vld [vmem:[#allocation3 + $0x190] sm:$0xff]
        %v1003 = vld [vmem:[#allocation3 + $0x198] sm:$0xff]
        %v1004 = vld [vmem:[#allocation3 + $0x1a0] sm:$0xff]
        %v1005 = vld [vmem:[#allocation3 + $0x1a8] sm:$0xff]
        %v1006 = vld [vmem:[#allocation3 + $0x1b0] sm:$0xff]
        %v1007 = vld [vmem:[#allocation3 + $0x1b8] sm:$0xff]
        %v1008 = vld [vmem:[#allocation3 + $0x1c0] sm:$0xff]
        %v1009 = vld [vmem:[#allocation3 + $0x1c8] sm:$0xff]
        %v1010 = vld [vmem:[#allocation3 + $0x1d0] sm:$0xff]
        %v1011 = vld [vmem:[#allocation3 + $0x1d8] sm:$0xff]
        %v1012 = vld [vmem:[#allocation3 + $0x1e0] sm:$0xff]
        %v1013 = vld [vmem:[#allocation3 + $0x1e8] sm:$0xff]
        %v1014 = vld [vmem:[#allocation3 + $0x1f0] sm:$0xff]
        %v1015 = vld [vmem:[#allocation3 + $0x1f8] sm:$0xff]
        %v1016 = vld [vmem:[#allocation3 + $0x200] sm:$0xff]
        %v1017 = vld [vmem:[#allocation3 + $0x208] sm:$0xff]
        %v1018 = vld [vmem:[#allocation3 + $0x210] sm:$0xff]
        %v1019 = vld [vmem:[#allocation3 + $0x218] sm:$0xff]
        %v1020 = vld [vmem:[#allocation3 + $0x220] sm:$0xff]
        %v1021 = vld [vmem:[#allocation3 + $0x228] sm:$0xff]
        %v1022 = vld [vmem:[#allocation3 + $0x230] sm:$0xff]
        %v1023 = vld [vmem:[#allocation3 + $0x238] sm:$0xff]
        %v1024 = vld [vmem:[#allocation3 + $0x240] sm:$0xff]
        %v1025 = vld [vmem:[#allocation3 + $0x248] sm:$0xff]
        %v1026 = vld [vmem:[#allocation3 + $0x250] sm:$0xff]
        %v1027 = vld [vmem:[#allocation3 + $0x258] sm:$0xff]
        %v1028 = vld [vmem:[#allocation3 + $0x260] sm:$0xff]
        %v1029 = vld [vmem:[#allocation3 + $0x268] sm:$0xff]
        %v1030 = vld [vmem:[#allocation3 + $0x270] sm:$0xff]
        %v1031 = vld [vmem:[#allocation3 + $0x278] sm:$0xff]
        %v1032 = vld [vmem:[#allocation3 + $0x280] sm:$0xff]
        %v1033 = vld [vmem:[#allocation3 + $0x288] sm:$0xff]
        %v1034 = vld [vmem:[#allocation3 + $0x290] sm:$0xff]
        %v1035 = vld [vmem:[#allocation3 + $0x298] sm:$0xff]
        %v1036 = vld [vmem:[#allocation3 + $0x2a0] sm:$0xff]
        %v1037 = vld [vmem:[#allocation3 + $0x2a8] sm:$0xff]
        %v1038 = vld [vmem:[#allocation3 + $0x2b0] sm:$0xff]
        %v1039 = vld [vmem:[#allocation3 + $0x2b8] sm:$0xff]
        %v1040 = vld [vmem:[#allocation3 + $0x2c0] sm:$0xff]
        %v1041 = vld [vmem:[#allocation3 + $0x2c8] sm:$0xff]
        %v1042 = vld [vmem:[#allocation3 + $0x2d0] sm:$0xff]
        %v1043 = vld [vmem:[#allocation3 + $0x2d8] sm:$0xff]
        %v1044 = vld [vmem:[#allocation3 + $0x2e0] sm:$0xff]
        %v1045 = vld [vmem:[#allocation3 + $0x2e8] sm:$0xff]
        %v1046 = vld [vmem:[#allocation3 + $0x2f0] sm:$0xff]
        %v1047 = vld [vmem:[#allocation3 + $0x2f8] sm:$0xff]
        %v1048 = vld [vmem:[#allocation3 + $0x300] sm:$0xff]
        %v1049 = vld [vmem:[#allocation3 + $0x308] sm:$0xff]
        %v1050 = vld [vmem:[#allocation3 + $0x310] sm:$0xff]
        %v1051 = vld [vmem:[#allocation3 + $0x318] sm:$0xff]
        %v1052 = vld [vmem:[#allocation3 + $0x320] sm:$0xff]
        %v1053 = vld [vmem:[#allocation3 + $0x328] sm:$0xff]
        %v1054 = vld [vmem:[#allocation3 + $0x330] sm:$0xff]
        %v1055 = vld [vmem:[#allocation3 + $0x338] sm:$0xff]
        %v1056 = vld [vmem:[#allocation3 + $0x340] sm:$0xff]
        %v1057 = vld [vmem:[#allocation3 + $0x348] sm:$0xff]
        %v1058 = vld [vmem:[#allocation3 + $0x350] sm:$0xff]
        %v1059 = vld [vmem:[#allocation3 + $0x358] sm:$0xff]
        %v1060 = vld [vmem:[#allocation3 + $0x360] sm:$0xff]
        %v1061 = vld [vmem:[#allocation3 + $0x368] sm:$0xff]
        %v1062 = vld [vmem:[#allocation3 + $0x370] sm:$0xff]
        %v1063 = vld [vmem:[#allocation3 + $0x378] sm:$0xff]
        %v1064 = vld [vmem:[#allocation3 + $0x380] sm:$0xff]
        %v1065 = vld [vmem:[#allocation3 + $0x388] sm:$0xff]
        %v1066 = vld [vmem:[#allocation3 + $0x390] sm:$0xff]
        %v1067 = vld [vmem:[#allocation3 + $0x398] sm:$0xff]
        %v1068 = vld [vmem:[#allocation3 + $0x3a0] sm:$0xff]
        %v1069 = vld [vmem:[#allocation3 + $0x3a8] sm:$0xff]
        %v1070 = vld [vmem:[#allocation3 + $0x3b0] sm:$0xff]
        %v1071 = vld [vmem:[#allocation3 + $0x3b8] sm:$0xff]
        %v1072 = vld [vmem:[#allocation3 + $0x3c0] sm:$0xff]
        %v1073 = vld [vmem:[#allocation3 + $0x3c8] sm:$0xff]
        %v1074 = vld [vmem:[#allocation3 + $0x3d0] sm:$0xff]
        %v1075 = vld [vmem:[#allocation3 + $0x3d8] sm:$0xff]
        %v1076 = vld [vmem:[#allocation3 + $0x3e0] sm:$0xff]
        %v1077 = vld [vmem:[#allocation3 + $0x3e8] sm:$0xff]
        %v1078 = vld [vmem:[#allocation3 + $0x3f0] sm:$0xff]
        %v1079 = vld [vmem:[#allocation3 + $0x3f8] sm:$0xff]
        %v1080 = vld [vmem:[#allocation3 + $0x400] sm:$0xff]
        %v1081 = vld [vmem:[#allocation3 + $0x408] sm:$0xff]
        %v1082 = vld [vmem:[#allocation3 + $0x410] sm:$0xff]
        %v1083 = vld [vmem:[#allocation3 + $0x418] sm:$0xff]
        %v1084 = vld [vmem:[#allocation3 + $0x420] sm:$0xff]
        %v1085 = vld [vmem:[#allocation3 + $0x428] sm:$0xff]
        %v1086 = vld [vmem:[#allocation3 + $0x430] sm:$0xff]
        %v1087 = vld [vmem:[#allocation3 + $0x438] sm:$0xff]
        %v1088 = vld [vmem:[#allocation3 + $0x440] sm:$0xff]
        %v1089 = vld [vmem:[#allocation3 + $0x448] sm:$0xff]
        %v1090 = vld [vmem:[#allocation3 + $0x450] sm:$0xff]
        %v1091 = vld [vmem:[#allocation3 + $0x458] sm:$0xff]
        %v1092 = vld [vmem:[#allocation3 + $0x460] sm:$0xff]
        %v1093 = vld [vmem:[#allocation3 + $0x468] sm:$0xff]
        %v1094 = vld [vmem:[#allocation3 + $0x470] sm:$0xff]
        %v1095 = vld [vmem:[#allocation3 + $0x478] sm:$0xff]
        %v1096 = vld [vmem:[#allocation3 + $0x480] sm:$0xff]
        %v1097 = vld [vmem:[#allocation3 + $0x488] sm:$0xff]
        %v1098 = vld [vmem:[#allocation3 + $0x490] sm:$0xff]
        %v1099 = vld [vmem:[#allocation3 + $0x498] sm:$0xff]
        %v1100 = vld [vmem:[#allocation3 + $0x4a0] sm:$0xff]
        %v1101 = vld [vmem:[#allocation3 + $0x4a8] sm:$0xff]
        %v1102 = vld [vmem:[#allocation3 + $0x4b0] sm:$0xff]
        %v1103 = vld [vmem:[#allocation3 + $0x4b8] sm:$0xff]
        %v1104 = vld [vmem:[#allocation3 + $0x4c0] sm:$0xff]
        %v1105 = vld [vmem:[#allocation3 + $0x4c8] sm:$0xff]
        %v1106 = vld [vmem:[#allocation3 + $0x4d0] sm:$0xff]
        %v1107 = vld [vmem:[#allocation3 + $0x4d8] sm:$0xff]
        %v1108 = vld [vmem:[#allocation3 + $0x4e0] sm:$0xff]
        %v1109 = vld [vmem:[#allocation3 + $0x4e8] sm:$0xff]
        %v1110 = vld [vmem:[#allocation3 + $0x4f0] sm:$0xff]
        %v1111 = vld [vmem:[#allocation3 + $0x4f8] sm:$0xff]
        %v1112 = vld [vmem:[#allocation3 + $0x500] sm:$0xff]
        %v1113 = vld [vmem:[#allocation3 + $0x508] sm:$0xff]
        %v1114 = vld [vmem:[#allocation3 + $0x510] sm:$0xff]
        %v1115 = vld [vmem:[#allocation3 + $0x518] sm:$0xff]
        %v1116 = vld [vmem:[#allocation3 + $0x520] sm:$0xff]
        %v1117 = vld [vmem:[#allocation3 + $0x528] sm:$0xff]
        %v1118 = vld [vmem:[#allocation3 + $0x530] sm:$0xff]
        %v1119 = vld [vmem:[#allocation3 + $0x538] sm:$0xff]
        %v1120 = vld [vmem:[#allocation3 + $0x540] sm:$0xff]
        %v1121 = vld [vmem:[#allocation3 + $0x548] sm:$0xff]
        %v1122 = vld [vmem:[#allocation3 + $0x550] sm:$0xff]
        %v1123 = vld [vmem:[#allocation3 + $0x558] sm:$0xff]
        %v1124 = vld [vmem:[#allocation3 + $0x560] sm:$0xff]
        %v1125 = vld [vmem:[#allocation3 + $0x568] sm:$0xff]
        %v1126 = vld [vmem:[#allocation3 + $0x570] sm:$0xff]
        %v1127 = vld [vmem:[#allocation3 + $0x578] sm:$0xff]
        %v1128 = vld [vmem:[#allocation3 + $0x580] sm:$0xff]
        %v1129 = vld [vmem:[#allocation3 + $0x588] sm:$0xff]
        %v1130 = vld [vmem:[#allocation3 + $0x590] sm:$0xff]
        %v1131 = vld [vmem:[#allocation3 + $0x598] sm:$0xff]
        %v1132 = vld [vmem:[#allocation3 + $0x5a0] sm:$0xff]
        %v1133 = vld [vmem:[#allocation3 + $0x5a8] sm:$0xff]
        %v1134 = vld [vmem:[#allocation3 + $0x5b0] sm:$0xff]
        %v1135 = vld [vmem:[#allocation3 + $0x5b8] sm:$0xff]
        %v1136 = vld [vmem:[#allocation3 + $0x5c0] sm:$0xff]
        %v1137 = vld [vmem:[#allocation3 + $0x5c8] sm:$0xff]
        %v1138 = vld [vmem:[#allocation3 + $0x5d0] sm:$0xff]
        %v1139 = vld [vmem:[#allocation3 + $0x5d8] sm:$0xff]
        %v1140 = vld [vmem:[#allocation3 + $0x5e0] sm:$0xff]
        %v1141 = vld [vmem:[#allocation3 + $0x5e8] sm:$0xff]
        %v1142 = vld [vmem:[#allocation3 + $0x5f0] sm:$0xff]
        %v1143 = vld [vmem:[#allocation3 + $0x5f8] sm:$0xff]
        %v1144 = vld [vmem:[#allocation3 + $0x600] sm:$0xff]
        %v1145 = vld [vmem:[#allocation3 + $0x608] sm:$0xff]
        %v1146 = vld [vmem:[#allocation3 + $0x610] sm:$0xff]
        %v1147 = vld [vmem:[#allocation3 + $0x618] sm:$0xff]
        %v1148 = vld [vmem:[#allocation3 + $0x620] sm:$0xff]
        %v1149 = vld [vmem:[#allocation3 + $0x628] sm:$0xff]
        %v1150 = vld [vmem:[#allocation3 + $0x630] sm:$0xff]
        %v1151 = vld [vmem:[#allocation3 + $0x638] sm:$0xff]
        %v1152 = vld [vmem:[#allocation3 + $0x640] sm:$0xff]
        %v1153 = vld [vmem:[#allocation3 + $0x648] sm:$0xff]
        %v1154 = vld [vmem:[#allocation3 + $0x650] sm:$0xff]
        %v1155 = vld [vmem:[#allocation3 + $0x658] sm:$0xff]
        %v1156 = vld [vmem:[#allocation3 + $0x660] sm:$0xff]
        %v1157 = vld [vmem:[#allocation3 + $0x668] sm:$0xff]
        %v1158 = vld [vmem:[#allocation3 + $0x670] sm:$0xff]
        %v1159 = vld [vmem:[#allocation3 + $0x678] sm:$0xff]
        %v1160 = vld [vmem:[#allocation3 + $0x680] sm:$0xff]
        %v1161 = vld [vmem:[#allocation3 + $0x688] sm:$0xff]
        %v1162 = vld [vmem:[#allocation3 + $0x690] sm:$0xff]
        %v1163 = vld [vmem:[#allocation3 + $0x698] sm:$0xff]
        %v1164 = vld [vmem:[#allocation3 + $0x6a0] sm:$0xff]
        %v1165 = vld [vmem:[#allocation3 + $0x6a8] sm:$0xff]
        %v1166 = vld [vmem:[#allocation3 + $0x6b0] sm:$0xff]
        %v1167 = vld [vmem:[#allocation3 + $0x6b8] sm:$0xff]
        %v1168 = vld [vmem:[#allocation3 + $0x6c0] sm:$0xff]
        %v1169 = vld [vmem:[#allocation3 + $0x6c8] sm:$0xff]
        %v1170 = vld [vmem:[#allocation3 + $0x6d0] sm:$0xff]
        %v1171 = vld [vmem:[#allocation3 + $0x6d8] sm:$0xff]
        %v1172 = vld [vmem:[#allocation3 + $0x6e0] sm:$0xff]
        %v1173 = vld [vmem:[#allocation3 + $0x6e8] sm:$0xff]
        %v1174 = vld [vmem:[#allocation3 + $0x6f0] sm:$0xff]
        %v1175 = vld [vmem:[#allocation3 + $0x6f8] sm:$0xff]
        %v1176 = vld [vmem:[#allocation3 + $0x700] sm:$0xff]
        %v1177 = vld [vmem:[#allocation3 + $0x708] sm:$0xff]
        %v1178 = vld [vmem:[#allocation3 + $0x710] sm:$0xff]
        %v1179 = vld [vmem:[#allocation3 + $0x718] sm:$0xff]
        %v1180 = vld [vmem:[#allocation3 + $0x720] sm:$0xff]
        %v1181 = vld [vmem:[#allocation3 + $0x728] sm:$0xff]
        %v1182 = vld [vmem:[#allocation3 + $0x730] sm:$0xff]
        %v1183 = vld [vmem:[#allocation3 + $0x738] sm:$0xff]
        %v1184 = vld [vmem:[#allocation3 + $0x740] sm:$0xff]
        %v1185 = vld [vmem:[#allocation3 + $0x748] sm:$0xff]
        %v1186 = vld [vmem:[#allocation3 + $0x750] sm:$0xff]
        %v1187 = vld [vmem:[#allocation3 + $0x758] sm:$0xff]
        %v1188 = vld [vmem:[#allocation3 + $0x760] sm:$0xff]
        %v1189 = vld [vmem:[#allocation3 + $0x768] sm:$0xff]
        %v1190 = vld [vmem:[#allocation3 + $0x770] sm:$0xff]
        %v1191 = vld [vmem:[#allocation3 + $0x778] sm:$0xff]
        %v1192 = vld [vmem:[#allocation3 + $0x780] sm:$0xff]
        %v1193 = vld [vmem:[#allocation3 + $0x788] sm:$0xff]
        %v1194 = vld [vmem:[#allocation3 + $0x790] sm:$0xff]
        %v1195 = vld [vmem:[#allocation3 + $0x798] sm:$0xff]
        %v1196 = vld [vmem:[#allocation3 + $0x7a0] sm:$0xff]
        %v1197 = vld [vmem:[#allocation3 + $0x7a8] sm:$0xff]
        %v1198 = vld [vmem:[#allocation3 + $0x7b0] sm:$0xff]
        %v1199 = vld [vmem:[#allocation3 + $0x7b8] sm:$0xff]
        %v1200 = vld [vmem:[#allocation3 + $0x7c0] sm:$0xff]
        %v1201 = vld [vmem:[#allocation3 + $0x7c8] sm:$0xff]
        %v1202 = vld [vmem:[#allocation3 + $0x7d0] sm:$0xff]
        %v1203 = vld [vmem:[#allocation3 + $0x7d8] sm:$0xff]
        %v1204 = vld [vmem:[#allocation3 + $0x7e0] sm:$0xff]
        %v1205 = vld [vmem:[#allocation3 + $0x7e8] sm:$0xff]
        %v1206 = vld [vmem:[#allocation3 + $0x7f0] sm:$0xff]
        %v1207 = vld [vmem:[#allocation3 + $0x7f8] sm:$0xff]
        %v1208 = vld [vmem:[#allocation3 + $0x800] sm:$0xff]
        %v1209 = vld [vmem:[#allocation3 + $0x808] sm:$0xff]
        %v1210 = vld [vmem:[#allocation3 + $0x810] sm:$0xff]
        %v1211 = vld [vmem:[#allocation3 + $0x818] sm:$0xff]
        %v1212 = vld [vmem:[#allocation3 + $0x820] sm:$0xff]
        %v1213 = vld [vmem:[#allocation3 + $0x828] sm:$0xff]
        %v1214 = vld [vmem:[#allocation3 + $0x830] sm:$0xff]
        %v1215 = vld [vmem:[#allocation3 + $0x838] sm:$0xff]
        %v1216 = vld [vmem:[#allocation3 + $0x840] sm:$0xff]
        %v1217 = vld [vmem:[#allocation3 + $0x848] sm:$0xff]
        %v1218 = vld [vmem:[#allocation3 + $0x850] sm:$0xff]
        %v1219 = vld [vmem:[#allocation3 + $0x858] sm:$0xff]
        %v1220 = vld [vmem:[#allocation3 + $0x860] sm:$0xff]
        %v1221 = vld [vmem:[#allocation3 + $0x868] sm:$0xff]
        %v1222 = vld [vmem:[#allocation3 + $0x870] sm:$0xff]
        %v1223 = vld [vmem:[#allocation3 + $0x878] sm:$0xff]
        %v1224 = vld [vmem:[#allocation3 + $0x880] sm:$0xff]
        %v1225 = vld [vmem:[#allocation3 + $0x888] sm:$0xff]
        %v1226 = vld [vmem:[#allocation3 + $0x890] sm:$0xff]
        %v1227 = vld [vmem:[#allocation3 + $0x898] sm:$0xff]
        %v1228 = vld [vmem:[#allocation3 + $0x8a0] sm:$0xff]
        %v1229 = vld [vmem:[#allocation3 + $0x8a8] sm:$0xff]
        %v1230 = vld [vmem:[#allocation3 + $0x8b0] sm:$0xff]
        %v1231 = vld [vmem:[#allocation3 + $0x8b8] sm:$0xff]
        %v1232 = vld [vmem:[#allocation3 + $0x8c0] sm:$0xff]
        %v1233 = vld [vmem:[#allocation3 + $0x8c8] sm:$0xff]
        %v1234 = vld [vmem:[#allocation3 + $0x8d0] sm:$0xff]
        %v1235 = vld [vmem:[#allocation3 + $0x8d8] sm:$0xff]
        %v1236 = vld [vmem:[#allocation3 + $0x8e0] sm:$0xff]
        %v1237 = vld [vmem:[#allocation3 + $0x8e8] sm:$0xff]
        %v1238 = vld [vmem:[#allocation3 + $0x8f0] sm:$0xff]
        %v1239 = vld [vmem:[#allocation3 + $0x8f8] sm:$0xff]
        %v1240 = vld [vmem:[#allocation7] sm:$0xff]
        %v1241 = vld [vmem:[#allocation7 + $0x8] sm:$0xff]
        %v1242 = vld [vmem:[#allocation7 + $0x10] sm:$0xff]
        %v1243 = vld [vmem:[#allocation7 + $0x18] sm:$0xff]
        %v1244 = vld [vmem:[#allocation7 + $0x20] sm:$0xff]
        %v1245 = vld [vmem:[#allocation7 + $0x28] sm:$0xff]
        %v1246 = vld [vmem:[#allocation7 + $0x30] sm:$0xff]
        %v1247 = vld [vmem:[#allocation7 + $0x38] sm:$0xff]
        %v1248 = vld [vmem:[#allocation7 + $0x40] sm:$0xff]
        %v1249 = vld [vmem:[#allocation7 + $0x48] sm:$0xff]
        %v1250 = vld [vmem:[#allocation7 + $0x50] sm:$0xff]
        %v1251 = vld [vmem:[#allocation7 + $0x58] sm:$0xff]
        %v1252 = vld [vmem:[#allocation7 + $0x60] sm:$0xff]
        %v1253 = vld [vmem:[#allocation7 + $0x68] sm:$0xff]
        %v1254 = vld [vmem:[#allocation7 + $0x70] sm:$0xff]
        %v1255 = vld [vmem:[#allocation7 + $0x78] sm:$0xff]
        %v1256 = vld [vmem:[#allocation7 + $0x80] sm:$0xff]
        %v1257 = vld [vmem:[#allocation7 + $0x88] sm:$0xff]
        %v1258 = vld [vmem:[#allocation7 + $0x90] sm:$0xff]
        %v1259 = vld [vmem:[#allocation7 + $0x98] sm:$0xff]
        %v1260 = vld [vmem:[#allocation7 + $0xa0] sm:$0xff]
        %v1261 = vld [vmem:[#allocation7 + $0xa8] sm:$0xff]
        %v1262 = vld [vmem:[#allocation7 + $0xb0] sm:$0xff]
        %v1263 = vld [vmem:[#allocation7 + $0xb8] sm:$0xff]
        %v1264 = vld [vmem:[#allocation7 + $0xc0] sm:$0xff]
        %v1265 = vld [vmem:[#allocation7 + $0xc8] sm:$0xff]
        %v1266 = vld [vmem:[#allocation7 + $0xd0] sm:$0xff]
        %v1267 = vld [vmem:[#allocation7 + $0xd8] sm:$0xff]
        %v1268 = vld [vmem:[#allocation7 + $0xe0] sm:$0xff]
        %v1269 = vld [vmem:[#allocation7 + $0xe8] sm:$0xff]
        %v1270 = vld [vmem:[#allocation7 + $0xf0] sm:$0xff]
        %v1271 = vld [vmem:[#allocation7 + $0xf8] sm:$0xff]
        %v1272 = vld [vmem:[#allocation7 + $0x100] sm:$0xff]
        %v1273 = vld [vmem:[#allocation7 + $0x108] sm:$0xff]
        %v1274 = vld [vmem:[#allocation7 + $0x110] sm:$0xff]
        %v1275 = vld [vmem:[#allocation7 + $0x118] sm:$0xff]
        %v1276 = vld [vmem:[#allocation7 + $0x120] sm:$0xff]
        %v1277 = vld [vmem:[#allocation7 + $0x128] sm:$0xff]
        %v1278 = vld [vmem:[#allocation7 + $0x130] sm:$0xff]
        %v1279 = vld [vmem:[#allocation7 + $0x138] sm:$0xff]
        %v1280 = vld [vmem:[#allocation7 + $0x140] sm:$0xff]
        %v1281 = vld [vmem:[#allocation7 + $0x148] sm:$0xff]
        %v1282 = vld [vmem:[#allocation7 + $0x150] sm:$0xff]
        %v1283 = vld [vmem:[#allocation7 + $0x158] sm:$0xff]
        %v1284 = vld [vmem:[#allocation7 + $0x160] sm:$0xff]
        %v1285 = vld [vmem:[#allocation7 + $0x168] sm:$0xff]
        %v1286 = vld [vmem:[#allocation7 + $0x170] sm:$0xff]
        %v1287 = vld [vmem:[#allocation7 + $0x178] sm:$0xff]
        %v1288 = vld [vmem:[#allocation7 + $0x180] sm:$0xff]
        %v1289 = vld [vmem:[#allocation7 + $0x188] sm:$0xff]
        %v1290 = vld [vmem:[#allocation7 + $0x190] sm:$0xff]
        %v1291 = vld [vmem:[#allocation7 + $0x198] sm:$0xff]
        %v1292 = vld [vmem:[#allocation7 + $0x1a0] sm:$0xff]
        %v1293 = vld [vmem:[#allocation7 + $0x1a8] sm:$0xff]
        %v1294 = vld [vmem:[#allocation7 + $0x1b0] sm:$0xff]
        %v1295 = vld [vmem:[#allocation7 + $0x1b8] sm:$0xff]
        %v1296 = vld [vmem:[#allocation7 + $0x1c0] sm:$0xff]
        %v1297 = vld [vmem:[#allocation7 + $0x1c8] sm:$0xff]
        %v1298 = vld [vmem:[#allocation7 + $0x1d0] sm:$0xff]
        %v1299 = vld [vmem:[#allocation7 + $0x1d8] sm:$0xff]
        %v1300 = vld [vmem:[#allocation7 + $0x1e0] sm:$0xff]
        %v1301 = vld [vmem:[#allocation7 + $0x1e8] sm:$0xff]
        %v1302 = vld [vmem:[#allocation7 + $0x1f0] sm:$0xff]
        %v1303 = vld [vmem:[#allocation7 + $0x1f8] sm:$0xff]
        %v1304 = vld [vmem:[#allocation7 + $0x200] sm:$0xff]
        %v1305 = vld [vmem:[#allocation7 + $0x208] sm:$0xff]
        %v1306 = vld [vmem:[#allocation7 + $0x210] sm:$0xff]
        %v1307 = vld [vmem:[#allocation7 + $0x218] sm:$0xff]
        %v1308 = vld [vmem:[#allocation7 + $0x220] sm:$0xff]
        %v1309 = vld [vmem:[#allocation7 + $0x228] sm:$0xff]
        %v1310 = vld [vmem:[#allocation7 + $0x230] sm:$0xff]
        %v1311 = vld [vmem:[#allocation7 + $0x238] sm:$0xff]
        %v1312 = vld [vmem:[#allocation7 + $0x240] sm:$0xff]
        %v1313 = vld [vmem:[#allocation7 + $0x248] sm:$0xff]
        %v1314 = vld [vmem:[#allocation7 + $0x250] sm:$0xff]
        %v1315 = vld [vmem:[#allocation7 + $0x258] sm:$0xff]
        %v1316 = vld [vmem:[#allocation7 + $0x260] sm:$0xff]
        %v1317 = vld [vmem:[#allocation7 + $0x268] sm:$0xff]
        %v1318 = vld [vmem:[#allocation7 + $0x270] sm:$0xff]
        %v1319 = vld [vmem:[#allocation7 + $0x278] sm:$0xff]
        %v1320 = vld [vmem:[#allocation7 + $0x280] sm:$0xff]
        %v1321 = vld [vmem:[#allocation7 + $0x288] sm:$0xff]
        %v1322 = vld [vmem:[#allocation7 + $0x290] sm:$0xff]
        %v1323 = vld [vmem:[#allocation7 + $0x298] sm:$0xff]
        %v1324 = vld [vmem:[#allocation7 + $0x2a0] sm:$0xff]
        %v1325 = vld [vmem:[#allocation7 + $0x2a8] sm:$0xff]
        %v1326 = vld [vmem:[#allocation7 + $0x2b0] sm:$0xff]
        %v1327 = vld [vmem:[#allocation7 + $0x2b8] sm:$0xff]
        %v1328 = vld [vmem:[#allocation7 + $0x2c0] sm:$0xff]
        %v1329 = vld [vmem:[#allocation7 + $0x2c8] sm:$0xff]
        %v1330 = vld [vmem:[#allocation7 + $0x2d0] sm:$0xff]
        %v1331 = vld [vmem:[#allocation7 + $0x2d8] sm:$0xff]
        %v1332 = vld [vmem:[#allocation7 + $0x2e0] sm:$0xff]
        %v1333 = vld [vmem:[#allocation7 + $0x2e8] sm:$0xff]
        %v1334 = vld [vmem:[#allocation7 + $0x2f0] sm:$0xff]
        %v1335 = vld [vmem:[#allocation7 + $0x2f8] sm:$0xff]
        %v1336 = vld [vmem:[#allocation7 + $0x300] sm:$0xff]
        %v1337 = vld [vmem:[#allocation7 + $0x308] sm:$0xff]
        %v1338 = vld [vmem:[#allocation7 + $0x310] sm:$0xff]
        %v1339 = vld [vmem:[#allocation7 + $0x318] sm:$0xff]
        %v1340 = vld [vmem:[#allocation7 + $0x320] sm:$0xff]
        %v1341 = vld [vmem:[#allocation7 + $0x328] sm:$0xff]
        %v1342 = vld [vmem:[#allocation7 + $0x330] sm:$0xff]
        %v1343 = vld [vmem:[#allocation7 + $0x338] sm:$0xff]
        %v1344 = vld [vmem:[#allocation7 + $0x340] sm:$0xff]
        %v1345 = vld [vmem:[#allocation7 + $0x348] sm:$0xff]
        %v1346 = vld [vmem:[#allocation7 + $0x350] sm:$0xff]
        %v1347 = vld [vmem:[#allocation7 + $0x358] sm:$0xff]
        %v1348 = vld [vmem:[#allocation7 + $0x360] sm:$0xff]
        %v1349 = vld [vmem:[#allocation7 + $0x368] sm:$0xff]
        %v1350 = vld [vmem:[#allocation7 + $0x370] sm:$0xff]
        %v1351 = vld [vmem:[#allocation7 + $0x378] sm:$0xff]
        %v1352 = vld [vmem:[#allocation7 + $0x380] sm:$0xff]
        %v1353 = vld [vmem:[#allocation7 + $0x388] sm:$0xff]
        %v1354 = vld [vmem:[#allocation7 + $0x390] sm:$0xff]
        %v1355 = vld [vmem:[#allocation7 + $0x398] sm:$0xff]
        %v1356 = vld [vmem:[#allocation7 + $0x3a0] sm:$0xff]
        %v1357 = vld [vmem:[#allocation7 + $0x3a8] sm:$0xff]
        %v1358 = vld [vmem:[#allocation7 + $0x3b0] sm:$0xff]
        %v1359 = vld [vmem:[#allocation7 + $0x3b8] sm:$0xff]
        %v1360 = vld [vmem:[#allocation7 + $0x3c0] sm:$0xff]
        %v1361 = vld [vmem:[#allocation7 + $0x3c8] sm:$0xff]
        %v1362 = vld [vmem:[#allocation7 + $0x3d0] sm:$0xff]
        %v1363 = vld [vmem:[#allocation7 + $0x3d8] sm:$0xff]
        %v1364 = vld [vmem:[#allocation7 + $0x3e0] sm:$0xff]
        %v1365 = vld [vmem:[#allocation7 + $0x3e8] sm:$0xff]
        %v1366 = vld [vmem:[#allocation7 + $0x3f0] sm:$0xff]
        %v1367 = vld [vmem:[#allocation7 + $0x3f8] sm:$0xff]
        %v1368 = vld [vmem:[#allocation7 + $0x400] sm:$0xff]
        %v1369 = vld [vmem:[#allocation7 + $0x408] sm:$0xff]
        %v1370 = vld [vmem:[#allocation7 + $0x410] sm:$0xff]
        %v1371 = vld [vmem:[#allocation7 + $0x418] sm:$0xff]
        %v1372 = vld [vmem:[#allocation7 + $0x420] sm:$0xff]
        %v1373 = vld [vmem:[#allocation7 + $0x428] sm:$0xff]
        %v1374 = vld [vmem:[#allocation7 + $0x430] sm:$0xff]
        %v1375 = vld [vmem:[#allocation7 + $0x438] sm:$0xff]
        %v1376 = vld [vmem:[#allocation7 + $0x440] sm:$0xff]
        %v1377 = vld [vmem:[#allocation7 + $0x448] sm:$0xff]
        %v1378 = vld [vmem:[#allocation7 + $0x450] sm:$0xff]
        %v1379 = vld [vmem:[#allocation7 + $0x458] sm:$0xff]
        %v1380 = vld [vmem:[#allocation7 + $0x460] sm:$0xff]
        %v1381 = vld [vmem:[#allocation7 + $0x468] sm:$0xff]
        %v1382 = vld [vmem:[#allocation7 + $0x470] sm:$0xff]
        %v1383 = vld [vmem:[#allocation7 + $0x478] sm:$0xff]
        %1384 = vmatpush.msra.mxu0 %v1255
        %1385 = vmatpush.msra.mxu0 %v1254
        %1386 = vmatpush.msra.mxu0 %v1253
        %1387 = vmatpush.msra.mxu0 %v1252
        %1388 = vmatpush.msra.mxu0 %v1251
        %1389 = vmatpush.msra.mxu0 %v1250
        %1390 = vmatpush.msra.mxu0 %v1249
        %1391 = vmatpush.msra.mxu0 %v1248
        %1392 = vmatpush.msra.mxu0 %v1247
        %1393 = vmatpush.msra.mxu0 %v1246
        %1394 = vmatpush.msra.mxu0 %v1245
        %1395 = vmatpush.msra.mxu0 %v1244
        %1396 = vmatpush.msra.mxu0 %v1243
        %1397 = vmatpush.msra.mxu0 %v1242
        %1398 = vmatpush.msra.mxu0 %v1241
        %1399 = vmatpush.msra.mxu0 %v1240
        %1400 = vmatmul.f32.gmra.mxu0 %v952
        %v1401 = vpop.f32.mrf.mxu0
        %v1402 = vadd.f32 0.0, %v1401
        %1403 = vmatmul.f32.gmra.mxu0 %v961
        %v1404 = vpop.f32.mrf.mxu0
        %v1405 = vadd.f32 0.0, %v1404
        %1406 = vmatmul.f32.gmra.mxu0 %v970
        %v1407 = vpop.f32.mrf.mxu0
        %v1408 = vadd.f32 0.0, %v1407
        %1409 = vmatmul.f32.gmra.mxu0 %v979
        %v1410 = vpop.f32.mrf.mxu0
        %v1411 = vadd.f32 0.0, %v1410
        %1412 = vmatmul.f32.gmra.mxu0 %v988
        %v1413 = vpop.f32.mrf.mxu0
        %v1414 = vadd.f32 0.0, %v1413
        %1415 = vmatmul.f32.gmra.mxu0 %v997
        %v1416 = vpop.f32.mrf.mxu0
        %v1417 = vadd.f32 0.0, %v1416
        %1418 = vmatmul.f32.gmra.mxu0 %v1006
        %v1419 = vpop.f32.mrf.mxu0
        %v1420 = vadd.f32 0.0, %v1419
        %1421 = vmatmul.f32.gmra.mxu0 %v1015
        %v1422 = vpop.f32.mrf.mxu0
        %v1423 = vadd.f32 0.0, %v1422
        %1424 = vmatmul.f32.gmra.mxu0 %v1024
        %v1425 = vpop.f32.mrf.mxu0
        %v1426 = vadd.f32 0.0, %v1425
        %1427 = vmatmul.f32.gmra.mxu0 %v1033
        %v1428 = vpop.f32.mrf.mxu0
        %v1429 = vadd.f32 0.0, %v1428
        %1430 = vmatmul.f32.gmra.mxu0 %v1042
        %v1431 = vpop.f32.mrf.mxu0
        %v1432 = vadd.f32 0.0, %v1431
        %1433 = vmatmul.f32.gmra.mxu0 %v1051
        %v1434 = vpop.f32.mrf.mxu0
        %v1435 = vadd.f32 0.0, %v1434
        %1436 = vmatmul.f32.gmra.mxu0 %v1060
        %v1437 = vpop.f32.mrf.mxu0
        %v1438 = vadd.f32 0.0, %v1437
        %1439 = vmatmul.f32.gmra.mxu0 %v1069
        %v1440 = vpop.f32.mrf.mxu0
        %v1441 = vadd.f32 0.0, %v1440
        %1442 = vmatmul.f32.gmra.mxu0 %v1078
        %v1443 = vpop.f32.mrf.mxu0
        %v1444 = vadd.f32 0.0, %v1443
        %1445 = vmatmul.f32.gmra.mxu0 %v1087
        %v1446 = vpop.f32.mrf.mxu0
        %v1447 = vadd.f32 0.0, %v1446
        %1448 = vmatmul.f32.gmra.mxu0 %v1096
        %v1449 = vpop.f32.mrf.mxu0
        %v1450 = vadd.f32 0.0, %v1449
        %1451 = vmatmul.f32.gmra.mxu0 %v1105
        %v1452 = vpop.f32.mrf.mxu0
        %v1453 = vadd.f32 0.0, %v1452
        %1454 = vmatmul.f32.gmra.mxu0 %v1114
        %v1455 = vpop.f32.mrf.mxu0
        %v1456 = vadd.f32 0.0, %v1455
        %1457 = vmatmul.f32.gmra.mxu0 %v1123
        %v1458 = vpop.f32.mrf.mxu0
        %v1459 = vadd.f32 0.0, %v1458
        %1460 = vmatmul.f32.gmra.mxu0 %v1132
        %v1461 = vpop.f32.mrf.mxu0
        %v1462 = vadd.f32 0.0, %v1461
        %1463 = vmatmul.f32.gmra.mxu0 %v1141
        %v1464 = vpop.f32.mrf.mxu0
        %v1465 = vadd.f32 0.0, %v1464
        %1466 = vmatmul.f32.gmra.mxu0 %v1150
        %v1467 = vpop.f32.mrf.mxu0
        %v1468 = vadd.f32 0.0, %v1467
        %1469 = vmatmul.f32.gmra.mxu0 %v1159
        %v1470 = vpop.f32.mrf.mxu0
        %v1471 = vadd.f32 0.0, %v1470
        %1472 = vmatmul.f32.gmra.mxu0 %v1168
        %v1473 = vpop.f32.mrf.mxu0
        %v1474 = vadd.f32 0.0, %v1473
        %1475 = vmatmul.f32.gmra.mxu0 %v1177
        %v1476 = vpop.f32.mrf.mxu0
        %v1477 = vadd.f32 0.0, %v1476
        %1478 = vmatmul.f32.gmra.mxu0 %v1186
        %v1479 = vpop.f32.mrf.mxu0
        %v1480 = vadd.f32 0.0, %v1479
        %1481 = vmatmul.f32.gmra.mxu0 %v1195
        %v1482 = vpop.f32.mrf.mxu0
        %v1483 = vadd.f32 0.0, %v1482
        %1484 = vmatmul.f32.gmra.mxu0 %v1204
        %v1485 = vpop.f32.mrf.mxu0
        %v1486 = vadd.f32 0.0, %v1485
        %1487 = vmatmul.f32.gmra.mxu0 %v1213
        %v1488 = vpop.f32.mrf.mxu0
        %v1489 = vadd.f32 0.0, %v1488
        %1490 = vmatmul.f32.gmra.mxu0 %v1222
        %v1491 = vpop.f32.mrf.mxu0
        %v1492 = vadd.f32 0.0, %v1491
        %1493 = vmatmul.f32.gmra.mxu0 %v1231
        %v1494 = vpop.f32.mrf.mxu0
        %v1495 = vadd.f32 0.0, %v1494
        %1496 = vdwg.mxu0
        %1497 = vmatpush.msra.mxu0 %v1271
        %1498 = vmatpush.msra.mxu0 %v1270
        %1499 = vmatpush.msra.mxu0 %v1269
        %1500 = vmatpush.msra.mxu0 %v1268
        %1501 = vmatpush.msra.mxu0 %v1267
        %1502 = vmatpush.msra.mxu0 %v1266
        %1503 = vmatpush.msra.mxu0 %v1265
        %1504 = vmatpush.msra.mxu0 %v1264
        %1505 = vmatpush.msra.mxu0 %v1263
        %1506 = vmatpush.msra.mxu0 %v1262
        %1507 = vmatpush.msra.mxu0 %v1261
        %1508 = vmatpush.msra.mxu0 %v1260
        %1509 = vmatpush.msra.mxu0 %v1259
        %1510 = vmatpush.msra.mxu0 %v1258
        %1511 = vmatpush.msra.mxu0 %v1257
        %1512 = vmatpush.msra.mxu0 %v1256
        %1513 = vmatmul.f32.gmra.mxu0 %v953
        %v1514 = vpop.f32.mrf.mxu0
        %v1515 = vadd.f32 %v1402, %v1514
        %1516 = vmatmul.f32.gmra.mxu0 %v962
        %v1517 = vpop.f32.mrf.mxu0
        %v1518 = vadd.f32 %v1405, %v1517
        %1519 = vmatmul.f32.gmra.mxu0 %v971
        %v1520 = vpop.f32.mrf.mxu0
        %v1521 = vadd.f32 %v1408, %v1520
        %1522 = vmatmul.f32.gmra.mxu0 %v980
        %v1523 = vpop.f32.mrf.mxu0
        %v1524 = vadd.f32 %v1411, %v1523
        %1525 = vmatmul.f32.gmra.mxu0 %v989
        %v1526 = vpop.f32.mrf.mxu0
        %v1527 = vadd.f32 %v1414, %v1526
        %1528 = vmatmul.f32.gmra.mxu0 %v998
        %v1529 = vpop.f32.mrf.mxu0
        %v1530 = vadd.f32 %v1417, %v1529
        %1531 = vmatmul.f32.gmra.mxu0 %v1007
        %v1532 = vpop.f32.mrf.mxu0
        %v1533 = vadd.f32 %v1420, %v1532
        %1534 = vmatmul.f32.gmra.mxu0 %v1016
        %v1535 = vpop.f32.mrf.mxu0
        %v1536 = vadd.f32 %v1423, %v1535
        %1537 = vmatmul.f32.gmra.mxu0 %v1025
        %v1538 = vpop.f32.mrf.mxu0
        %v1539 = vadd.f32 %v1426, %v1538
        %1540 = vmatmul.f32.gmra.mxu0 %v1034
        %v1541 = vpop.f32.mrf.mxu0
        %v1542 = vadd.f32 %v1429, %v1541
        %1543 = vmatmul.f32.gmra.mxu0 %v1043
        %v1544 = vpop.f32.mrf.mxu0
        %v1545 = vadd.f32 %v1432, %v1544
        %1546 = vmatmul.f32.gmra.mxu0 %v1052
        %v1547 = vpop.f32.mrf.mxu0
        %v1548 = vadd.f32 %v1435, %v1547
        %1549 = vmatmul.f32.gmra.mxu0 %v1061
        %v1550 = vpop.f32.mrf.mxu0
        %v1551 = vadd.f32 %v1438, %v1550
        %1552 = vmatmul.f32.gmra.mxu0 %v1070
        %v1553 = vpop.f32.mrf.mxu0
        %v1554 = vadd.f32 %v1441, %v1553
        %1555 = vmatmul.f32.gmra.mxu0 %v1079
        %v1556 = vpop.f32.mrf.mxu0
        %v1557 = vadd.f32 %v1444, %v1556
        %1558 = vmatmul.f32.gmra.mxu0 %v1088
        %v1559 = vpop.f32.mrf.mxu0
        %v1560 = vadd.f32 %v1447, %v1559
        %1561 = vmatmul.f32.gmra.mxu0 %v1097
        %v1562 = vpop.f32.mrf.mxu0
        %v1563 = vadd.f32 %v1450, %v1562
        %1564 = vmatmul.f32.gmra.mxu0 %v1106
        %v1565 = vpop.f32.mrf.mxu0
        %v1566 = vadd.f32 %v1453, %v1565
        %1567 = vmatmul.f32.gmra.mxu0 %v1115
        %v1568 = vpop.f32.mrf.mxu0
        %v1569 = vadd.f32 %v1456, %v1568
        %1570 = vmatmul.f32.gmra.mxu0 %v1124
        %v1571 = vpop.f32.mrf.mxu0
        %v1572 = vadd.f32 %v1459, %v1571
        %1573 = vmatmul.f32.gmra.mxu0 %v1133
        %v1574 = vpop.f32.mrf.mxu0
        %v1575 = vadd.f32 %v1462, %v1574
        %1576 = vmatmul.f32.gmra.mxu0 %v1142
        %v1577 = vpop.f32.mrf.mxu0
        %v1578 = vadd.f32 %v1465, %v1577
        %1579 = vmatmul.f32.gmra.mxu0 %v1151
        %v1580 = vpop.f32.mrf.mxu0
        %v1581 = vadd.f32 %v1468, %v1580
        %1582 = vmatmul.f32.gmra.mxu0 %v1160
        %v1583 = vpop.f32.mrf.mxu0
        %v1584 = vadd.f32 %v1471, %v1583
        %1585 = vmatmul.f32.gmra.mxu0 %v1169
        %v1586 = vpop.f32.mrf.mxu0
        %v1587 = vadd.f32 %v1474, %v1586
        %1588 = vmatmul.f32.gmra.mxu0 %v1178
        %v1589 = vpop.f32.mrf.mxu0
        %v1590 = vadd.f32 %v1477, %v1589
        %1591 = vmatmul.f32.gmra.mxu0 %v1187
        %v1592 = vpop.f32.mrf.mxu0
        %v1593 = vadd.f32 %v1480, %v1592
        %1594 = vmatmul.f32.gmra.mxu0 %v1196
        %v1595 = vpop.f32.mrf.mxu0
        %v1596 = vadd.f32 %v1483, %v1595
        %1597 = vmatmul.f32.gmra.mxu0 %v1205
        %v1598 = vpop.f32.mrf.mxu0
        %v1599 = vadd.f32 %v1486, %v1598
        %1600 = vmatmul.f32.gmra.mxu0 %v1214
        %v1601 = vpop.f32.mrf.mxu0
        %v1602 = vadd.f32 %v1489, %v1601
        %1603 = vmatmul.f32.gmra.mxu0 %v1223
        %v1604 = vpop.f32.mrf.mxu0
        %v1605 = vadd.f32 %v1492, %v1604
        %1606 = vmatmul.f32.gmra.mxu0 %v1232
        %v1607 = vpop.f32.mrf.mxu0
        %v1608 = vadd.f32 %v1495, %v1607
        %1609 = vdwg.mxu0
        %1610 = vmatpush.msra.mxu0 %v1287
        %1611 = vmatpush.msra.mxu0 %v1286
        %1612 = vmatpush.msra.mxu0 %v1285
        %1613 = vmatpush.msra.mxu0 %v1284
        %1614 = vmatpush.msra.mxu0 %v1283
        %1615 = vmatpush.msra.mxu0 %v1282
        %1616 = vmatpush.msra.mxu0 %v1281
        %1617 = vmatpush.msra.mxu0 %v1280
        %1618 = vmatpush.msra.mxu0 %v1279
        %1619 = vmatpush.msra.mxu0 %v1278
        %1620 = vmatpush.msra.mxu0 %v1277
        %1621 = vmatpush.msra.mxu0 %v1276
        %1622 = vmatpush.msra.mxu0 %v1275
        %1623 = vmatpush.msra.mxu0 %v1274
        %1624 = vmatpush.msra.mxu0 %v1273
        %1625 = vmatpush.msra.mxu0 %v1272
        %1626 = vmatmul.f32.gmra.mxu0 %v954
        %v1627 = vpop.f32.mrf.mxu0
        %v1628 = vadd.f32 %v1515, %v1627
        %1629 = vmatmul.f32.gmra.mxu0 %v963
        %v1630 = vpop.f32.mrf.mxu0
        %v1631 = vadd.f32 %v1518, %v1630
        %1632 = vmatmul.f32.gmra.mxu0 %v972
        %v1633 = vpop.f32.mrf.mxu0
        %v1634 = vadd.f32 %v1521, %v1633
        %1635 = vmatmul.f32.gmra.mxu0 %v981
        %v1636 = vpop.f32.mrf.mxu0
        %v1637 = vadd.f32 %v1524, %v1636
        %1638 = vmatmul.f32.gmra.mxu0 %v990
        %v1639 = vpop.f32.mrf.mxu0
        %v1640 = vadd.f32 %v1527, %v1639
        %1641 = vmatmul.f32.gmra.mxu0 %v999
        %v1642 = vpop.f32.mrf.mxu0
        %v1643 = vadd.f32 %v1530, %v1642
        %1644 = vmatmul.f32.gmra.mxu0 %v1008
        %v1645 = vpop.f32.mrf.mxu0
        %v1646 = vadd.f32 %v1533, %v1645
        %1647 = vmatmul.f32.gmra.mxu0 %v1017
        %v1648 = vpop.f32.mrf.mxu0
        %v1649 = vadd.f32 %v1536, %v1648
        %1650 = vmatmul.f32.gmra.mxu0 %v1026
        %v1651 = vpop.f32.mrf.mxu0
        %v1652 = vadd.f32 %v1539, %v1651
        %1653 = vmatmul.f32.gmra.mxu0 %v1035
        %v1654 = vpop.f32.mrf.mxu0
        %v1655 = vadd.f32 %v1542, %v1654
        %1656 = vmatmul.f32.gmra.mxu0 %v1044
        %v1657 = vpop.f32.mrf.mxu0
        %v1658 = vadd.f32 %v1545, %v1657
        %1659 = vmatmul.f32.gmra.mxu0 %v1053
        %v1660 = vpop.f32.mrf.mxu0
        %v1661 = vadd.f32 %v1548, %v1660
        %1662 = vmatmul.f32.gmra.mxu0 %v1062
        %v1663 = vpop.f32.mrf.mxu0
        %v1664 = vadd.f32 %v1551, %v1663
        %1665 = vmatmul.f32.gmra.mxu0 %v1071
        %v1666 = vpop.f32.mrf.mxu0
        %v1667 = vadd.f32 %v1554, %v1666
        %1668 = vmatmul.f32.gmra.mxu0 %v1080
        %v1669 = vpop.f32.mrf.mxu0
        %v1670 = vadd.f32 %v1557, %v1669
        %1671 = vmatmul.f32.gmra.mxu0 %v1089
        %v1672 = vpop.f32.mrf.mxu0
        %v1673 = vadd.f32 %v1560, %v1672
        %1674 = vmatmul.f32.gmra.mxu0 %v1098
        %v1675 = vpop.f32.mrf.mxu0
        %v1676 = vadd.f32 %v1563, %v1675
        %1677 = vmatmul.f32.gmra.mxu0 %v1107
        %v1678 = vpop.f32.mrf.mxu0
        %v1679 = vadd.f32 %v1566, %v1678
        %1680 = vmatmul.f32.gmra.mxu0 %v1116
        %v1681 = vpop.f32.mrf.mxu0
        %v1682 = vadd.f32 %v1569, %v1681
        %1683 = vmatmul.f32.gmra.mxu0 %v1125
        %v1684 = vpop.f32.mrf.mxu0
        %v1685 = vadd.f32 %v1572, %v1684
        %1686 = vmatmul.f32.gmra.mxu0 %v1134
        %v1687 = vpop.f32.mrf.mxu0
        %v1688 = vadd.f32 %v1575, %v1687
        %1689 = vmatmul.f32.gmra.mxu0 %v1143
        %v1690 = vpop.f32.mrf.mxu0
        %v1691 = vadd.f32 %v1578, %v1690
        %1692 = vmatmul.f32.gmra.mxu0 %v1152
        %v1693 = vpop.f32.mrf.mxu0
        %v1694 = vadd.f32 %v1581, %v1693
        %1695 = vmatmul.f32.gmra.mxu0 %v1161
        %v1696 = vpop.f32.mrf.mxu0
        %v1697 = vadd.f32 %v1584, %v1696
        %1698 = vmatmul.f32.gmra.mxu0 %v1170
        %v1699 = vpop.f32.mrf.mxu0
        %v1700 = vadd.f32 %v1587, %v1699
        %1701 = vmatmul.f32.gmra.mxu0 %v1179
        %v1702 = vpop.f32.mrf.mxu0
        %v1703 = vadd.f32 %v1590, %v1702
        %1704 = vmatmul.f32.gmra.mxu0 %v1188
        %v1705 = vpop.f32.mrf.mxu0
        %v1706 = vadd.f32 %v1593, %v1705
        %1707 = vmatmul.f32.gmra.mxu0 %v1197
        %v1708 = vpop.f32.mrf.mxu0
        %v1709 = vadd.f32 %v1596, %v1708
        %1710 = vmatmul.f32.gmra.mxu0 %v1206
        %v1711 = vpop.f32.mrf.mxu0
        %v1712 = vadd.f32 %v1599, %v1711
        %1713 = vmatmul.f32.gmra.mxu0 %v1215
        %v1714 = vpop.f32.mrf.mxu0
        %v1715 = vadd.f32 %v1602, %v1714
        %1716 = vmatmul.f32.gmra.mxu0 %v1224
        %v1717 = vpop.f32.mrf.mxu0
        %v1718 = vadd.f32 %v1605, %v1717
        %1719 = vmatmul.f32.gmra.mxu0 %v1233
        %v1720 = vpop.f32.mrf.mxu0
        %v1721 = vadd.f32 %v1608, %v1720
        %1722 = vdwg.mxu0
        %1723 = vmatpush.msra.mxu0 %v1303
        %1724 = vmatpush.msra.mxu0 %v1302
        %1725 = vmatpush.msra.mxu0 %v1301
        %1726 = vmatpush.msra.mxu0 %v1300
        %1727 = vmatpush.msra.mxu0 %v1299
        %1728 = vmatpush.msra.mxu0 %v1298
        %1729 = vmatpush.msra.mxu0 %v1297
        %1730 = vmatpush.msra.mxu0 %v1296
        %1731 = vmatpush.msra.mxu0 %v1295
        %1732 = vmatpush.msra.mxu0 %v1294
        %1733 = vmatpush.msra.mxu0 %v1293
        %1734 = vmatpush.msra.mxu0 %v1292
        %1735 = vmatpush.msra.mxu0 %v1291
        %1736 = vmatpush.msra.mxu0 %v1290
        %1737 = vmatpush.msra.mxu0 %v1289
        %1738 = vmatpush.msra.mxu0 %v1288
        %1739 = vmatmul.f32.gmra.mxu0 %v955
        %v1740 = vpop.f32.mrf.mxu0
        %v1741 = vadd.f32 %v1628, %v1740
        %1742 = vmatmul.f32.gmra.mxu0 %v964
        %v1743 = vpop.f32.mrf.mxu0
        %v1744 = vadd.f32 %v1631, %v1743
        %1745 = vmatmul.f32.gmra.mxu0 %v973
        %v1746 = vpop.f32.mrf.mxu0
        %v1747 = vadd.f32 %v1634, %v1746
        %1748 = vmatmul.f32.gmra.mxu0 %v982
        %v1749 = vpop.f32.mrf.mxu0
        %v1750 = vadd.f32 %v1637, %v1749
        %1751 = vmatmul.f32.gmra.mxu0 %v991
        %v1752 = vpop.f32.mrf.mxu0
        %v1753 = vadd.f32 %v1640, %v1752
        %1754 = vmatmul.f32.gmra.mxu0 %v1000
        %v1755 = vpop.f32.mrf.mxu0
        %v1756 = vadd.f32 %v1643, %v1755
        %1757 = vmatmul.f32.gmra.mxu0 %v1009
        %v1758 = vpop.f32.mrf.mxu0
        %v1759 = vadd.f32 %v1646, %v1758
        %1760 = vmatmul.f32.gmra.mxu0 %v1018
        %v1761 = vpop.f32.mrf.mxu0
        %v1762 = vadd.f32 %v1649, %v1761
        %1763 = vmatmul.f32.gmra.mxu0 %v1027
        %v1764 = vpop.f32.mrf.mxu0
        %v1765 = vadd.f32 %v1652, %v1764
        %1766 = vmatmul.f32.gmra.mxu0 %v1036
        %v1767 = vpop.f32.mrf.mxu0
        %v1768 = vadd.f32 %v1655, %v1767
        %1769 = vmatmul.f32.gmra.mxu0 %v1045
        %v1770 = vpop.f32.mrf.mxu0
        %v1771 = vadd.f32 %v1658, %v1770
        %1772 = vmatmul.f32.gmra.mxu0 %v1054
        %v1773 = vpop.f32.mrf.mxu0
        %v1774 = vadd.f32 %v1661, %v1773
        %1775 = vmatmul.f32.gmra.mxu0 %v1063
        %v1776 = vpop.f32.mrf.mxu0
        %v1777 = vadd.f32 %v1664, %v1776
        %1778 = vmatmul.f32.gmra.mxu0 %v1072
        %v1779 = vpop.f32.mrf.mxu0
        %v1780 = vadd.f32 %v1667, %v1779
        %1781 = vmatmul.f32.gmra.mxu0 %v1081
        %v1782 = vpop.f32.mrf.mxu0
        %v1783 = vadd.f32 %v1670, %v1782
        %1784 = vmatmul.f32.gmra.mxu0 %v1090
        %v1785 = vpop.f32.mrf.mxu0
        %v1786 = vadd.f32 %v1673, %v1785
        %1787 = vmatmul.f32.gmra.mxu0 %v1099
        %v1788 = vpop.f32.mrf.mxu0
        %v1789 = vadd.f32 %v1676, %v1788
        %1790 = vmatmul.f32.gmra.mxu0 %v1108
        %v1791 = vpop.f32.mrf.mxu0
        %v1792 = vadd.f32 %v1679, %v1791
        %1793 = vmatmul.f32.gmra.mxu0 %v1117
        %v1794 = vpop.f32.mrf.mxu0
        %v1795 = vadd.f32 %v1682, %v1794
        %1796 = vmatmul.f32.gmra.mxu0 %v1126
        %v1797 = vpop.f32.mrf.mxu0
        %v1798 = vadd.f32 %v1685, %v1797
        %1799 = vmatmul.f32.gmra.mxu0 %v1135
        %v1800 = vpop.f32.mrf.mxu0
        %v1801 = vadd.f32 %v1688, %v1800
        %1802 = vmatmul.f32.gmra.mxu0 %v1144
        %v1803 = vpop.f32.mrf.mxu0
        %v1804 = vadd.f32 %v1691, %v1803
        %1805 = vmatmul.f32.gmra.mxu0 %v1153
        %v1806 = vpop.f32.mrf.mxu0
        %v1807 = vadd.f32 %v1694, %v1806
        %1808 = vmatmul.f32.gmra.mxu0 %v1162
        %v1809 = vpop.f32.mrf.mxu0
        %v1810 = vadd.f32 %v1697, %v1809
        %1811 = vmatmul.f32.gmra.mxu0 %v1171
        %v1812 = vpop.f32.mrf.mxu0
        %v1813 = vadd.f32 %v1700, %v1812
        %1814 = vmatmul.f32.gmra.mxu0 %v1180
        %v1815 = vpop.f32.mrf.mxu0
        %v1816 = vadd.f32 %v1703, %v1815
        %1817 = vmatmul.f32.gmra.mxu0 %v1189
        %v1818 = vpop.f32.mrf.mxu0
        %v1819 = vadd.f32 %v1706, %v1818
        %1820 = vmatmul.f32.gmra.mxu0 %v1198
        %v1821 = vpop.f32.mrf.mxu0
        %v1822 = vadd.f32 %v1709, %v1821
        %1823 = vmatmul.f32.gmra.mxu0 %v1207
        %v1824 = vpop.f32.mrf.mxu0
        %v1825 = vadd.f32 %v1712, %v1824
        %1826 = vmatmul.f32.gmra.mxu0 %v1216
        %v1827 = vpop.f32.mrf.mxu0
        %v1828 = vadd.f32 %v1715, %v1827
        %1829 = vmatmul.f32.gmra.mxu0 %v1225
        %v1830 = vpop.f32.mrf.mxu0
        %v1831 = vadd.f32 %v1718, %v1830
        %1832 = vmatmul.f32.gmra.mxu0 %v1234
        %v1833 = vpop.f32.mrf.mxu0
        %v1834 = vadd.f32 %v1721, %v1833
        %1835 = vdwg.mxu0
        %1836 = vmatpush.msra.mxu0 %v1319
        %1837 = vmatpush.msra.mxu0 %v1318
        %1838 = vmatpush.msra.mxu0 %v1317
        %1839 = vmatpush.msra.mxu0 %v1316
        %1840 = vmatpush.msra.mxu0 %v1315
        %1841 = vmatpush.msra.mxu0 %v1314
        %1842 = vmatpush.msra.mxu0 %v1313
        %1843 = vmatpush.msra.mxu0 %v1312
        %1844 = vmatpush.msra.mxu0 %v1311
        %1845 = vmatpush.msra.mxu0 %v1310
        %1846 = vmatpush.msra.mxu0 %v1309
        %1847 = vmatpush.msra.mxu0 %v1308
        %1848 = vmatpush.msra.mxu0 %v1307
        %1849 = vmatpush.msra.mxu0 %v1306
        %1850 = vmatpush.msra.mxu0 %v1305
        %1851 = vmatpush.msra.mxu0 %v1304
        %1852 = vmatmul.f32.gmra.mxu0 %v956
        %v1853 = vpop.f32.mrf.mxu0
        %v1854 = vadd.f32 %v1741, %v1853
        %1855 = vmatmul.f32.gmra.mxu0 %v965
        %v1856 = vpop.f32.mrf.mxu0
        %v1857 = vadd.f32 %v1744, %v1856
        %1858 = vmatmul.f32.gmra.mxu0 %v974
        %v1859 = vpop.f32.mrf.mxu0
        %v1860 = vadd.f32 %v1747, %v1859
        %1861 = vmatmul.f32.gmra.mxu0 %v983
        %v1862 = vpop.f32.mrf.mxu0
        %v1863 = vadd.f32 %v1750, %v1862
        %1864 = vmatmul.f32.gmra.mxu0 %v992
        %v1865 = vpop.f32.mrf.mxu0
        %v1866 = vadd.f32 %v1753, %v1865
        %1867 = vmatmul.f32.gmra.mxu0 %v1001
        %v1868 = vpop.f32.mrf.mxu0
        %v1869 = vadd.f32 %v1756, %v1868
        %1870 = vmatmul.f32.gmra.mxu0 %v1010
        %v1871 = vpop.f32.mrf.mxu0
        %v1872 = vadd.f32 %v1759, %v1871
        %1873 = vmatmul.f32.gmra.mxu0 %v1019
        %v1874 = vpop.f32.mrf.mxu0
        %v1875 = vadd.f32 %v1762, %v1874
        %1876 = vmatmul.f32.gmra.mxu0 %v1028
        %v1877 = vpop.f32.mrf.mxu0
        %v1878 = vadd.f32 %v1765, %v1877
        %1879 = vmatmul.f32.gmra.mxu0 %v1037
        %v1880 = vpop.f32.mrf.mxu0
        %v1881 = vadd.f32 %v1768, %v1880
        %1882 = vmatmul.f32.gmra.mxu0 %v1046
        %v1883 = vpop.f32.mrf.mxu0
        %v1884 = vadd.f32 %v1771, %v1883
        %1885 = vmatmul.f32.gmra.mxu0 %v1055
        %v1886 = vpop.f32.mrf.mxu0
        %v1887 = vadd.f32 %v1774, %v1886
        %1888 = vmatmul.f32.gmra.mxu0 %v1064
        %v1889 = vpop.f32.mrf.mxu0
        %v1890 = vadd.f32 %v1777, %v1889
        %1891 = vmatmul.f32.gmra.mxu0 %v1073
        %v1892 = vpop.f32.mrf.mxu0
        %v1893 = vadd.f32 %v1780, %v1892
        %1894 = vmatmul.f32.gmra.mxu0 %v1082
        %v1895 = vpop.f32.mrf.mxu0
        %v1896 = vadd.f32 %v1783, %v1895
        %1897 = vmatmul.f32.gmra.mxu0 %v1091
        %v1898 = vpop.f32.mrf.mxu0
        %v1899 = vadd.f32 %v1786, %v1898
        %1900 = vmatmul.f32.gmra.mxu0 %v1100
        %v1901 = vpop.f32.mrf.mxu0
        %v1902 = vadd.f32 %v1789, %v1901
        %1903 = vmatmul.f32.gmra.mxu0 %v1109
        %v1904 = vpop.f32.mrf.mxu0
        %v1905 = vadd.f32 %v1792, %v1904
        %1906 = vmatmul.f32.gmra.mxu0 %v1118
        %v1907 = vpop.f32.mrf.mxu0
        %v1908 = vadd.f32 %v1795, %v1907
        %1909 = vmatmul.f32.gmra.mxu0 %v1127
        %v1910 = vpop.f32.mrf.mxu0
        %v1911 = vadd.f32 %v1798, %v1910
        %1912 = vmatmul.f32.gmra.mxu0 %v1136
        %v1913 = vpop.f32.mrf.mxu0
        %v1914 = vadd.f32 %v1801, %v1913
        %1915 = vmatmul.f32.gmra.mxu0 %v1145
        %v1916 = vpop.f32.mrf.mxu0
        %v1917 = vadd.f32 %v1804, %v1916
        %1918 = vmatmul.f32.gmra.mxu0 %v1154
        %v1919 = vpop.f32.mrf.mxu0
        %v1920 = vadd.f32 %v1807, %v1919
        %1921 = vmatmul.f32.gmra.mxu0 %v1163
        %v1922 = vpop.f32.mrf.mxu0
        %v1923 = vadd.f32 %v1810, %v1922
        %1924 = vmatmul.f32.gmra.mxu0 %v1172
        %v1925 = vpop.f32.mrf.mxu0
        %v1926 = vadd.f32 %v1813, %v1925
        %1927 = vmatmul.f32.gmra.mxu0 %v1181
        %v1928 = vpop.f32.mrf.mxu0
        %v1929 = vadd.f32 %v1816, %v1928
        %1930 = vmatmul.f32.gmra.mxu0 %v1190
        %v1931 = vpop.f32.mrf.mxu0
        %v1932 = vadd.f32 %v1819, %v1931
        %1933 = vmatmul.f32.gmra.mxu0 %v1199
        %v1934 = vpop.f32.mrf.mxu0
        %v1935 = vadd.f32 %v1822, %v1934
        %1936 = vmatmul.f32.gmra.mxu0 %v1208
        %v1937 = vpop.f32.mrf.mxu0
        %v1938 = vadd.f32 %v1825, %v1937
        %1939 = vmatmul.f32.gmra.mxu0 %v1217
        %v1940 = vpop.f32.mrf.mxu0
        %v1941 = vadd.f32 %v1828, %v1940
        %1942 = vmatmul.f32.gmra.mxu0 %v1226
        %v1943 = vpop.f32.mrf.mxu0
        %v1944 = vadd.f32 %v1831, %v1943
        %1945 = vmatmul.f32.gmra.mxu0 %v1235
        %v1946 = vpop.f32.mrf.mxu0
        %v1947 = vadd.f32 %v1834, %v1946
        %1948 = vdwg.mxu0
        %1949 = vmatpush.msra.mxu0 %v1335
        %1950 = vmatpush.msra.mxu0 %v1334
        %1951 = vmatpush.msra.mxu0 %v1333
        %1952 = vmatpush.msra.mxu0 %v1332
        %1953 = vmatpush.msra.mxu0 %v1331
        %1954 = vmatpush.msra.mxu0 %v1330
        %1955 = vmatpush.msra.mxu0 %v1329
        %1956 = vmatpush.msra.mxu0 %v1328
        %1957 = vmatpush.msra.mxu0 %v1327
        %1958 = vmatpush.msra.mxu0 %v1326
        %1959 = vmatpush.msra.mxu0 %v1325
        %1960 = vmatpush.msra.mxu0 %v1324
        %1961 = vmatpush.msra.mxu0 %v1323
        %1962 = vmatpush.msra.mxu0 %v1322
        %1963 = vmatpush.msra.mxu0 %v1321
        %1964 = vmatpush.msra.mxu0 %v1320
        %1965 = vmatmul.f32.gmra.mxu0 %v957
        %v1966 = vpop.f32.mrf.mxu0
        %v1967 = vadd.f32 %v1854, %v1966
        %1968 = vmatmul.f32.gmra.mxu0 %v966
        %v1969 = vpop.f32.mrf.mxu0
        %v1970 = vadd.f32 %v1857, %v1969
        %1971 = vmatmul.f32.gmra.mxu0 %v975
        %v1972 = vpop.f32.mrf.mxu0
        %v1973 = vadd.f32 %v1860, %v1972
        %1974 = vmatmul.f32.gmra.mxu0 %v984
        %v1975 = vpop.f32.mrf.mxu0
        %v1976 = vadd.f32 %v1863, %v1975
        %1977 = vmatmul.f32.gmra.mxu0 %v993
        %v1978 = vpop.f32.mrf.mxu0
        %v1979 = vadd.f32 %v1866, %v1978
        %1980 = vmatmul.f32.gmra.mxu0 %v1002
        %v1981 = vpop.f32.mrf.mxu0
        %v1982 = vadd.f32 %v1869, %v1981
        %1983 = vmatmul.f32.gmra.mxu0 %v1011
        %v1984 = vpop.f32.mrf.mxu0
        %v1985 = vadd.f32 %v1872, %v1984
        %1986 = vmatmul.f32.gmra.mxu0 %v1020
        %v1987 = vpop.f32.mrf.mxu0
        %v1988 = vadd.f32 %v1875, %v1987
        %1989 = vmatmul.f32.gmra.mxu0 %v1029
        %v1990 = vpop.f32.mrf.mxu0
        %v1991 = vadd.f32 %v1878, %v1990
        %1992 = vmatmul.f32.gmra.mxu0 %v1038
        %v1993 = vpop.f32.mrf.mxu0
        %v1994 = vadd.f32 %v1881, %v1993
        %1995 = vmatmul.f32.gmra.mxu0 %v1047
        %v1996 = vpop.f32.mrf.mxu0
        %v1997 = vadd.f32 %v1884, %v1996
        %1998 = vmatmul.f32.gmra.mxu0 %v1056
        %v1999 = vpop.f32.mrf.mxu0
        %v2000 = vadd.f32 %v1887, %v1999
        %2001 = vmatmul.f32.gmra.mxu0 %v1065
        %v2002 = vpop.f32.mrf.mxu0
        %v2003 = vadd.f32 %v1890, %v2002
        %2004 = vmatmul.f32.gmra.mxu0 %v1074
        %v2005 = vpop.f32.mrf.mxu0
        %v2006 = vadd.f32 %v1893, %v2005
        %2007 = vmatmul.f32.gmra.mxu0 %v1083
        %v2008 = vpop.f32.mrf.mxu0
        %v2009 = vadd.f32 %v1896, %v2008
        %2010 = vmatmul.f32.gmra.mxu0 %v1092
        %v2011 = vpop.f32.mrf.mxu0
        %v2012 = vadd.f32 %v1899, %v2011
        %2013 = vmatmul.f32.gmra.mxu0 %v1101
        %v2014 = vpop.f32.mrf.mxu0
        %v2015 = vadd.f32 %v1902, %v2014
        %2016 = vmatmul.f32.gmra.mxu0 %v1110
        %v2017 = vpop.f32.mrf.mxu0
        %v2018 = vadd.f32 %v1905, %v2017
        %2019 = vmatmul.f32.gmra.mxu0 %v1119
        %v2020 = vpop.f32.mrf.mxu0
        %v2021 = vadd.f32 %v1908, %v2020
        %2022 = vmatmul.f32.gmra.mxu0 %v1128
        %v2023 = vpop.f32.mrf.mxu0
        %v2024 = vadd.f32 %v1911, %v2023
        %2025 = vmatmul.f32.gmra.mxu0 %v1137
        %v2026 = vpop.f32.mrf.mxu0
        %v2027 = vadd.f32 %v1914, %v2026
        %2028 = vmatmul.f32.gmra.mxu0 %v1146
        %v2029 = vpop.f32.mrf.mxu0
        %v2030 = vadd.f32 %v1917, %v2029
        %2031 = vmatmul.f32.gmra.mxu0 %v1155
        %v2032 = vpop.f32.mrf.mxu0
        %v2033 = vadd.f32 %v1920, %v2032
        %2034 = vmatmul.f32.gmra.mxu0 %v1164
        %v2035 = vpop.f32.mrf.mxu0
        %v2036 = vadd.f32 %v1923, %v2035
        %2037 = vmatmul.f32.gmra.mxu0 %v1173
        %v2038 = vpop.f32.mrf.mxu0
        %v2039 = vadd.f32 %v1926, %v2038
        %2040 = vmatmul.f32.gmra.mxu0 %v1182
        %v2041 = vpop.f32.mrf.mxu0
        %v2042 = vadd.f32 %v1929, %v2041
        %2043 = vmatmul.f32.gmra.mxu0 %v1191
        %v2044 = vpop.f32.mrf.mxu0
        %v2045 = vadd.f32 %v1932, %v2044
        %2046 = vmatmul.f32.gmra.mxu0 %v1200
        %v2047 = vpop.f32.mrf.mxu0
        %v2048 = vadd.f32 %v1935, %v2047
        %2049 = vmatmul.f32.gmra.mxu0 %v1209
        %v2050 = vpop.f32.mrf.mxu0
        %v2051 = vadd.f32 %v1938, %v2050
        %2052 = vmatmul.f32.gmra.mxu0 %v1218
        %v2053 = vpop.f32.mrf.mxu0
        %v2054 = vadd.f32 %v1941, %v2053
        %2055 = vmatmul.f32.gmra.mxu0 %v1227
        %v2056 = vpop.f32.mrf.mxu0
        %v2057 = vadd.f32 %v1944, %v2056
        %2058 = vmatmul.f32.gmra.mxu0 %v1236
        %v2059 = vpop.f32.mrf.mxu0
        %v2060 = vadd.f32 %v1947, %v2059
        %2061 = vdwg.mxu0
        %2062 = vmatpush.msra.mxu0 %v1351
        %2063 = vmatpush.msra.mxu0 %v1350
        %2064 = vmatpush.msra.mxu0 %v1349
        %2065 = vmatpush.msra.mxu0 %v1348
        %2066 = vmatpush.msra.mxu0 %v1347
        %2067 = vmatpush.msra.mxu0 %v1346
        %2068 = vmatpush.msra.mxu0 %v1345
        %2069 = vmatpush.msra.mxu0 %v1344
        %2070 = vmatpush.msra.mxu0 %v1343
        %2071 = vmatpush.msra.mxu0 %v1342
        %2072 = vmatpush.msra.mxu0 %v1341
        %2073 = vmatpush.msra.mxu0 %v1340
        %2074 = vmatpush.msra.mxu0 %v1339
        %2075 = vmatpush.msra.mxu0 %v1338
        %2076 = vmatpush.msra.mxu0 %v1337
        %2077 = vmatpush.msra.mxu0 %v1336
        %2078 = vmatmul.f32.gmra.mxu0 %v958
        %v2079 = vpop.f32.mrf.mxu0
        %v2080 = vadd.f32 %v1967, %v2079
        %2081 = vmatmul.f32.gmra.mxu0 %v967
        %v2082 = vpop.f32.mrf.mxu0
        %v2083 = vadd.f32 %v1970, %v2082
        %2084 = vmatmul.f32.gmra.mxu0 %v976
        %v2085 = vpop.f32.mrf.mxu0
        %v2086 = vadd.f32 %v1973, %v2085
        %2087 = vmatmul.f32.gmra.mxu0 %v985
        %v2088 = vpop.f32.mrf.mxu0
        %v2089 = vadd.f32 %v1976, %v2088
        %2090 = vmatmul.f32.gmra.mxu0 %v994
        %v2091 = vpop.f32.mrf.mxu0
        %v2092 = vadd.f32 %v1979, %v2091
        %2093 = vmatmul.f32.gmra.mxu0 %v1003
        %v2094 = vpop.f32.mrf.mxu0
        %v2095 = vadd.f32 %v1982, %v2094
        %2096 = vmatmul.f32.gmra.mxu0 %v1012
        %v2097 = vpop.f32.mrf.mxu0
        %v2098 = vadd.f32 %v1985, %v2097
        %2099 = vmatmul.f32.gmra.mxu0 %v1021
        %v2100 = vpop.f32.mrf.mxu0
        %v2101 = vadd.f32 %v1988, %v2100
        %2102 = vmatmul.f32.gmra.mxu0 %v1030
        %v2103 = vpop.f32.mrf.mxu0
        %v2104 = vadd.f32 %v1991, %v2103
        %2105 = vmatmul.f32.gmra.mxu0 %v1039
        %v2106 = vpop.f32.mrf.mxu0
        %v2107 = vadd.f32 %v1994, %v2106
        %2108 = vmatmul.f32.gmra.mxu0 %v1048
        %v2109 = vpop.f32.mrf.mxu0
        %v2110 = vadd.f32 %v1997, %v2109
        %2111 = vmatmul.f32.gmra.mxu0 %v1057
        %v2112 = vpop.f32.mrf.mxu0
        %v2113 = vadd.f32 %v2000, %v2112
        %2114 = vmatmul.f32.gmra.mxu0 %v1066
        %v2115 = vpop.f32.mrf.mxu0
        %v2116 = vadd.f32 %v2003, %v2115
        %2117 = vmatmul.f32.gmra.mxu0 %v1075
        %v2118 = vpop.f32.mrf.mxu0
        %v2119 = vadd.f32 %v2006, %v2118
        %2120 = vmatmul.f32.gmra.mxu0 %v1084
        %v2121 = vpop.f32.mrf.mxu0
        %v2122 = vadd.f32 %v2009, %v2121
        %2123 = vmatmul.f32.gmra.mxu0 %v1093
        %v2124 = vpop.f32.mrf.mxu0
        %v2125 = vadd.f32 %v2012, %v2124
        %2126 = vmatmul.f32.gmra.mxu0 %v1102
        %v2127 = vpop.f32.mrf.mxu0
        %v2128 = vadd.f32 %v2015, %v2127
        %2129 = vmatmul.f32.gmra.mxu0 %v1111
        %v2130 = vpop.f32.mrf.mxu0
        %v2131 = vadd.f32 %v2018, %v2130
        %2132 = vmatmul.f32.gmra.mxu0 %v1120
        %v2133 = vpop.f32.mrf.mxu0
        %v2134 = vadd.f32 %v2021, %v2133
        %2135 = vmatmul.f32.gmra.mxu0 %v1129
        %v2136 = vpop.f32.mrf.mxu0
        %v2137 = vadd.f32 %v2024, %v2136
        %2138 = vmatmul.f32.gmra.mxu0 %v1138
        %v2139 = vpop.f32.mrf.mxu0
        %v2140 = vadd.f32 %v2027, %v2139
        %2141 = vmatmul.f32.gmra.mxu0 %v1147
        %v2142 = vpop.f32.mrf.mxu0
        %v2143 = vadd.f32 %v2030, %v2142
        %2144 = vmatmul.f32.gmra.mxu0 %v1156
        %v2145 = vpop.f32.mrf.mxu0
        %v2146 = vadd.f32 %v2033, %v2145
        %2147 = vmatmul.f32.gmra.mxu0 %v1165
        %v2148 = vpop.f32.mrf.mxu0
        %v2149 = vadd.f32 %v2036, %v2148
        %2150 = vmatmul.f32.gmra.mxu0 %v1174
        %v2151 = vpop.f32.mrf.mxu0
        %v2152 = vadd.f32 %v2039, %v2151
        %2153 = vmatmul.f32.gmra.mxu0 %v1183
        %v2154 = vpop.f32.mrf.mxu0
        %v2155 = vadd.f32 %v2042, %v2154
        %2156 = vmatmul.f32.gmra.mxu0 %v1192
        %v2157 = vpop.f32.mrf.mxu0
        %v2158 = vadd.f32 %v2045, %v2157
        %2159 = vmatmul.f32.gmra.mxu0 %v1201
        %v2160 = vpop.f32.mrf.mxu0
        %v2161 = vadd.f32 %v2048, %v2160
        %2162 = vmatmul.f32.gmra.mxu0 %v1210
        %v2163 = vpop.f32.mrf.mxu0
        %v2164 = vadd.f32 %v2051, %v2163
        %2165 = vmatmul.f32.gmra.mxu0 %v1219
        %v2166 = vpop.f32.mrf.mxu0
        %v2167 = vadd.f32 %v2054, %v2166
        %2168 = vmatmul.f32.gmra.mxu0 %v1228
        %v2169 = vpop.f32.mrf.mxu0
        %v2170 = vadd.f32 %v2057, %v2169
        %2171 = vmatmul.f32.gmra.mxu0 %v1237
        %v2172 = vpop.f32.mrf.mxu0
        %v2173 = vadd.f32 %v2060, %v2172
        %2174 = vdwg.mxu0
        %2175 = vmatpush.msra.mxu0 %v1367
        %2176 = vmatpush.msra.mxu0 %v1366
        %2177 = vmatpush.msra.mxu0 %v1365
        %2178 = vmatpush.msra.mxu0 %v1364
        %2179 = vmatpush.msra.mxu0 %v1363
        %2180 = vmatpush.msra.mxu0 %v1362
        %2181 = vmatpush.msra.mxu0 %v1361
        %2182 = vmatpush.msra.mxu0 %v1360
        %2183 = vmatpush.msra.mxu0 %v1359
        %2184 = vmatpush.msra.mxu0 %v1358
        %2185 = vmatpush.msra.mxu0 %v1357
        %2186 = vmatpush.msra.mxu0 %v1356
        %2187 = vmatpush.msra.mxu0 %v1355
        %2188 = vmatpush.msra.mxu0 %v1354
        %2189 = vmatpush.msra.mxu0 %v1353
        %2190 = vmatpush.msra.mxu0 %v1352
        %2191 = vmatmul.f32.gmra.mxu0 %v959
        %v2192 = vpop.f32.mrf.mxu0
        %v2193 = vadd.f32 %v2080, %v2192
        %2194 = vmatmul.f32.gmra.mxu0 %v968
        %v2195 = vpop.f32.mrf.mxu0
        %v2196 = vadd.f32 %v2083, %v2195
        %2197 = vmatmul.f32.gmra.mxu0 %v977
        %v2198 = vpop.f32.mrf.mxu0
        %v2199 = vadd.f32 %v2086, %v2198
        %2200 = vmatmul.f32.gmra.mxu0 %v986
        %v2201 = vpop.f32.mrf.mxu0
        %v2202 = vadd.f32 %v2089, %v2201
        %2203 = vmatmul.f32.gmra.mxu0 %v995
        %v2204 = vpop.f32.mrf.mxu0
        %v2205 = vadd.f32 %v2092, %v2204
        %2206 = vmatmul.f32.gmra.mxu0 %v1004
        %v2207 = vpop.f32.mrf.mxu0
        %v2208 = vadd.f32 %v2095, %v2207
        %2209 = vmatmul.f32.gmra.mxu0 %v1013
        %v2210 = vpop.f32.mrf.mxu0
        %v2211 = vadd.f32 %v2098, %v2210
        %2212 = vmatmul.f32.gmra.mxu0 %v1022
        %v2213 = vpop.f32.mrf.mxu0
        %v2214 = vadd.f32 %v2101, %v2213
        %2215 = vmatmul.f32.gmra.mxu0 %v1031
        %v2216 = vpop.f32.mrf.mxu0
        %v2217 = vadd.f32 %v2104, %v2216
        %2218 = vmatmul.f32.gmra.mxu0 %v1040
        %v2219 = vpop.f32.mrf.mxu0
        %v2220 = vadd.f32 %v2107, %v2219
        %2221 = vmatmul.f32.gmra.mxu0 %v1049
        %v2222 = vpop.f32.mrf.mxu0
        %v2223 = vadd.f32 %v2110, %v2222
        %2224 = vmatmul.f32.gmra.mxu0 %v1058
        %v2225 = vpop.f32.mrf.mxu0
        %v2226 = vadd.f32 %v2113, %v2225
        %2227 = vmatmul.f32.gmra.mxu0 %v1067
        %v2228 = vpop.f32.mrf.mxu0
        %v2229 = vadd.f32 %v2116, %v2228
        %2230 = vmatmul.f32.gmra.mxu0 %v1076
        %v2231 = vpop.f32.mrf.mxu0
        %v2232 = vadd.f32 %v2119, %v2231
        %2233 = vmatmul.f32.gmra.mxu0 %v1085
        %v2234 = vpop.f32.mrf.mxu0
        %v2235 = vadd.f32 %v2122, %v2234
        %2236 = vmatmul.f32.gmra.mxu0 %v1094
        %v2237 = vpop.f32.mrf.mxu0
        %v2238 = vadd.f32 %v2125, %v2237
        %2239 = vmatmul.f32.gmra.mxu0 %v1103
        %v2240 = vpop.f32.mrf.mxu0
        %v2241 = vadd.f32 %v2128, %v2240
        %2242 = vmatmul.f32.gmra.mxu0 %v1112
        %v2243 = vpop.f32.mrf.mxu0
        %v2244 = vadd.f32 %v2131, %v2243
        %2245 = vmatmul.f32.gmra.mxu0 %v1121
        %v2246 = vpop.f32.mrf.mxu0
        %v2247 = vadd.f32 %v2134, %v2246
        %2248 = vmatmul.f32.gmra.mxu0 %v1130
        %v2249 = vpop.f32.mrf.mxu0
        %v2250 = vadd.f32 %v2137, %v2249
        %2251 = vmatmul.f32.gmra.mxu0 %v1139
        %v2252 = vpop.f32.mrf.mxu0
        %v2253 = vadd.f32 %v2140, %v2252
        %2254 = vmatmul.f32.gmra.mxu0 %v1148
        %v2255 = vpop.f32.mrf.mxu0
        %v2256 = vadd.f32 %v2143, %v2255
        %2257 = vmatmul.f32.gmra.mxu0 %v1157
        %v2258 = vpop.f32.mrf.mxu0
        %v2259 = vadd.f32 %v2146, %v2258
        %2260 = vmatmul.f32.gmra.mxu0 %v1166
        %v2261 = vpop.f32.mrf.mxu0
        %v2262 = vadd.f32 %v2149, %v2261
        %2263 = vmatmul.f32.gmra.mxu0 %v1175
        %v2264 = vpop.f32.mrf.mxu0
        %v2265 = vadd.f32 %v2152, %v2264
        %2266 = vmatmul.f32.gmra.mxu0 %v1184
        %v2267 = vpop.f32.mrf.mxu0
        %v2268 = vadd.f32 %v2155, %v2267
        %2269 = vmatmul.f32.gmra.mxu0 %v1193
        %v2270 = vpop.f32.mrf.mxu0
        %v2271 = vadd.f32 %v2158, %v2270
        %2272 = vmatmul.f32.gmra.mxu0 %v1202
        %v2273 = vpop.f32.mrf.mxu0
        %v2274 = vadd.f32 %v2161, %v2273
        %2275 = vmatmul.f32.gmra.mxu0 %v1211
        %v2276 = vpop.f32.mrf.mxu0
        %v2277 = vadd.f32 %v2164, %v2276
        %2278 = vmatmul.f32.gmra.mxu0 %v1220
        %v2279 = vpop.f32.mrf.mxu0
        %v2280 = vadd.f32 %v2167, %v2279
        %2281 = vmatmul.f32.gmra.mxu0 %v1229
        %v2282 = vpop.f32.mrf.mxu0
        %v2283 = vadd.f32 %v2170, %v2282
        %2284 = vmatmul.f32.gmra.mxu0 %v1238
        %v2285 = vpop.f32.mrf.mxu0
        %v2286 = vadd.f32 %v2173, %v2285
        %2287 = vdwg.mxu0
        %2288 = vmatpush.msra.mxu0 %v1383
        %2289 = vmatpush.msra.mxu0 %v1382
        %2290 = vmatpush.msra.mxu0 %v1381
        %2291 = vmatpush.msra.mxu0 %v1380
        %2292 = vmatpush.msra.mxu0 %v1379
        %2293 = vmatpush.msra.mxu0 %v1378
        %2294 = vmatpush.msra.mxu0 %v1377
        %2295 = vmatpush.msra.mxu0 %v1376
        %2296 = vmatpush.msra.mxu0 %v1375
        %2297 = vmatpush.msra.mxu0 %v1374
        %2298 = vmatpush.msra.mxu0 %v1373
        %2299 = vmatpush.msra.mxu0 %v1372
        %2300 = vmatpush.msra.mxu0 %v1371
        %2301 = vmatpush.msra.mxu0 %v1370
        %2302 = vmatpush.msra.mxu0 %v1369
        %2303 = vmatpush.msra.mxu0 %v1368
        %2304 = vmatmul.f32.gmra.mxu0 %v960
        %v2305 = vpop.f32.mrf.mxu0
        %v2306 = vadd.f32 %v2193, %v2305
        %2307 = vmatmul.f32.gmra.mxu0 %v969
        %v2308 = vpop.f32.mrf.mxu0
        %v2309 = vadd.f32 %v2196, %v2308
        %2310 = vmatmul.f32.gmra.mxu0 %v978
        %v2311 = vpop.f32.mrf.mxu0
        %v2312 = vadd.f32 %v2199, %v2311
        %2313 = vmatmul.f32.gmra.mxu0 %v987
        %v2314 = vpop.f32.mrf.mxu0
        %v2315 = vadd.f32 %v2202, %v2314
        %2316 = vmatmul.f32.gmra.mxu0 %v996
        %v2317 = vpop.f32.mrf.mxu0
        %v2318 = vadd.f32 %v2205, %v2317
        %2319 = vmatmul.f32.gmra.mxu0 %v1005
        %v2320 = vpop.f32.mrf.mxu0
        %v2321 = vadd.f32 %v2208, %v2320
        %2322 = vmatmul.f32.gmra.mxu0 %v1014
        %v2323 = vpop.f32.mrf.mxu0
        %v2324 = vadd.f32 %v2211, %v2323
        %2325 = vmatmul.f32.gmra.mxu0 %v1023
        %v2326 = vpop.f32.mrf.mxu0
        %v2327 = vadd.f32 %v2214, %v2326
        %2328 = vmatmul.f32.gmra.mxu0 %v1032
        %v2329 = vpop.f32.mrf.mxu0
        %v2330 = vadd.f32 %v2217, %v2329
        %2331 = vmatmul.f32.gmra.mxu0 %v1041
        %v2332 = vpop.f32.mrf.mxu0
        %v2333 = vadd.f32 %v2220, %v2332
        %2334 = vmatmul.f32.gmra.mxu0 %v1050
        %v2335 = vpop.f32.mrf.mxu0
        %v2336 = vadd.f32 %v2223, %v2335
        %2337 = vmatmul.f32.gmra.mxu0 %v1059
        %v2338 = vpop.f32.mrf.mxu0
        %v2339 = vadd.f32 %v2226, %v2338
        %2340 = vmatmul.f32.gmra.mxu0 %v1068
        %v2341 = vpop.f32.mrf.mxu0
        %v2342 = vadd.f32 %v2229, %v2341
        %2343 = vmatmul.f32.gmra.mxu0 %v1077
        %v2344 = vpop.f32.mrf.mxu0
        %v2345 = vadd.f32 %v2232, %v2344
        %2346 = vmatmul.f32.gmra.mxu0 %v1086
        %v2347 = vpop.f32.mrf.mxu0
        %v2348 = vadd.f32 %v2235, %v2347
        %2349 = vmatmul.f32.gmra.mxu0 %v1095
        %v2350 = vpop.f32.mrf.mxu0
        %v2351 = vadd.f32 %v2238, %v2350
        %2352 = vmatmul.f32.gmra.mxu0 %v1104
        %v2353 = vpop.f32.mrf.mxu0
        %v2354 = vadd.f32 %v2241, %v2353
        %2355 = vmatmul.f32.gmra.mxu0 %v1113
        %v2356 = vpop.f32.mrf.mxu0
        %v2357 = vadd.f32 %v2244, %v2356
        %2358 = vmatmul.f32.gmra.mxu0 %v1122
        %v2359 = vpop.f32.mrf.mxu0
        %v2360 = vadd.f32 %v2247, %v2359
        %2361 = vmatmul.f32.gmra.mxu0 %v1131
        %v2362 = vpop.f32.mrf.mxu0
        %v2363 = vadd.f32 %v2250, %v2362
        %2364 = vmatmul.f32.gmra.mxu0 %v1140
        %v2365 = vpop.f32.mrf.mxu0
        %v2366 = vadd.f32 %v2253, %v2365
        %2367 = vmatmul.f32.gmra.mxu0 %v1149
        %v2368 = vpop.f32.mrf.mxu0
        %v2369 = vadd.f32 %v2256, %v2368
        %2370 = vmatmul.f32.gmra.mxu0 %v1158
        %v2371 = vpop.f32.mrf.mxu0
        %v2372 = vadd.f32 %v2259, %v2371
        %2373 = vmatmul.f32.gmra.mxu0 %v1167
        %v2374 = vpop.f32.mrf.mxu0
        %v2375 = vadd.f32 %v2262, %v2374
        %2376 = vmatmul.f32.gmra.mxu0 %v1176
        %v2377 = vpop.f32.mrf.mxu0
        %v2378 = vadd.f32 %v2265, %v2377
        %2379 = vmatmul.f32.gmra.mxu0 %v1185
        %v2380 = vpop.f32.mrf.mxu0
        %v2381 = vadd.f32 %v2268, %v2380
        %2382 = vmatmul.f32.gmra.mxu0 %v1194
        %v2383 = vpop.f32.mrf.mxu0
        %v2384 = vadd.f32 %v2271, %v2383
        %2385 = vmatmul.f32.gmra.mxu0 %v1203
        %v2386 = vpop.f32.mrf.mxu0
        %v2387 = vadd.f32 %v2274, %v2386
        %2388 = vmatmul.f32.gmra.mxu0 %v1212
        %v2389 = vpop.f32.mrf.mxu0
        %v2390 = vadd.f32 %v2277, %v2389
        %2391 = vmatmul.f32.gmra.mxu0 %v1221
        %v2392 = vpop.f32.mrf.mxu0
        %v2393 = vadd.f32 %v2280, %v2392
        %2394 = vmatmul.f32.gmra.mxu0 %v1230
        %v2395 = vpop.f32.mrf.mxu0
        %v2396 = vadd.f32 %v2283, %v2395
        %2397 = vmatmul.f32.gmra.mxu0 %v1239
        %v2398 = vpop.f32.mrf.mxu0
        %v2399 = vadd.f32 %v2286, %v2398
        %2400 = vdwg.mxu0
        %v2401 = vadd.f32 %v2306, %v2309
        %v2402 = vadd.f32 %v2401, %v2312
        %v2403 = vadd.f32 %v2402, %v2315
        %v2404 = vadd.f32 %v2403, %v2318
        %v2405 = vadd.f32 %v2404, %v2321
        %v2406 = vadd.f32 %v2405, %v2324
        %v2407 = vadd.f32 %v2406, %v2327
        %v2408 = vadd.f32 %v2407, %v2330
        %v2409 = vadd.f32 %v2408, %v2333
        %v2410 = vadd.f32 %v2409, %v2336
        %v2411 = vadd.f32 %v2410, %v2339
        %v2412 = vadd.f32 %v2411, %v2342
        %v2413 = vadd.f32 %v2412, %v2345
        %v2414 = vadd.f32 %v2413, %v2348
        %v2415 = vadd.f32 %v2414, %v2351
        %v2416 = vadd.f32 %v2415, %v2354
        %v2417 = vadd.f32 %v2416, %v2357
        %v2418 = vadd.f32 %v2417, %v2360
        %v2419 = vadd.f32 %v2418, %v2363
        %v2420 = vadd.f32 %v2419, %v2366
        %v2421 = vadd.f32 %v2420, %v2369
        %v2422 = vadd.f32 %v2421, %v2372
        %v2423 = vadd.f32 %v2422, %v2375
        %v2424 = vadd.f32 %v2423, %v2378
        %v2425 = vadd.f32 %v2424, %v2381
        %v2426 = vadd.f32 %v2425, %v2384
        %v2427 = vadd.f32 %v2426, %v2387
        %v2428 = vadd.f32 %v2427, %v2390
        %v2429 = vadd.f32 %v2428, %v2393
        %v2430 = vadd.f32 %v2429, %v2396
        %v2431 = vadd.f32 %v2430, %v2399
        %v2432 = vrot.slane %v2431, 4
        %v2433 = vadd.f32 %v2431, %v2432
        %v2434 = vrot.slane %v2433, 2
        %v2435 = vadd.f32 %v2433, %v2434
        %v2436 = vrot.slane %v2435, 1
        %v2437 = vadd.f32 %v2435, %v2436
        %v2438 = vmul.f32 %v2437, 0.00390625
        %v2439 = vsub.f32 %v2306, %v2438
        %v2440 = vsub.f32 %v2309, %v2438
        %v2441 = vsub.f32 %v2312, %v2438
        %v2442 = vsub.f32 %v2315, %v2438
        %v2443 = vsub.f32 %v2318, %v2438
        %v2444 = vsub.f32 %v2321, %v2438
        %v2445 = vsub.f32 %v2324, %v2438
        %v2446 = vsub.f32 %v2327, %v2438
        %v2447 = vsub.f32 %v2330, %v2438
        %v2448 = vsub.f32 %v2333, %v2438
        %v2449 = vsub.f32 %v2336, %v2438
        %v2450 = vsub.f32 %v2339, %v2438
        %v2451 = vsub.f32 %v2342, %v2438
        %v2452 = vsub.f32 %v2345, %v2438
        %v2453 = vsub.f32 %v2348, %v2438
        %v2454 = vsub.f32 %v2351, %v2438
        %v2455 = vsub.f32 %v2354, %v2438
        %v2456 = vsub.f32 %v2357, %v2438
        %v2457 = vsub.f32 %v2360, %v2438
        %v2458 = vsub.f32 %v2363, %v2438
        %v2459 = vsub.f32 %v2366, %v2438
        %v2460 = vsub.f32 %v2369, %v2438
        %v2461 = vsub.f32 %v2372, %v2438
        %v2462 = vsub.f32 %v2375, %v2438
        %v2463 = vsub.f32 %v2378, %v2438
        %v2464 = vsub.f32 %v2381, %v2438
        %v2465 = vsub.f32 %v2384, %v2438
        %v2466 = vsub.f32 %v2387, %v2438
        %v2467 = vsub.f32 %v2390, %v2438
        %v2468 = vsub.f32 %v2393, %v2438
        %v2469 = vsub.f32 %v2396, %v2438
        %v2470 = vsub.f32 %v2399, %v2438
        %2471 = vst [vmem:[%s234] sm:$0x1] %v2437
        %v2472 = vmul.f32 %v2439, %v2439
        %v2473 = vmul.f32 %v2440, %v2440
        %v2474 = vmul.f32 %v2441, %v2441
        %v2475 = vmul.f32 %v2442, %v2442
        %v2476 = vmul.f32 %v2443, %v2443
        %v2477 = vmul.f32 %v2444, %v2444
        %v2478 = vmul.f32 %v2445, %v2445
        %v2479 = vmul.f32 %v2446, %v2446
        %v2480 = vmul.f32 %v2447, %v2447
        %v2481 = vmul.f32 %v2448, %v2448
        %v2482 = vmul.f32 %v2449, %v2449
        %v2483 = vmul.f32 %v2450, %v2450
        %v2484 = vmul.f32 %v2451, %v2451
        %v2485 = vmul.f32 %v2452, %v2452
        %v2486 = vmul.f32 %v2453, %v2453
        %v2487 = vmul.f32 %v2454, %v2454
        %v2488 = vmul.f32 %v2455, %v2455
        %v2489 = vmul.f32 %v2456, %v2456
        %v2490 = vmul.f32 %v2457, %v2457
        %v2491 = vmul.f32 %v2458, %v2458
        %v2492 = vmul.f32 %v2459, %v2459
        %v2493 = vmul.f32 %v2460, %v2460
        %v2494 = vmul.f32 %v2461, %v2461
        %v2495 = vmul.f32 %v2462, %v2462
        %v2496 = vmul.f32 %v2463, %v2463
        %v2497 = vmul.f32 %v2464, %v2464
        %v2498 = vmul.f32 %v2465, %v2465
        %v2499 = vmul.f32 %v2466, %v2466
        %v2500 = vmul.f32 %v2467, %v2467
        %v2501 = vmul.f32 %v2468, %v2468
        %v2502 = vmul.f32 %v2469, %v2469
        %v2503 = vmul.f32 %v2470, %v2470
        %v2504 = vadd.f32 %v2472, %v2473
        %v2505 = vadd.f32 %v2504, %v2474
        %v2506 = vadd.f32 %v2505, %v2475
        %v2507 = vadd.f32 %v2506, %v2476
        %v2508 = vadd.f32 %v2507, %v2477
        %v2509 = vadd.f32 %v2508, %v2478
        %v2510 = vadd.f32 %v2509, %v2479
        %v2511 = vadd.f32 %v2510, %v2480
        %v2512 = vadd.f32 %v2511, %v2481
        %v2513 = vadd.f32 %v2512, %v2482
        %v2514 = vadd.f32 %v2513, %v2483
        %v2515 = vadd.f32 %v2514, %v2484
        %v2516 = vadd.f32 %v2515, %v2485
        %v2517 = vadd.f32 %v2516, %v2486
        %v2518 = vadd.f32 %v2517, %v2487
        %v2519 = vadd.f32 %v2518, %v2488
        %v2520 = vadd.f32 %v2519, %v2489
        %v2521 = vadd.f32 %v2520, %v2490
        %v2522 = vadd.f32 %v2521, %v2491
        %v2523 = vadd.f32 %v2522, %v2492
        %v2524 = vadd.f32 %v2523, %v2493
        %v2525 = vadd.f32 %v2524, %v2494
        %v2526 = vadd.f32 %v2525, %v2495
        %v2527 = vadd.f32 %v2526, %v2496
        %v2528 = vadd.f32 %v2527, %v2497
        %v2529 = vadd.f32 %v2528, %v2498
        %v2530 = vadd.f32 %v2529, %v2499
        %v2531 = vadd.f32 %v2530, %v2500
        %v2532 = vadd.f32 %v2531, %v2501
        %v2533 = vadd.f32 %v2532, %v2502
        %v2534 = vadd.f32 %v2533, %v2503
        %v2535 = vrot.slane %v2534, 4
        %v2536 = vadd.f32 %v2534, %v2535
        %v2537 = vrot.slane %v2536, 2
        %v2538 = vadd.f32 %v2536, %v2537
        %v2539 = vrot.slane %v2538, 1
        %v2540 = vadd.f32 %v2538, %v2539
        %2541 = vst [vmem:[%s234 + $0x1] sm:$0x1] %v2540
        %2542 = vst [vmem:[%s227] sm:$0xff] %v2306
        %2543 = vst [vmem:[%s227 + $0x8] sm:$0xff] %v2309
        %2544 = vst [vmem:[%s227 + $0x10] sm:$0xff] %v2312
        %2545 = vst [vmem:[%s227 + $0x18] sm:$0xff] %v2315
        %2546 = vst [vmem:[%s227 + $0x20] sm:$0xff] %v2318
        %2547 = vst [vmem:[%s227 + $0x28] sm:$0xff] %v2321
        %2548 = vst [vmem:[%s227 + $0x30] sm:$0xff] %v2324
        %2549 = vst [vmem:[%s227 + $0x38] sm:$0xff] %v2327
        %2550 = vst [vmem:[%s227 + $0x40] sm:$0xff] %v2330
        %2551 = vst [vmem:[%s227 + $0x48] sm:$0xff] %v2333
        %2552 = vst [vmem:[%s227 + $0x50] sm:$0xff] %v2336
        %2553 = vst [vmem:[%s227 + $0x58] sm:$0xff] %v2339
        %2554 = vst [vmem:[%s227 + $0x60] sm:$0xff] %v2342
        %2555 = vst [vmem:[%s227 + $0x68] sm:$0xff] %v2345
        %2556 = vst [vmem:[%s227 + $0x70] sm:$0xff] %v2348
        %2557 = vst [vmem:[%s227 + $0x78] sm:$0xff] %v2351
        %2558 = vst [vmem:[%s227 + $0x80] sm:$0xff] %v2354
        %2559 = vst [vmem:[%s227 + $0x88] sm:$0xff] %v2357
        %2560 = vst [vmem:[%s227 + $0x90] sm:$0xff] %v2360
        %2561 = vst [vmem:[%s227 + $0x98] sm:$0xff] %v2363
        %2562 = vst [vmem:[%s227 + $0xa0] sm:$0xff] %v2366
        %2563 = vst [vmem:[%s227 + $0xa8] sm:$0xff] %v2369
        %2564 = vst [vmem:[%s227 + $0xb0] sm:$0xff] %v2372
        %2565 = vst [vmem:[%s227 + $0xb8] sm:$0xff] %v2375
        %2566 = vst [vmem:[%s227 + $0xc0] sm:$0xff] %v2378
        %2567 = vst [vmem:[%s227 + $0xc8] sm:$0xff] %v2381
        %2568 = vst [vmem:[%s227 + $0xd0] sm:$0xff] %v2384
        %2569 = vst [vmem:[%s227 + $0xd8] sm:$0xff] %v2387
        %2570 = vst [vmem:[%s227 + $0xe0] sm:$0xff] %v2390
        %2571 = vst [vmem:[%s227 + $0xe8] sm:$0xff] %v2393
        %2572 = vst [vmem:[%s227 + $0xf0] sm:$0xff] %v2396
        %2573 = vst [vmem:[%s227 + $0xf8] sm:$0xff] %v2399
        %s2574 = sand.u32 %s94, 1
        %s2575 = scalar_lea.sflag [#allocation6], %s2574
        %s2576 = sand.u32 %s94, 1
        %s2577 = smul.addr %s2576, 256
        %s2578 = scalar_lea.vmem [#allocation9], %s2577
        %s2579 = sand.u32 %s122, 1
        %s2580 = scalar_lea.sflag [#allocation11], %s2579
        %s2581 = sand.u32 %s122, 1
        %s2582 = smul.addr %s2581, 2
        %s2583 = scalar_lea.vmem [#allocation10], %s2582
        // Predicated region
        $region53: #{tpu_custom_call.1} parent=27 // pred_check
          %p2584 = pneg %p104
        $region54: #{tpu_custom_call.1} parent=27 // pred_check_branch
          %2586 = sbr.rel (%p2584) target = $region56
        $region55: #{tpu_custom_call.1} parent=27 // pred_region
          %s2587 = smul.u32 16, %s30
          %2589 = vsyncadd %s2575, 0
          %s2590 = smul.addr %s2587, 2
          %s2591 = smul.addr %s29, 32
          %s2592 = sadd.s32 %s2590, %s2591
          %s2593 = smul.addr %s2592, 8
          %s2594 = scalar_lea.hbm %s2, %s2593
          %s2595 = sshll.u32 %s2578, 4
          %s2596 = int_to_ptr.vmem [resolvable:$true] %s2595
          %s2597 = sshll.u32 %s2594, 4
          %s2598 = int_to_ptr.hbm [resolvable:$true] %s2597
          %2603 = dma.vmem_to_hbm [thread:$0]  %s2596, 4096, %s2598, %s2575, 128, 128, 8
        $region56: #{tpu_custom_call.1} parent=27 // pred_fallthru
          _
        // Predicated region
        $region57: #{tpu_custom_call.1} parent=27 // pred_check
          %p2604 = pneg %p132
        $region58: #{tpu_custom_call.1} parent=27 // pred_check_branch
          %2606 = sbr.rel (%p2604) target = $region60
        $region59: #{tpu_custom_call.1} parent=27 // pred_region
          %2608 = vsyncadd %s2580, 0
          %s2609 = sadd.s32 %s30, %s29
          %s2610 = smul.addr %s2609, 2
          %s2611 = scalar_lea.hbm %s3, %s2610
          %s2613 = sshll.u32 %s2583, 4
          %s2614 = int_to_ptr.vmem [resolvable:$true] %s2613
          %s2615 = sshll.u32 %s2611, 4
          %s2616 = int_to_ptr.hbm [resolvable:$true] %s2615
          %2618 = dma.vmem_to_hbm [thread:$0]  %s2614, 32, %s2616, %s2580
        $region60: #{tpu_custom_call.1} parent=27 // pred_fallthru
          _
      $region28: #{tpu_custom_call.1} parent=5 // pred_fallthru
        _
      %p2619 = scmp.le.s32.totalorder 2, %s20
      // Predicated region
      $region61: #{tpu_custom_call.1} parent=5 // pred_check
        %p2620 = pneg %p2619
      $region62: #{tpu_custom_call.1} parent=5 // pred_check_branch
        %2622 = sbr.rel (%p2620) target = $region64
      $region63: #{tpu_custom_call.1} parent=5 // pred_region
        %s2623 = ssub.s32 %s20, 2
        // Predicated region
        $region65: #{tpu_custom_call.1} parent=63 // pred_check
          %p2624 = pneg %p110
        $region66: #{tpu_custom_call.1} parent=63 // pred_check_branch
          %2626 = sbr.rel (%p2624) target = $region68
        $region67: #{tpu_custom_call.1} parent=63 // pred_region
          %s2627 = sand.u32 %s95, 1
          %s2628 = scalar_lea.sflag [#allocation6], %s2627
          %s2629 = sand.u32 %s95, 1
          %s2630 = smul.addr %s2629, 256
          %s2631 = scalar_lea.vmem [#allocation9], %s2630
          %2633 = dma.done %s2628, 4096
        $region68: #{tpu_custom_call.1} parent=63 // pred_fallthru
          _
        // Predicated region
        $region69: #{tpu_custom_call.1} parent=63 // pred_check
          %p2634 = pneg %p138
        $region70: #{tpu_custom_call.1} parent=63 // pred_check_branch
          %2636 = sbr.rel (%p2634) target = $region72
        $region71: #{tpu_custom_call.1} parent=63 // pred_region
          %s2637 = sand.u32 %s123, 1
          %s2638 = scalar_lea.sflag [#allocation11], %s2637
          %s2639 = sand.u32 %s123, 1
          %s2640 = smul.addr %s2639, 2
          %s2641 = scalar_lea.vmem [#allocation10], %s2640
          %2643 = dma.done %s2638, 32
        $region72: #{tpu_custom_call.1} parent=63 // pred_fallthru
          _
      $region64: #{tpu_custom_call.1} parent=5 // pred_fallthru
        _
    $region6: #{tpu_custom_call.1} parent=1 // loop_footer
      %s24 = sadd.s32 1, %s20
    $region7: #{tpu_custom_call.1} parent=1 // loop_footer_branch
      %19 = sbr.rel target = $region3
    $region8: #{tpu_custom_call.1} parent=1 // loop_exit
      _
    %2644 = vsyncpa [#allocation5], 1
    %s2645 = scalar_lea.sflag [#allocation5], 1
    %2646 = vsyncpa %s2645, 1
    %2647 = vsyncpa [#allocation8], 1
    %2648 = vsyncpa [#allocation6], 1
    %s2649 = scalar_lea.sflag [#allocation6], 1
    %2650 = vsyncpa %s2649, 1
    %2651 = vsyncpa [#allocation11], 1
    %s2652 = scalar_lea.sflag [#allocation11], 1
    %2653 = vsyncpa %s2652, 1

</llo_original>
